<compile_context>
chip_gen: v7x
topology: tpu7x:2x2x1
jax: 0.10.0
libtpu: 0.0.40
codegen_flags: <defaults>
</compile_context>

<pallas_src>
import math

import jax
import jax.numpy as jnp
from jax.experimental import pallas as pl
from jax.experimental.pallas import tpu as pltpu


# ------------------------------ fused block kernel ------------------------------ #

def _block_kernel(xpad_ref, w1_ref, b1_ref, w2_ref, b2_ref, out_ref, xf_ref, h1f_ref):
    # xpad_ref : (1, H+2, W+2, C)  bf16  spatially zero-padded block input (one image)
    # w1_ref   : (9, C, P)         bf16  folded conv-1 weight, tap-major (t = dy*3 + dx)
    # b1_ref   : (1, P)            f32   folded conv-1 bias
    # w2_ref   : (9, P, P)         bf16  folded conv-2 weight
    # b2_ref   : (1, P)            f32   folded conv-2 bias
    # out_ref  : (1, H, W, P)      f32   block output
    # xf_ref   : (H+2, W+2, C)     f32   VMEM scratch: staged input (f32 for robust slicing)
    # h1f_ref  : (H+2, W+2, P)     f32   VMEM scratch: padded intermediate activation
    H, W, P = out_ref.shape[1], out_ref.shape[2], out_ref.shape[3]
    C = xpad_ref.shape[3]

    # Stage the bf16 HBM tile once (aligned full load); all shifted-window slicing below is
    # done on the f32 VMEM scratch, and operands are cast back to bf16 right before the MXU.
    xf_ref[...] = xpad_ref[0].astype(jnp.float32)

    # ---- half 1: folded 3x3 conv  (9 accumulated MXU matmuls)  + bias + ReLU ----
    acc = jnp.zeros((H * W, P), jnp.float32)
    for t in range(9):
        dy, dx = t // 3, t % 3
        a = xf_ref[dy:dy + H, dx:dx + W, :].reshape(H * W, C).astype(jnp.bfloat16)
        acc = acc + jnp.dot(a, w1_ref[t], preferred_element_type=jnp.float32)
    h1 = jnp.maximum(acc + b1_ref[...], 0.0)                      # (H*W, P) f32

    # Intermediate activation (with its conv halo) stays entirely in VMEM.
    h1f_ref[...] = jnp.zeros_like(h1f_ref)
    h1f_ref[1:H + 1, 1:W + 1, :] = h1.reshape(H, W, P)

    # ---- half 2: folded 3x3 conv + bias + identity shortcut + ReLU ----
    acc2 = jnp.zeros((H * W, P), jnp.float32)
    for t in range(9):
        dy, dx = t // 3, t % 3
        a = h1f_ref[dy:dy + H, dx:dx + W, :].reshape(H * W, P).astype(jnp.bfloat16)
        acc2 = acc2 + jnp.dot(a, w2_ref[t], preferred_element_type=jnp.float32)
    res = xf_ref[1:H + 1, 1:W + 1, :].reshape(H * W, C)           # identity shortcut (C == P)
    out = jnp.maximum(acc2 + b2_ref[...] + res, 0.0)
    out_ref[0] = out.reshape(H, W, P).astype(out_ref.dtype)


# ------------------------------ BN / basis / coeff folding ------------------------------ #

def _bn_affine(bn, eps=1e-5):
    s = bn['gamma'] * jax.lax.rsqrt(bn['var'] + eps)
    return s, bn['beta'] - bn['mean'] * s


def _fold_half(shared_w, basis_bn, coeff_w, out_bn):
    """Fold shared 3x3 basis conv -> basis BN -> 1x1 coeff conv -> out BN into one dense
    3x3 conv (exact in eval mode).  Returns ((9, Cin, planes) tap-major weight, (planes,) bias)."""
    rank, cin, kh, kw = shared_w.shape
    planes = coeff_w.shape[0]
    sb, tb = _bn_affine(basis_bn)                                  # per-basis-channel affine
    so, to = _bn_affine(out_bn)                                    # per-output-channel affine
    coeff = coeff_w[:, :, 0, 0]                                    # (planes, rank)
    basis = jnp.transpose(shared_w, (2, 3, 1, 0)).reshape(kh * kw * cin, rank)
    w_eff = (coeff * sb[None, :]).T * so[None, :]                  # (rank, planes)
    w = (basis @ w_eff).reshape(kh * kw, cin, planes)              # tap-major dense 3x3
    bias = (coeff @ tb) * so + to
    return w, bias


# ------------------------------ forward (wrapper) ------------------------------ #

@jax.jit
def basic_block_shared_only_forward(params, x_nchw):
    """BasicBlock_SharedOnly forward (eval-mode BN, identity shortcut). NCHW in / NCHW out."""
    x = jnp.transpose(x_nchw, (0, 2, 3, 1)).astype(jnp.float32)    # -> NHWC
    N, H, W, C = x.shape

    w1, c1 = _fold_half(params['shared_basis_1'], params['basis_bn1'],
                        params['coeff_conv1'], params['bn1'])
    w2, c2 = _fold_half(params['shared_basis_2'], params['basis_bn2'],
                        params['coeff_conv2'], params['bn2'])
    P = w1.shape[2]
    if P != C:
        # TODO(synk): option 'A' (strided zero-pad) / option 'B' (1x1 conv + BN) downsampling
        # shortcuts are not implemented; with this block's stride-1 main path only the
        # identity shortcut is shape-consistent anyway.
        raise NotImplementedError("only the identity-shortcut configuration is supported")

    # Single spatial halo pad for the whole block (tiny), stored bf16 to halve HBM read traffic.
    xpad = jnp.pad(x, ((0, 0), (1, 1), (1, 1), (0, 0))).astype(jnp.bfloat16)

    grid_spec = pltpu.PrefetchScalarGridSpec(
        num_scalar_prefetch=0,
        grid=(N,),                                                 # >=2 steps -> both v7x TCs
        in_specs=[
            pl.BlockSpec((1, H + 2, W + 2, C), lambda n: (n, 0, 0, 0)),
            pl.BlockSpec((9, C, P), lambda n: (0, 0, 0)),          # resident folded weights
            pl.BlockSpec((1, P), lambda n: (0, 0)),
            pl.BlockSpec((9, P, P), lambda n: (0, 0, 0)),
            pl.BlockSpec((1, P), lambda n: (0, 0)),
        ],
        out_specs=pl.BlockSpec((1, H, W, P), lambda n: (n, 0, 0, 0)),
        scratch_shapes=[
            pltpu.VMEM((H + 2, W + 2, C), jnp.float32),            # staged input
            pltpu.VMEM((H + 2, W + 2, P), jnp.float32),            # padded intermediate
        ],
    )
    out = pl.pallas_call(
        _block_kernel,
        out_shape=jax.ShapeDtypeStruct((N, H, W, P), jnp.float32),
        grid_spec=grid_spec,
        compiler_params=pltpu.CompilerParams(dimension_semantics=("parallel",)),
    )(xpad,
      w1.astype(jnp.bfloat16), c1.reshape(1, P).astype(jnp.float32),
      w2.astype(jnp.bfloat16), c2.reshape(1, P).astype(jnp.float32))
    return jnp.transpose(out, (0, 3, 1, 2))                        # -> NCHW


# ------------------------------ pure-XLA reference (same numerics) ------------------------------ #

def _reference_forward(params, x_nchw):
    """Reference that mimics the kernel's bf16-operand / f32-accumulate numerics."""
    f32 = jnp.float32
    rd = lambda a: a.astype(jnp.bfloat16).astype(f32)              # bf16 rounding seen by the MXU
    x = jnp.transpose(x_nchw, (0, 2, 3, 1)).astype(f32)
    w1, c1 = _fold_half(params['shared_basis_1'], params['basis_bn1'],
                        params['coeff_conv1'], params['bn1'])
    w2, c2 = _fold_half(params['shared_basis_2'], params['basis_bn2'],
                        params['coeff_conv2'], params['bn2'])

    def conv(a, w):
        hwio = w.reshape(3, 3, w.shape[1], w.shape[2])
        return jax.lax.conv_general_dilated(
            a, hwio, (1, 1), 'SAME', dimension_numbers=('NHWC', 'HWIO', 'NHWC'),
            precision=jax.lax.Precision.HIGHEST)

    xb = rd(x)
    h1 = jnp.maximum(conv(xb, rd(w1)) + c1, 0.0)
    out = jnp.maximum(conv(rd(h1), rd(w2)) + c2 + xb, 0.0)
    return jnp.transpose(out, (0, 3, 1, 2))


# ------------------------------ parameters ------------------------------ #

def init_block_params(key, in_planes, planes, total_rank_1, total_rank_2):
    ks = jax.random.split(key, 8)

    def conv_w(k, cout, cin, ksz):
        fan_out = cout * ksz * ksz                                 # kaiming_normal_, fan_out, relu
        return math.sqrt(2.0 / fan_out) * jax.random.normal(k, (cout, cin, ksz, ksz), jnp.float32)

    def bn(k, c):
        k1, k2, k3, k4 = jax.random.split(k, 4)
        return dict(gamma=1.0 + 0.1 * jax.random.normal(k1, (c,), jnp.float32),
                    beta=0.1 * jax.random.normal(k2, (c,), jnp.float32),
                    mean=0.1 * jax.random.normal(k3, (c,), jnp.float32),
                    var=0.5 + jnp.abs(jax.random.normal(k4, (c,), jnp.float32)))

    return dict(
        shared_basis_1=conv_w(ks[0], total_rank_1, in_planes, 3),
        basis_bn1=bn(ks[1], total_rank_1),
        coeff_conv1=conv_w(ks[2], planes, total_rank_1, 1),
        bn1=bn(ks[3], planes),
        shared_basis_2=conv_w(ks[4], total_rank_2, planes, 3),
        basis_bn2=bn(ks[5], total_rank_2),
        coeff_conv2=conv_w(ks[6], planes, total_rank_2, 1),
        bn2=bn(ks[7], planes),
    )


if __name__ == "__main__":
    key = jax.random.PRNGKey(0)
    pkey, xkey = jax.random.split(key)
    in_planes = planes = 16
    params = init_block_params(pkey, in_planes=in_planes, planes=planes,
                               total_rank_1=12, total_rank_2=12)
    x = jax.random.normal(xkey, (2, in_planes, 16, 16), jnp.float32)   # NCHW, CIFAR-like block

    y = basic_block_shared_only_forward(params, x)
    jax.block_until_ready(y)
    assert y.shape == (2, planes, 16, 16) and y.dtype == jnp.float32

    y_ref = _reference_forward(params, x)
    err = float(jnp.max(jnp.abs(y - y_ref)))
    assert err < 5e-2, f"kernel vs reference mismatch: max|diff|={err:.3e}"

    print("KERNEL_OK")
</pallas_src>

<mosaic_0001>
module attributes {stable_mosaic.version = 11 : i64} {
  func.func @_block_kernel(%arg0: i32, %arg1: memref<1x18x18x16xbf16, #tpu.memory_space<vmem>>, %arg2: memref<9x16x16xbf16, #tpu.memory_space<vmem>>, %arg3: memref<1x16xf32, #tpu.memory_space<vmem>>, %arg4: memref<9x16x16xbf16, #tpu.memory_space<vmem>>, %arg5: memref<1x16xf32, #tpu.memory_space<vmem>>, %arg6: memref<1x16x16x16xf32, #tpu.memory_space<vmem>>, %arg7: memref<18x18x16xf32, #tpu.memory_space<vmem>>, %arg8: memref<18x18x16xf32, #tpu.memory_space<vmem>>) attributes {dimension_semantics = [#tpu.dimension_semantics<parallel>], iteration_bounds = array<i64: 2>, scalar_prefetch = 0 : i64, scratch_operands = 2 : i64, tpu.core_type = #tpu.core_type<tc>, window_params = [{transform_indices = @transform_0, window_bounds = array<i64: 1, 18, 18, 16>}, {pipeline_mode = #tpu.pipeline_mode<synchronous>, transform_indices = @transform_1, window_bounds = array<i64: 9, 16, 16>}, {pipeline_mode = #tpu.pipeline_mode<synchronous>, transform_indices = @transform_2, window_bounds = array<i64: 1, 16>}, {pipeline_mode = #tpu.pipeline_mode<synchronous>, transform_indices = @transform_3, window_bounds = array<i64: 9, 16, 16>}, {pipeline_mode = #tpu.pipeline_mode<synchronous>, transform_indices = @transform_4, window_bounds = array<i64: 1, 16>}, {transform_indices = @transform_5, window_bounds = array<i64: 1, 16, 16, 16>}]} {
    %c0 = arith.constant 0 : index
    %c0_0 = arith.constant 0 : index
    %c0_1 = arith.constant 0 : index
    %c0_2 = arith.constant 0 : index
    %0 = vector.load %arg1[%c0, %c0_0, %c0_1, %c0_2] : memref<1x18x18x16xbf16, #tpu.memory_space<vmem>>, vector<1x18x18x16xbf16>
    %1 = vector.shape_cast %0 : vector<1x18x18x16xbf16> to vector<18x18x16xbf16>
    %2 = arith.extf %1 : vector<18x18x16xbf16> to vector<18x18x16xf32>
    %c0_3 = arith.constant 0 : index
    %c0_4 = arith.constant 0 : index
    %c0_5 = arith.constant 0 : index
    %3 = vector.load %arg7[%c0_3, %c0_4, %c0_5] : memref<18x18x16xf32, #tpu.memory_space<vmem>>, vector<18x18x16xf32>
    tpu.vector_store %arg7[%c0_3, %c0_4, %c0_5], %2 {strides = array<i32>} : memref<18x18x16xf32, #tpu.memory_space<vmem>>, vector<18x18x16xf32>,
    %cst = arith.constant 0.000000e+00 : f32
    %4 = vector.broadcast %cst : f32 to vector<256x16xf32>
    %c0_6 = arith.constant 0 : index
    %c0_7 = arith.constant 0 : index
    %c0_8 = arith.constant 0 : index
    %5 = vector.load %arg7[%c0_6, %c0_7, %c0_8] : memref<18x18x16xf32, #tpu.memory_space<vmem>>, vector<16x16x16xf32>
    %6 = vector.shape_cast %5 : vector<16x16x16xf32> to vector<256x16xf32>
    %7 = arith.truncf %6 : vector<256x16xf32> to vector<256x16xbf16>
    %c0_9 = arith.constant 0 : index
    %c0_10 = arith.constant 0 : index
    %c0_11 = arith.constant 0 : index
    %8 = vector.load %arg2[%c0_9, %c0_10, %c0_11] : memref<9x16x16xbf16, #tpu.memory_space<vmem>>, vector<1x16x16xbf16>
    %9 = vector.shape_cast %8 : vector<1x16x16xbf16> to vector<16x16xbf16>
    %cst_12 = arith.constant dense<0.000000e+00> : vector<256x16xf32>
    %10 = tpu.matmul %7, %9, %cst_12 {dimension_numbers = #tpu.dot_dimension_numbers<[1], [0], [0], [1], [0, 0, 1, 1], [], []>} : vector<256x16xbf16>, vector<16x16xbf16>, vector<256x16xf32> -> vector<256x16xf32>
    %11 = arith.addf %4, %10 : vector<256x16xf32>
    %c0_13 = arith.constant 0 : index
    %c1 = arith.constant 1 : index
    %c0_14 = arith.constant 0 : index
    %12 = vector.load %arg7[%c0_13, %c1, %c0_14] : memref<18x18x16xf32, #tpu.memory_space<vmem>>, vector<16x16x16xf32>
    %13 = vector.shape_cast %12 : vector<16x16x16xf32> to vector<256x16xf32>
    %14 = arith.truncf %13 : vector<256x16xf32> to vector<256x16xbf16>
    %c1_15 = arith.constant 1 : index
    %c0_16 = arith.constant 0 : index
    %c0_17 = arith.constant 0 : index
    %15 = vector.load %arg2[%c1_15, %c0_16, %c0_17] : memref<9x16x16xbf16, #tpu.memory_space<vmem>>, vector<1x16x16xbf16>
    %16 = vector.shape_cast %15 : vector<1x16x16xbf16> to vector<16x16xbf16>
    %cst_18 = arith.constant dense<0.000000e+00> : vector<256x16xf32>
    %17 = tpu.matmul %14, %16, %cst_18 {dimension_numbers = #tpu.dot_dimension_numbers<[1], [0], [0], [1], [0, 0, 1, 1], [], []>} : vector<256x16xbf16>, vector<16x16xbf16>, vector<256x16xf32> -> vector<256x16xf32>
    %18 = arith.addf %11, %17 : vector<256x16xf32>
    %c0_19 = arith.constant 0 : index
    %c2 = arith.constant 2 : index
    %c0_20 = arith.constant 0 : index
    %19 = vector.load %arg7[%c0_19, %c2, %c0_20] : memref<18x18x16xf32, #tpu.memory_space<vmem>>, vector<16x16x16xf32>
    %20 = vector.shape_cast %19 : vector<16x16x16xf32> to vector<256x16xf32>
    %21 = arith.truncf %20 : vector<256x16xf32> to vector<256x16xbf16>
    %c2_21 = arith.constant 2 : index
    %c0_22 = arith.constant 0 : index
    %c0_23 = arith.constant 0 : index
    %22 = vector.load %arg2[%c2_21, %c0_22, %c0_23] : memref<9x16x16xbf16, #tpu.memory_space<vmem>>, vector<1x16x16xbf16>
    %23 = vector.shape_cast %22 : vector<1x16x16xbf16> to vector<16x16xbf16>
    %cst_24 = arith.constant dense<0.000000e+00> : vector<256x16xf32>
    %24 = tpu.matmul %21, %23, %cst_24 {dimension_numbers = #tpu.dot_dimension_numbers<[1], [0], [0], [1], [0, 0, 1, 1], [], []>} : vector<256x16xbf16>, vector<16x16xbf16>, vector<256x16xf32> -> vector<256x16xf32>
    %25 = arith.addf %18, %24 : vector<256x16xf32>
    %c1_25 = arith.constant 1 : index
    %c0_26 = arith.constant 0 : index
    %c0_27 = arith.constant 0 : index
    %26 = vector.load %arg7[%c1_25, %c0_26, %c0_27] : memref<18x18x16xf32, #tpu.memory_space<vmem>>, vector<16x16x16xf32>
    %27 = vector.shape_cast %26 : vector<16x16x16xf32> to vector<256x16xf32>
    %28 = arith.truncf %27 : vector<256x16xf32> to vector<256x16xbf16>
    %c3 = arith.constant 3 : index
    %c0_28 = arith.constant 0 : index
    %c0_29 = arith.constant 0 : index
    %29 = vector.load %arg2[%c3, %c0_28, %c0_29] : memref<9x16x16xbf16, #tpu.memory_space<vmem>>, vector<1x16x16xbf16>
    %30 = vector.shape_cast %29 : vector<1x16x16xbf16> to vector<16x16xbf16>
    %cst_30 = arith.constant dense<0.000000e+00> : vector<256x16xf32>
    %31 = tpu.matmul %28, %30, %cst_30 {dimension_numbers = #tpu.dot_dimension_numbers<[1], [0], [0], [1], [0, 0, 1, 1], [], []>} : vector<256x16xbf16>, vector<16x16xbf16>, vector<256x16xf32> -> vector<256x16xf32>
    %32 = arith.addf %25, %31 : vector<256x16xf32>
    %c1_31 = arith.constant 1 : index
    %c1_32 = arith.constant 1 : index
    %c0_33 = arith.constant 0 : index
    %33 = vector.load %arg7[%c1_31, %c1_32, %c0_33] : memref<18x18x16xf32, #tpu.memory_space<vmem>>, vector<16x16x16xf32>
    %34 = vector.shape_cast %33 : vector<16x16x16xf32> to vector<256x16xf32>
    %35 = arith.truncf %34 : vector<256x16xf32> to vector<256x16xbf16>
    %c4 = arith.constant 4 : index
    %c0_34 = arith.constant 0 : index
    %c0_35 = arith.constant 0 : index
    %36 = vector.load %arg2[%c4, %c0_34, %c0_35] : memref<9x16x16xbf16, #tpu.memory_space<vmem>>, vector<1x16x16xbf16>
    %37 = vector.shape_cast %36 : vector<1x16x16xbf16> to vector<16x16xbf16>
    %cst_36 = arith.constant dense<0.000000e+00> : vector<256x16xf32>
    %38 = tpu.matmul %35, %37, %cst_36 {dimension_numbers = #tpu.dot_dimension_numbers<[1], [0], [0], [1], [0, 0, 1, 1], [], []>} : vector<256x16xbf16>, vector<16x16xbf16>, vector<256x16xf32> -> vector<256x16xf32>
    %39 = arith.addf %32, %38 : vector<256x16xf32>
    %c1_37 = arith.constant 1 : index
    %c2_38 = arith.constant 2 : index
    %c0_39 = arith.constant 0 : index
    %40 = vector.load %arg7[%c1_37, %c2_38, %c0_39] : memref<18x18x16xf32, #tpu.memory_space<vmem>>, vector<16x16x16xf32>
    %41 = vector.shape_cast %40 : vector<16x16x16xf32> to vector<256x16xf32>
    %42 = arith.truncf %41 : vector<256x16xf32> to vector<256x16xbf16>
    %c5 = arith.constant 5 : index
    %c0_40 = arith.constant 0 : index
    %c0_41 = arith.constant 0 : index
    %43 = vector.load %arg2[%c5, %c0_40, %c0_41] : memref<9x16x16xbf16, #tpu.memory_space<vmem>>, vector<1x16x16xbf16>
    %44 = vector.shape_cast %43 : vector<1x16x16xbf16> to vector<16x16xbf16>
    %cst_42 = arith.constant dense<0.000000e+00> : vector<256x16xf32>
    %45 = tpu.matmul %42, %44, %cst_42 {dimension_numbers = #tpu.dot_dimension_numbers<[1], [0], [0], [1], [0, 0, 1, 1], [], []>} : vector<256x16xbf16>, vector<16x16xbf16>, vector<256x16xf32> -> vector<256x16xf32>
    %46 = arith.addf %39, %45 : vector<256x16xf32>
    %c2_43 = arith.constant 2 : index
    %c0_44 = arith.constant 0 : index
    %c0_45 = arith.constant 0 : index
    %47 = vector.load %arg7[%c2_43, %c0_44, %c0_45] : memref<18x18x16xf32, #tpu.memory_space<vmem>>, vector<16x16x16xf32>
    %48 = vector.shape_cast %47 : vector<16x16x16xf32> to vector<256x16xf32>
    %49 = arith.truncf %48 : vector<256x16xf32> to vector<256x16xbf16>
    %c6 = arith.constant 6 : index
    %c0_46 = arith.constant 0 : index
    %c0_47 = arith.constant 0 : index
    %50 = vector.load %arg2[%c6, %c0_46, %c0_47] : memref<9x16x16xbf16, #tpu.memory_space<vmem>>, vector<1x16x16xbf16>
    %51 = vector.shape_cast %50 : vector<1x16x16xbf16> to vector<16x16xbf16>
    %cst_48 = arith.constant dense<0.000000e+00> : vector<256x16xf32>
    %52 = tpu.matmul %49, %51, %cst_48 {dimension_numbers = #tpu.dot_dimension_numbers<[1], [0], [0], [1], [0, 0, 1, 1], [], []>} : vector<256x16xbf16>, vector<16x16xbf16>, vector<256x16xf32> -> vector<256x16xf32>
    %53 = arith.addf %46, %52 : vector<256x16xf32>
    %c2_49 = arith.constant 2 : index
    %c1_50 = arith.constant 1 : index
    %c0_51 = arith.constant 0 : index
    %54 = vector.load %arg7[%c2_49, %c1_50, %c0_51] : memref<18x18x16xf32, #tpu.memory_space<vmem>>, vector<16x16x16xf32>
    %55 = vector.shape_cast %54 : vector<16x16x16xf32> to vector<256x16xf32>
    %56 = arith.truncf %55 : vector<256x16xf32> to vector<256x16xbf16>
    %c7 = arith.constant 7 : index
    %c0_52 = arith.constant 0 : index
    %c0_53 = arith.constant 0 : index
    %57 = vector.load %arg2[%c7, %c0_52, %c0_53] : memref<9x16x16xbf16, #tpu.memory_space<vmem>>, vector<1x16x16xbf16>
    %58 = vector.shape_cast %57 : vector<1x16x16xbf16> to vector<16x16xbf16>
    %cst_54 = arith.constant dense<0.000000e+00> : vector<256x16xf32>
    %59 = tpu.matmul %56, %58, %cst_54 {dimension_numbers = #tpu.dot_dimension_numbers<[1], [0], [0], [1], [0, 0, 1, 1], [], []>} : vector<256x16xbf16>, vector<16x16xbf16>, vector<256x16xf32> -> vector<256x16xf32>
    %60 = arith.addf %53, %59 : vector<256x16xf32>
    %c2_55 = arith.constant 2 : index
    %c2_56 = arith.constant 2 : index
    %c0_57 = arith.constant 0 : index
    %61 = vector.load %arg7[%c2_55, %c2_56, %c0_57] : memref<18x18x16xf32, #tpu.memory_space<vmem>>, vector<16x16x16xf32>
    %62 = vector.shape_cast %61 : vector<16x16x16xf32> to vector<256x16xf32>
    %63 = arith.truncf %62 : vector<256x16xf32> to vector<256x16xbf16>
    %c8 = arith.constant 8 : index
    %c0_58 = arith.constant 0 : index
    %c0_59 = arith.constant 0 : index
    %64 = vector.load %arg2[%c8, %c0_58, %c0_59] : memref<9x16x16xbf16, #tpu.memory_space<vmem>>, vector<1x16x16xbf16>
    %65 = vector.shape_cast %64 : vector<1x16x16xbf16> to vector<16x16xbf16>
    %cst_60 = arith.constant dense<0.000000e+00> : vector<256x16xf32>
    %66 = tpu.matmul %63, %65, %cst_60 {dimension_numbers = #tpu.dot_dimension_numbers<[1], [0], [0], [1], [0, 0, 1, 1], [], []>} : vector<256x16xbf16>, vector<16x16xbf16>, vector<256x16xf32> -> vector<256x16xf32>
    %67 = arith.addf %60, %66 : vector<256x16xf32>
    %c0_61 = arith.constant 0 : index
    %c0_62 = arith.constant 0 : index
    %68 = vector.load %arg3[%c0_61, %c0_62] : memref<1x16xf32, #tpu.memory_space<vmem>>, vector<1x16xf32>
    %69 = vector.broadcast %68 : vector<1x16xf32> to vector<256x16xf32>
    %70 = arith.addf %67, %69 : vector<256x16xf32>
    %cst_63 = arith.constant 0.000000e+00 : f32
    %71 = vector.broadcast %cst_63 : f32 to vector<256x16xf32>
    %72 = arith.maximumf %70, %71 : vector<256x16xf32>
    %cst_64 = arith.constant 0.000000e+00 : f32
    %73 = vector.broadcast %cst_64 : f32 to vector<18x18x16xf32>
    %c0_65 = arith.constant 0 : index
    %c0_66 = arith.constant 0 : index
    %c0_67 = arith.constant 0 : index
    %74 = vector.load %arg8[%c0_65, %c0_66, %c0_67] : memref<18x18x16xf32, #tpu.memory_space<vmem>>, vector<18x18x16xf32>
    tpu.vector_store %arg8[%c0_65, %c0_66, %c0_67], %73 {strides = array<i32>} : memref<18x18x16xf32, #tpu.memory_space<vmem>>, vector<18x18x16xf32>,
    %75 = vector.shape_cast %72 : vector<256x16xf32> to vector<16x16x16xf32>
    %c1_68 = arith.constant 1 : index
    %c1_69 = arith.constant 1 : index
    %c0_70 = arith.constant 0 : index
    %76 = vector.load %arg8[%c1_68, %c1_69, %c0_70] : memref<18x18x16xf32, #tpu.memory_space<vmem>>, vector<16x16x16xf32>
    tpu.vector_store %arg8[%c1_68, %c1_69, %c0_70], %75 {strides = array<i32>} : memref<18x18x16xf32, #tpu.memory_space<vmem>>, vector<16x16x16xf32>,
    %cst_71 = arith.constant 0.000000e+00 : f32
    %77 = vector.broadcast %cst_71 : f32 to vector<256x16xf32>
    %c0_72 = arith.constant 0 : index
    %c0_73 = arith.constant 0 : index
    %c0_74 = arith.constant 0 : index
    %78 = vector.load %arg8[%c0_72, %c0_73, %c0_74] : memref<18x18x16xf32, #tpu.memory_space<vmem>>, vector<16x16x16xf32>
    %79 = vector.shape_cast %78 : vector<16x16x16xf32> to vector<256x16xf32>
    %80 = arith.truncf %79 : vector<256x16xf32> to vector<256x16xbf16>
    %c0_75 = arith.constant 0 : index
    %c0_76 = arith.constant 0 : index
    %c0_77 = arith.constant 0 : index
    %81 = vector.load %arg4[%c0_75, %c0_76, %c0_77] : memref<9x16x16xbf16, #tpu.memory_space<vmem>>, vector<1x16x16xbf16>
    %82 = vector.shape_cast %81 : vector<1x16x16xbf16> to vector<16x16xbf16>
    %cst_78 = arith.constant dense<0.000000e+00> : vector<256x16xf32>
    %83 = tpu.matmul %80, %82, %cst_78 {dimension_numbers = #tpu.dot_dimension_numbers<[1], [0], [0], [1], [0, 0, 1, 1], [], []>} : vector<256x16xbf16>, vector<16x16xbf16>, vector<256x16xf32> -> vector<256x16xf32>
    %84 = arith.addf %77, %83 : vector<256x16xf32>
    %c0_79 = arith.constant 0 : index
    %c1_80 = arith.constant 1 : index
    %c0_81 = arith.constant 0 : index
    %85 = vector.load %arg8[%c0_79, %c1_80, %c0_81] : memref<18x18x16xf32, #tpu.memory_space<vmem>>, vector<16x16x16xf32>
    %86 = vector.shape_cast %85 : vector<16x16x16xf32> to vector<256x16xf32>
    %87 = arith.truncf %86 : vector<256x16xf32> to vector<256x16xbf16>
    %c1_82 = arith.constant 1 : index
    %c0_83 = arith.constant 0 : index
    %c0_84 = arith.constant 0 : index
    %88 = vector.load %arg4[%c1_82, %c0_83, %c0_84] : memref<9x16x16xbf16, #tpu.memory_space<vmem>>, vector<1x16x16xbf16>
    %89 = vector.shape_cast %88 : vector<1x16x16xbf16> to vector<16x16xbf16>
    %cst_85 = arith.constant dense<0.000000e+00> : vector<256x16xf32>
    %90 = tpu.matmul %87, %89, %cst_85 {dimension_numbers = #tpu.dot_dimension_numbers<[1], [0], [0], [1], [0, 0, 1, 1], [], []>} : vector<256x16xbf16>, vector<16x16xbf16>, vector<256x16xf32> -> vector<256x16xf32>
    %91 = arith.addf %84, %90 : vector<256x16xf32>
    %c0_86 = arith.constant 0 : index
    %c2_87 = arith.constant 2 : index
    %c0_88 = arith.constant 0 : index
    %92 = vector.load %arg8[%c0_86, %c2_87, %c0_88] : memref<18x18x16xf32, #tpu.memory_space<vmem>>, vector<16x16x16xf32>
    %93 = vector.shape_cast %92 : vector<16x16x16xf32> to vector<256x16xf32>
    %94 = arith.truncf %93 : vector<256x16xf32> to vector<256x16xbf16>
    %c2_89 = arith.constant 2 : index
    %c0_90 = arith.constant 0 : index
    %c0_91 = arith.constant 0 : index
    %95 = vector.load %arg4[%c2_89, %c0_90, %c0_91] : memref<9x16x16xbf16, #tpu.memory_space<vmem>>, vector<1x16x16xbf16>
    %96 = vector.shape_cast %95 : vector<1x16x16xbf16> to vector<16x16xbf16>
    %cst_92 = arith.constant dense<0.000000e+00> : vector<256x16xf32>
    %97 = tpu.matmul %94, %96, %cst_92 {dimension_numbers = #tpu.dot_dimension_numbers<[1], [0], [0], [1], [0, 0, 1, 1], [], []>} : vector<256x16xbf16>, vector<16x16xbf16>, vector<256x16xf32> -> vector<256x16xf32>
    %98 = arith.addf %91, %97 : vector<256x16xf32>
    %c1_93 = arith.constant 1 : index
    %c0_94 = arith.constant 0 : index
    %c0_95 = arith.constant 0 : index
    %99 = vector.load %arg8[%c1_93, %c0_94, %c0_95] : memref<18x18x16xf32, #tpu.memory_space<vmem>>, vector<16x16x16xf32>
    %100 = vector.shape_cast %99 : vector<16x16x16xf32> to vector<256x16xf32>
    %101 = arith.truncf %100 : vector<256x16xf32> to vector<256x16xbf16>
    %c3_96 = arith.constant 3 : index
    %c0_97 = arith.constant 0 : index
    %c0_98 = arith.constant 0 : index
    %102 = vector.load %arg4[%c3_96, %c0_97, %c0_98] : memref<9x16x16xbf16, #tpu.memory_space<vmem>>, vector<1x16x16xbf16>
    %103 = vector.shape_cast %102 : vector<1x16x16xbf16> to vector<16x16xbf16>
    %cst_99 = arith.constant dense<0.000000e+00> : vector<256x16xf32>
    %104 = tpu.matmul %101, %103, %cst_99 {dimension_numbers = #tpu.dot_dimension_numbers<[1], [0], [0], [1], [0, 0, 1, 1], [], []>} : vector<256x16xbf16>, vector<16x16xbf16>, vector<256x16xf32> -> vector<256x16xf32>
    %105 = arith.addf %98, %104 : vector<256x16xf32>
    %c1_100 = arith.constant 1 : index
    %c1_101 = arith.constant 1 : index
    %c0_102 = arith.constant 0 : index
    %106 = vector.load %arg8[%c1_100, %c1_101, %c0_102] : memref<18x18x16xf32, #tpu.memory_space<vmem>>, vector<16x16x16xf32>
    %107 = vector.shape_cast %106 : vector<16x16x16xf32> to vector<256x16xf32>
    %108 = arith.truncf %107 : vector<256x16xf32> to vector<256x16xbf16>
    %c4_103 = arith.constant 4 : index
    %c0_104 = arith.constant 0 : index
    %c0_105 = arith.constant 0 : index
    %109 = vector.load %arg4[%c4_103, %c0_104, %c0_105] : memref<9x16x16xbf16, #tpu.memory_space<vmem>>, vector<1x16x16xbf16>
    %110 = vector.shape_cast %109 : vector<1x16x16xbf16> to vector<16x16xbf16>
    %cst_106 = arith.constant dense<0.000000e+00> : vector<256x16xf32>
    %111 = tpu.matmul %108, %110, %cst_106 {dimension_numbers = #tpu.dot_dimension_numbers<[1], [0], [0], [1], [0, 0, 1, 1], [], []>} : vector<256x16xbf16>, vector<16x16xbf16>, vector<256x16xf32> -> vector<256x16xf32>
    %112 = arith.addf %105, %111 : vector<256x16xf32>
    %c1_107 = arith.constant 1 : index
    %c2_108 = arith.constant 2 : index
    %c0_109 = arith.constant 0 : index
    %113 = vector.load %arg8[%c1_107, %c2_108, %c0_109] : memref<18x18x16xf32, #tpu.memory_space<vmem>>, vector<16x16x16xf32>
    %114 = vector.shape_cast %113 : vector<16x16x16xf32> to vector<256x16xf32>
    %115 = arith.truncf %114 : vector<256x16xf32> to vector<256x16xbf16>
    %c5_110 = arith.constant 5 : index
    %c0_111 = arith.constant 0 : index
    %c0_112 = arith.constant 0 : index
    %116 = vector.load %arg4[%c5_110, %c0_111, %c0_112] : memref<9x16x16xbf16, #tpu.memory_space<vmem>>, vector<1x16x16xbf16>
    %117 = vector.shape_cast %116 : vector<1x16x16xbf16> to vector<16x16xbf16>
    %cst_113 = arith.constant dense<0.000000e+00> : vector<256x16xf32>
    %118 = tpu.matmul %115, %117, %cst_113 {dimension_numbers = #tpu.dot_dimension_numbers<[1], [0], [0], [1], [0, 0, 1, 1], [], []>} : vector<256x16xbf16>, vector<16x16xbf16>, vector<256x16xf32> -> vector<256x16xf32>
    %119 = arith.addf %112, %118 : vector<256x16xf32>
    %c2_114 = arith.constant 2 : index
    %c0_115 = arith.constant 0 : index
    %c0_116 = arith.constant 0 : index
    %120 = vector.load %arg8[%c2_114, %c0_115, %c0_116] : memref<18x18x16xf32, #tpu.memory_space<vmem>>, vector<16x16x16xf32>
    %121 = vector.shape_cast %120 : vector<16x16x16xf32> to vector<256x16xf32>
    %122 = arith.truncf %121 : vector<256x16xf32> to vector<256x16xbf16>
    %c6_117 = arith.constant 6 : index
    %c0_118 = arith.constant 0 : index
    %c0_119 = arith.constant 0 : index
    %123 = vector.load %arg4[%c6_117, %c0_118, %c0_119] : memref<9x16x16xbf16, #tpu.memory_space<vmem>>, vector<1x16x16xbf16>
    %124 = vector.shape_cast %123 : vector<1x16x16xbf16> to vector<16x16xbf16>
    %cst_120 = arith.constant dense<0.000000e+00> : vector<256x16xf32>
    %125 = tpu.matmul %122, %124, %cst_120 {dimension_numbers = #tpu.dot_dimension_numbers<[1], [0], [0], [1], [0, 0, 1, 1], [], []>} : vector<256x16xbf16>, vector<16x16xbf16>, vector<256x16xf32> -> vector<256x16xf32>
    %126 = arith.addf %119, %125 : vector<256x16xf32>
    %c2_121 = arith.constant 2 : index
    %c1_122 = arith.constant 1 : index
    %c0_123 = arith.constant 0 : index
    %127 = vector.load %arg8[%c2_121, %c1_122, %c0_123] : memref<18x18x16xf32, #tpu.memory_space<vmem>>, vector<16x16x16xf32>
    %128 = vector.shape_cast %127 : vector<16x16x16xf32> to vector<256x16xf32>
    %129 = arith.truncf %128 : vector<256x16xf32> to vector<256x16xbf16>
    %c7_124 = arith.constant 7 : index
    %c0_125 = arith.constant 0 : index
    %c0_126 = arith.constant 0 : index
    %130 = vector.load %arg4[%c7_124, %c0_125, %c0_126] : memref<9x16x16xbf16, #tpu.memory_space<vmem>>, vector<1x16x16xbf16>
    %131 = vector.shape_cast %130 : vector<1x16x16xbf16> to vector<16x16xbf16>
    %cst_127 = arith.constant dense<0.000000e+00> : vector<256x16xf32>
    %132 = tpu.matmul %129, %131, %cst_127 {dimension_numbers = #tpu.dot_dimension_numbers<[1], [0], [0], [1], [0, 0, 1, 1], [], []>} : vector<256x16xbf16>, vector<16x16xbf16>, vector<256x16xf32> -> vector<256x16xf32>
    %133 = arith.addf %126, %132 : vector<256x16xf32>
    %c2_128 = arith.constant 2 : index
    %c2_129 = arith.constant 2 : index
    %c0_130 = arith.constant 0 : index
    %134 = vector.load %arg8[%c2_128, %c2_129, %c0_130] : memref<18x18x16xf32, #tpu.memory_space<vmem>>, vector<16x16x16xf32>
    %135 = vector.shape_cast %134 : vector<16x16x16xf32> to vector<256x16xf32>
    %136 = arith.truncf %135 : vector<256x16xf32> to vector<256x16xbf16>
    %c8_131 = arith.constant 8 : index
    %c0_132 = arith.constant 0 : index
    %c0_133 = arith.constant 0 : index
    %137 = vector.load %arg4[%c8_131, %c0_132, %c0_133] : memref<9x16x16xbf16, #tpu.memory_space<vmem>>, vector<1x16x16xbf16>
    %138 = vector.shape_cast %137 : vector<1x16x16xbf16> to vector<16x16xbf16>
    %cst_134 = arith.constant dense<0.000000e+00> : vector<256x16xf32>
    %139 = tpu.matmul %136, %138, %cst_134 {dimension_numbers = #tpu.dot_dimension_numbers<[1], [0], [0], [1], [0, 0, 1, 1], [], []>} : vector<256x16xbf16>, vector<16x16xbf16>, vector<256x16xf32> -> vector<256x16xf32>
    %140 = arith.addf %133, %139 : vector<256x16xf32>
    %c1_135 = arith.constant 1 : index
    %c1_136 = arith.constant 1 : index
    %c0_137 = arith.constant 0 : index
    %141 = vector.load %arg7[%c1_135, %c1_136, %c0_137] : memref<18x18x16xf32, #tpu.memory_space<vmem>>, vector<16x16x16xf32>
    %142 = vector.shape_cast %141 : vector<16x16x16xf32> to vector<256x16xf32>
    %c0_138 = arith.constant 0 : index
    %c0_139 = arith.constant 0 : index
    %143 = vector.load %arg5[%c0_138, %c0_139] : memref<1x16xf32, #tpu.memory_space<vmem>>, vector<1x16xf32>
    %144 = vector.broadcast %143 : vector<1x16xf32> to vector<256x16xf32>
    %145 = arith.addf %140, %144 : vector<256x16xf32>
    %146 = arith.addf %145, %142 : vector<256x16xf32>
    %cst_140 = arith.constant 0.000000e+00 : f32
    %147 = vector.broadcast %cst_140 : f32 to vector<256x16xf32>
    %148 = arith.maximumf %146, %147 : vector<256x16xf32>
    %149 = vector.shape_cast %148 : vector<256x16xf32> to vector<16x16x16xf32>
    %c0_141 = arith.constant 0 : index
    %c0_142 = arith.constant 0 : index
    %c0_143 = arith.constant 0 : index
    %c0_144 = arith.constant 0 : index
    %150 = vector.load %arg6[%c0_141, %c0_142, %c0_143, %c0_144] : memref<1x16x16x16xf32, #tpu.memory_space<vmem>>, vector<1x16x16x16xf32>
    %151 = vector.shape_cast %150 : vector<1x16x16x16xf32> to vector<16x16x16xf32>
    %152 = vector.shape_cast %149 : vector<16x16x16xf32> to vector<1x16x16x16xf32>
    tpu.vector_store %arg6[%c0_141, %c0_142, %c0_143, %c0_144], %152 {strides = array<i32>} : memref<1x16x16x16xf32, #tpu.memory_space<vmem>>, vector<1x16x16x16xf32>,
    return
  }
  func.func @transform_0(%arg0: i32) -> (i32, i32, i32, i32) {
    %c0_i32 = arith.constant 0 : i32
    %c0_i32_0 = arith.constant 0 : i32
    %c0_i32_1 = arith.constant 0 : i32
    %c0_i32_2 = arith.constant 0 : i32
    return %arg0, %c0_i32, %c0_i32_0, %c0_i32_1 : i32, i32, i32, i32
  }
  func.func @transform_1(%arg0: i32) -> (i32, i32, i32) {
    %c0_i32 = arith.constant 0 : i32
    %c0_i32_0 = arith.constant 0 : i32
    %c0_i32_1 = arith.constant 0 : i32
    %c0_i32_2 = arith.constant 0 : i32
    return %c0_i32, %c0_i32_0, %c0_i32_1 : i32, i32, i32
  }
  func.func @transform_2(%arg0: i32) -> (i32, i32) {
    %c0_i32 = arith.constant 0 : i32
    %c0_i32_0 = arith.constant 0 : i32
    %c0_i32_1 = arith.constant 0 : i32
    return %c0_i32, %c0_i32_0 : i32, i32
  }
  func.func @transform_3(%arg0: i32) -> (i32, i32, i32) {
    %c0_i32 = arith.constant 0 : i32
    %c0_i32_0 = arith.constant 0 : i32
    %c0_i32_1 = arith.constant 0 : i32
    %c0_i32_2 = arith.constant 0 : i32
    return %c0_i32, %c0_i32_0, %c0_i32_1 : i32, i32, i32
  }
  func.func @transform_4(%arg0: i32) -> (i32, i32) {
    %c0_i32 = arith.constant 0 : i32
    %c0_i32_0 = arith.constant 0 : i32
    %c0_i32_1 = arith.constant 0 : i32
    return %c0_i32, %c0_i32_0 : i32, i32
  }
  func.func @transform_5(%arg0: i32) -> (i32, i32, i32, i32) {
    %c0_i32 = arith.constant 0 : i32
    %c0_i32_0 = arith.constant 0 : i32
    %c0_i32_1 = arith.constant 0 : i32
    %c0_i32_2 = arith.constant 0 : i32
    return %arg0, %c0_i32, %c0_i32_0, %c0_i32_1 : i32, i32, i32, i32
  }
}

</mosaic_0001>

<llo_original>
// kernel: basic_block_shared_only_forward.1
$region0: #{basic_block_shared_only_forward.1}
  #allocation0 [shape = 'u32[]', space=smem, size = 0x4, offset = 0x4, fixed_abs, tag = 'smem constant byte address 0x4 - core index']
  #allocation1 [shape = 'u32[144,128]{1,0:T(1,128)}', space=vmem, size = 0x12000, scoped, tag = 'internal scratch']
  #allocation2 [shape = 'f32[18,18,16]{2,1,0:T(8,128)}', space=vmem, size = 0x36000, scoped, tag = 'scratch operand']
  #allocation3 [shape = 'f32[18,18,16]{2,1,0:T(8,128)}', space=vmem, size = 0x36000, scoped, tag = 'scratch operand']
  %s0 = inlined_call_operand.vmem [shape: bf16[2,18,18,16], index: 0, kind: input, shape index: {}]
  %s1 = inlined_call_operand.vmem [shape: bf16[9,16,16], index: 1, kind: input, shape index: {}]
  %s2 = inlined_call_operand.vmem [shape: f32[1,16], index: 2, kind: input, shape index: {}]
  %s3 = inlined_call_operand.vmem [shape: bf16[9,16,16], index: 3, kind: input, shape index: {}]
  %s4 = inlined_call_operand.vmem [shape: f32[1,16], index: 4, kind: input, shape index: {}]
  %s5 = inlined_call_operand.vmem [shape: f32[2,16,16,16], index: 5, kind: output, shape index: {}]
  %s6 = sld [smem:[#allocation0]]
  $region53: #{basic_block_shared_only_forward.1} parent=0
    _
  %s8 = ssub.s32 1, %s6
  %s9 = scalar_select 0, %s8, %s6
  loop: start=0, step=1, limit=4
  $region2: #{basic_block_shared_only_forward.1} parent=0 // loop_pre_header
    _
  $region3: #{basic_block_shared_only_forward.1} parent=0 // loop_header
    %s11 = sphi 0, %s15
    %p12 = scmp.ge.s32.totalorder %s11, 4
    %s21 = sphi 0, %s23
    %s24 = sphi 0, %s21
    %s25 = sphi 0, %s24
    %s41 = sphi 0, %s25
    %s45 = sphi 0, %s45
    %s47 = sphi 0, %s45
    %s48 = sphi 0, %s47
    %s62 = sphi 0, %s48
    %s66 = sphi 0, %s66
    %s68 = sphi 0, %s66
    %s69 = sphi 0, %s68
    %s83 = sphi 0, %s69
    %s87 = sphi 0, %s87
    %s89 = sphi 0, %s87
    %s90 = sphi 0, %s89
    %s104 = sphi 0, %s90
    %s108 = sphi 0, %s108
    %s110 = sphi 0, %s108
    %s111 = sphi 0, %s110
    %s125 = sphi 0, %s111
    %s131 = sphi 0, %s133
    %s134 = sphi 0, %s131
    %s135 = sphi 0, %s134
    %s151 = sphi 0, %s135
  $region4: #{basic_block_shared_only_forward.1} parent=0 // loop_header_branch
    %14 = sbr.rel (%p12) target = $region8
  $region5: #{basic_block_shared_only_forward.1} parent=0 // loop_body
    %s16 = ssub.s32 %s11, 1
    %s17 = ssub.s32 %s11, 2
    %s18 = sadd.s32 %s11, 1
    %s19 = ssub.s32 %s11, %s18
    %p20 = scmp.eq.s32.totalorder %s19, 0
    %s22 = sadd.s32 %s21, 1
    %s23 = scalar_select %p20, %s21, %s22
    %p26 = pneg %p20
    %p27 = scmp.eq.s32.totalorder %s11, 1
    %p28 = por %p26, %p27
    %p29 = scmp.ne.s32.totalorder %s21, %s24
    %p30 = scmp.eq.s32.totalorder %s11, 0
    %p31 = por %p29, %p30
    %p32 = scmp.ne.s32.totalorder %s21, %s24
    %p33 = scmp.eq.s32.totalorder %s16, 1
    %p34 = por %p32, %p33
    %p35 = scmp.ne.s32.totalorder %s24, %s25
    %p36 = scmp.eq.s32.totalorder %s16, 0
    %p37 = por %p35, %p36
    %p38 = scmp.ne.s32.totalorder %s24, %s25
    %p39 = scmp.eq.s32.totalorder %s17, 1
    %p40 = por %p38, %p39
    %p42 = scmp.ne.s32.totalorder %s25, %s41
    %p43 = scmp.eq.s32.totalorder %s17, 0
    %p44 = por %p42, %p43
    %s46 = sadd.s32 %s45, 1
    %p49 = scmp.eq.s32.totalorder %s11, 1
    %p50 = scmp.ne.s32.totalorder %s45, %s47
    %p51 = scmp.eq.s32.totalorder %s11, 0
    %p52 = por %p50, %p51
    %p53 = scmp.ne.s32.totalorder %s45, %s47
    %p54 = scmp.eq.s32.totalorder %s16, 1
    %p55 = por %p53, %p54
    %p56 = scmp.ne.s32.totalorder %s47, %s48
    %p57 = scmp.eq.s32.totalorder %s16, 0
    %p58 = por %p56, %p57
    %p59 = scmp.ne.s32.totalorder %s47, %s48
    %p60 = scmp.eq.s32.totalorder %s17, 1
    %p61 = por %p59, %p60
    %p63 = scmp.ne.s32.totalorder %s48, %s62
    %p64 = scmp.eq.s32.totalorder %s17, 0
    %p65 = por %p63, %p64
    %s67 = sadd.s32 %s66, 1
    %p70 = scmp.eq.s32.totalorder %s11, 1
    %p71 = scmp.ne.s32.totalorder %s66, %s68
    %p72 = scmp.eq.s32.totalorder %s11, 0
    %p73 = por %p71, %p72
    %p74 = scmp.ne.s32.totalorder %s66, %s68
    %p75 = scmp.eq.s32.totalorder %s16, 1
    %p76 = por %p74, %p75
    %p77 = scmp.ne.s32.totalorder %s68, %s69
    %p78 = scmp.eq.s32.totalorder %s16, 0
    %p79 = por %p77, %p78
    %p80 = scmp.ne.s32.totalorder %s68, %s69
    %p81 = scmp.eq.s32.totalorder %s17, 1
    %p82 = por %p80, %p81
    %p84 = scmp.ne.s32.totalorder %s69, %s83
    %p85 = scmp.eq.s32.totalorder %s17, 0
    %p86 = por %p84, %p85
    %s88 = sadd.s32 %s87, 1
    %p91 = scmp.eq.s32.totalorder %s11, 1
    %p92 = scmp.ne.s32.totalorder %s87, %s89
    %p93 = scmp.eq.s32.totalorder %s11, 0
    %p94 = por %p92, %p93
    %p95 = scmp.ne.s32.totalorder %s87, %s89
    %p96 = scmp.eq.s32.totalorder %s16, 1
    %p97 = por %p95, %p96
    %p98 = scmp.ne.s32.totalorder %s89, %s90
    %p99 = scmp.eq.s32.totalorder %s16, 0
    %p100 = por %p98, %p99
    %p101 = scmp.ne.s32.totalorder %s89, %s90
    %p102 = scmp.eq.s32.totalorder %s17, 1
    %p103 = por %p101, %p102
    %p105 = scmp.ne.s32.totalorder %s90, %s104
    %p106 = scmp.eq.s32.totalorder %s17, 0
    %p107 = por %p105, %p106
    %s109 = sadd.s32 %s108, 1
    %p112 = scmp.eq.s32.totalorder %s11, 1
    %p113 = scmp.ne.s32.totalorder %s108, %s110
    %p114 = scmp.eq.s32.totalorder %s11, 0
    %p115 = por %p113, %p114
    %p116 = scmp.ne.s32.totalorder %s108, %s110
    %p117 = scmp.eq.s32.totalorder %s16, 1
    %p118 = por %p116, %p117
    %p119 = scmp.ne.s32.totalorder %s110, %s111
    %p120 = scmp.eq.s32.totalorder %s16, 0
    %p121 = por %p119, %p120
    %p122 = scmp.ne.s32.totalorder %s110, %s111
    %p123 = scmp.eq.s32.totalorder %s17, 1
    %p124 = por %p122, %p123
    %p126 = scmp.ne.s32.totalorder %s111, %s125
    %p127 = scmp.eq.s32.totalorder %s17, 0
    %p128 = por %p126, %p127
    %s129 = ssub.s32 %s11, %s18
    %p130 = scmp.eq.s32.totalorder %s129, 0
    %s132 = sadd.s32 %s131, 1
    %s133 = scalar_select %p130, %s131, %s132
    %p136 = pneg %p130
    %p137 = scmp.eq.s32.totalorder %s11, 1
    %p138 = por %p136, %p137
    %p139 = scmp.ne.s32.totalorder %s131, %s134
    %p140 = scmp.eq.s32.totalorder %s11, 0
    %p141 = por %p139, %p140
    %p142 = scmp.ne.s32.totalorder %s131, %s134
    %p143 = scmp.eq.s32.totalorder %s16, 1
    %p144 = por %p142, %p143
    %p145 = scmp.ne.s32.totalorder %s134, %s135
    %p146 = scmp.eq.s32.totalorder %s16, 0
    %p147 = por %p145, %p146
    %p148 = scmp.ne.s32.totalorder %s134, %s135
    %p149 = scmp.eq.s32.totalorder %s17, 1
    %p150 = por %p148, %p149
    %p152 = scmp.ne.s32.totalorder %s135, %s151
    %p153 = scmp.eq.s32.totalorder %s17, 0
    %p154 = por %p152, %p153
    %p155 = scmp.le.s32.totalorder 1, %s11
    %p156 = scmp.lt.s32.totalorder %s11, 3
    %p157 = pnand %p155, %p156
    %p158 = pneg %p157
    // Predicated region
    $region9: #{basic_block_shared_only_forward.1} parent=5 // pred_check
      _
    $region10: #{basic_block_shared_only_forward.1} parent=5 // pred_check_branch
      %160 = sbr.rel (%p157) target = $region12
    $region11: #{basic_block_shared_only_forward.1} parent=5 // pred_region
      %s161 = ssub.s32 %s11, 1
      // Predicated region
      $region13: #{basic_block_shared_only_forward.1} parent=11 // pred_check
        %p162 = pneg %p58
      $region14: #{basic_block_shared_only_forward.1} parent=11 // pred_check_branch
        %164 = sbr.rel (%p162) target = $region16
      $region15: #{basic_block_shared_only_forward.1} parent=11 // pred_region
        _
      $region16: #{basic_block_shared_only_forward.1} parent=11 // pred_fallthru
        _
      // Predicated region
      $region17: #{basic_block_shared_only_forward.1} parent=11 // pred_check
        %p165 = pneg %p79
      $region18: #{basic_block_shared_only_forward.1} parent=11 // pred_check_branch
        %167 = sbr.rel (%p165) target = $region20
      $region19: #{basic_block_shared_only_forward.1} parent=11 // pred_region
        _
      $region20: #{basic_block_shared_only_forward.1} parent=11 // pred_fallthru
        _
      // Predicated region
      $region21: #{basic_block_shared_only_forward.1} parent=11 // pred_check
        %p168 = pneg %p100
      $region22: #{basic_block_shared_only_forward.1} parent=11 // pred_check_branch
        %170 = sbr.rel (%p168) target = $region24
      $region23: #{basic_block_shared_only_forward.1} parent=11 // pred_region
        _
      $region24: #{basic_block_shared_only_forward.1} parent=11 // pred_fallthru
        _
      // Predicated region
      $region25: #{basic_block_shared_only_forward.1} parent=11 // pred_check
        %p171 = pneg %p121
      $region26: #{basic_block_shared_only_forward.1} parent=11 // pred_check_branch
        %173 = sbr.rel (%p171) target = $region28
      $region27: #{basic_block_shared_only_forward.1} parent=11 // pred_region
        _
      $region28: #{basic_block_shared_only_forward.1} parent=11 // pred_fallthru
        _
    $region12: #{basic_block_shared_only_forward.1} parent=5 // pred_fallthru
      _
    %p174 = scmp.lt.s32.totalorder %s11, 2
    // Predicated region
    $region29: #{basic_block_shared_only_forward.1} parent=5 // pred_check
      %p175 = pneg %p174
    $region30: #{basic_block_shared_only_forward.1} parent=5 // pred_check_branch
      %177 = sbr.rel (%p175) target = $region32
    $region31: #{basic_block_shared_only_forward.1} parent=5 // pred_region
      // Predicated region
      $region33: #{basic_block_shared_only_forward.1} parent=31 // pred_check
        %p178 = pneg %p31
      $region34: #{basic_block_shared_only_forward.1} parent=31 // pred_check_branch
        %180 = sbr.rel (%p178) target = $region36
      $region35: #{basic_block_shared_only_forward.1} parent=31 // pred_region
        %p181 = scmp.lt.s32.totalorder %s11, 1
        %s182 = scalar_select %p181, %s11, 1
        %s183 = smul.addr %s182, 54
        %s184 = smul.addr %s183, 4
        %s185 = scalar_lea.vmem %s0, %s184
      $region36: #{basic_block_shared_only_forward.1} parent=31 // pred_fallthru
        _
    $region32: #{basic_block_shared_only_forward.1} parent=5 // pred_fallthru
      _
    %p186 = scmp.le.s32.totalorder 1, %s11
    %p187 = scmp.lt.s32.totalorder %s11, 3
    %p188 = pnand %p186, %p187
    %p189 = pneg %p188
    // Predicated region
    $region37: #{basic_block_shared_only_forward.1} parent=5 // pred_check
      _
    $region38: #{basic_block_shared_only_forward.1} parent=5 // pred_check_branch
      %191 = sbr.rel (%p188) target = $region40
    $region39: #{basic_block_shared_only_forward.1} parent=5 // pred_region
      %s192 = ssub.s32 %s11, 1
      %p193 = scmp.lt.s32.totalorder %s16, 1
      %s194 = scalar_select %p193, %s16, 1
      %s195 = smul.addr %s194, 54
      %s196 = smul.addr %s195, 4
      %s197 = scalar_lea.vmem %s0, %s196
      %p198 = pneg %p37
      %p199 = pneg %p34
      %p200 = pneg %p58
      %p201 = pneg %p55
      %p202 = pneg %p79
      %p203 = pneg %p76
      %p204 = pneg %p100
      %p205 = pneg %p97
      %p206 = pneg %p121
      %p207 = pneg %p118
      %p208 = pneg %p147
      %p209 = pneg %p144
      %p210 = scmp.lt.s32.totalorder %s16, 1
      %s211 = scalar_select %p210, %s16, 1
      %s212 = smul.addr %s211, 32
      %s213 = smul.addr %s212, 8
      %s214 = scalar_lea.vmem %s5, %s213
      %p215 = scmp.lt.s32.totalorder %s16, 1
      %s216 = scalar_select %p215, %s16, 1
      %s217 = smul.addr %s216, 54
      %s218 = smul.addr %s217, 4
      %s219 = scalar_lea.vmem %s0, %s218
      %p220 = scmp.lt.s32.totalorder %s16, 1
      %s221 = scalar_select %p220, %s16, 1
      %s222 = smul.addr %s221, 32
      %s223 = smul.addr %s222, 8
      %s224 = scalar_lea.vmem %s5, %s223
      %v226 = vld [vmem:[%s219] sm:$0xf]
      %v227 = vld [vmem:[%s219 + $0x4] sm:$0xf]
      %v228 = vld [vmem:[%s219 + $0x8] sm:$0x1]
      %v229 = vld [vmem:[%s219 + $0xc] sm:$0xf]
      %v230 = vld [vmem:[%s219 + $0x10] sm:$0xf]
      %v231 = vld [vmem:[%s219 + $0x14] sm:$0x1]
      %v232 = vld [vmem:[%s219 + $0x18] sm:$0xf]
      %v233 = vld [vmem:[%s219 + $0x1c] sm:$0xf]
      %v234 = vld [vmem:[%s219 + $0x20] sm:$0x1]
      %v235 = vld [vmem:[%s219 + $0x24] sm:$0xf]
      %v236 = vld [vmem:[%s219 + $0x28] sm:$0xf]
      %v237 = vld [vmem:[%s219 + $0x2c] sm:$0x1]
      %v238 = vld [vmem:[%s219 + $0x30] sm:$0xf]
      %v239 = vld [vmem:[%s219 + $0x34] sm:$0xf]
      %v240 = vld [vmem:[%s219 + $0x38] sm:$0x1]
      %v241 = vld [vmem:[%s219 + $0x3c] sm:$0xf]
      %v242 = vld [vmem:[%s219 + $0x40] sm:$0xf]
      %v243 = vld [vmem:[%s219 + $0x44] sm:$0x1]
      %v244 = vld [vmem:[%s219 + $0x48] sm:$0xf]
      %v245 = vld [vmem:[%s219 + $0x4c] sm:$0xf]
      %v246 = vld [vmem:[%s219 + $0x50] sm:$0x1]
      %v247 = vld [vmem:[%s219 + $0x54] sm:$0xf]
      %v248 = vld [vmem:[%s219 + $0x58] sm:$0xf]
      %v249 = vld [vmem:[%s219 + $0x5c] sm:$0x1]
      %v250 = vld [vmem:[%s219 + $0x60] sm:$0xf]
      %v251 = vld [vmem:[%s219 + $0x64] sm:$0xf]
      %v252 = vld [vmem:[%s219 + $0x68] sm:$0x1]
      %v253 = vld [vmem:[%s219 + $0x6c] sm:$0xf]
      %v254 = vld [vmem:[%s219 + $0x70] sm:$0xf]
      %v255 = vld [vmem:[%s219 + $0x74] sm:$0x1]
      %v256 = vld [vmem:[%s219 + $0x78] sm:$0xf]
      %v257 = vld [vmem:[%s219 + $0x7c] sm:$0xf]
      %v258 = vld [vmem:[%s219 + $0x80] sm:$0x1]
      %v259 = vld [vmem:[%s219 + $0x84] sm:$0xf]
      %v260 = vld [vmem:[%s219 + $0x88] sm:$0xf]
      %v261 = vld [vmem:[%s219 + $0x8c] sm:$0x1]
      %v262 = vld [vmem:[%s219 + $0x90] sm:$0xf]
      %v263 = vld [vmem:[%s219 + $0x94] sm:$0xf]
      %v264 = vld [vmem:[%s219 + $0x98] sm:$0x1]
      %v265 = vld [vmem:[%s219 + $0x9c] sm:$0xf]
      %v266 = vld [vmem:[%s219 + $0xa0] sm:$0xf]
      %v267 = vld [vmem:[%s219 + $0xa4] sm:$0x1]
      %v268 = vld [vmem:[%s219 + $0xa8] sm:$0xf]
      %v269 = vld [vmem:[%s219 + $0xac] sm:$0xf]
      %v270 = vld [vmem:[%s219 + $0xb0] sm:$0x1]
      %v271 = vld [vmem:[%s219 + $0xb4] sm:$0xf]
      %v272 = vld [vmem:[%s219 + $0xb8] sm:$0xf]
      %v273 = vld [vmem:[%s219 + $0xbc] sm:$0x1]
      %v274 = vld [vmem:[%s219 + $0xc0] sm:$0xf]
      %v275 = vld [vmem:[%s219 + $0xc4] sm:$0xf]
      %v276 = vld [vmem:[%s219 + $0xc8] sm:$0x1]
      %v277 = vld [vmem:[%s219 + $0xcc] sm:$0xf]
      %v278 = vld [vmem:[%s219 + $0xd0] sm:$0xf]
      %v279 = vld [vmem:[%s219 + $0xd4] sm:$0x1]
      %v280 = vunpack.c.l.bf16 %v226
      %v281 = vunpack.c.l.bf16 %v227
      %v282 = vunpack.c.l.bf16 %v228
      %v283 = vunpack.c.l.bf16 %v229
      %v284 = vunpack.c.l.bf16 %v230
      %v285 = vunpack.c.l.bf16 %v231
      %v286 = vunpack.c.l.bf16 %v232
      %v287 = vunpack.c.l.bf16 %v233
      %v288 = vunpack.c.l.bf16 %v234
      %v289 = vunpack.c.l.bf16 %v235
      %v290 = vunpack.c.l.bf16 %v236
      %v291 = vunpack.c.l.bf16 %v237
      %v292 = vunpack.c.l.bf16 %v238
      %v293 = vunpack.c.l.bf16 %v239
      %v294 = vunpack.c.l.bf16 %v240
      %v295 = vunpack.c.l.bf16 %v241
      %v296 = vunpack.c.l.bf16 %v242
      %v297 = vunpack.c.l.bf16 %v243
      %v298 = vunpack.c.l.bf16 %v244
      %v299 = vunpack.c.l.bf16 %v245
      %v300 = vunpack.c.l.bf16 %v246
      %v301 = vunpack.c.l.bf16 %v247
      %v302 = vunpack.c.l.bf16 %v248
      %v303 = vunpack.c.l.bf16 %v249
      %v304 = vunpack.c.l.bf16 %v250
      %v305 = vunpack.c.l.bf16 %v251
      %v306 = vunpack.c.l.bf16 %v252
      %v307 = vunpack.c.l.bf16 %v253
      %v308 = vunpack.c.l.bf16 %v254
      %v309 = vunpack.c.l.bf16 %v255
      %v310 = vunpack.c.l.bf16 %v256
      %v311 = vunpack.c.l.bf16 %v257
      %v312 = vunpack.c.l.bf16 %v258
      %v313 = vunpack.c.l.bf16 %v259
      %v314 = vunpack.c.l.bf16 %v260
      %v315 = vunpack.c.l.bf16 %v261
      %v316 = vunpack.c.l.bf16 %v262
      %v317 = vunpack.c.l.bf16 %v263
      %v318 = vunpack.c.l.bf16 %v264
      %v319 = vunpack.c.l.bf16 %v265
      %v320 = vunpack.c.l.bf16 %v266
      %v321 = vunpack.c.l.bf16 %v267
      %v322 = vunpack.c.l.bf16 %v268
      %v323 = vunpack.c.l.bf16 %v269
      %v324 = vunpack.c.l.bf16 %v270
      %v325 = vunpack.c.l.bf16 %v271
      %v326 = vunpack.c.l.bf16 %v272
      %v327 = vunpack.c.l.bf16 %v273
      %v328 = vunpack.c.l.bf16 %v274
      %v329 = vunpack.c.l.bf16 %v275
      %v330 = vunpack.c.l.bf16 %v276
      %v331 = vunpack.c.l.bf16 %v277
      %v332 = vunpack.c.l.bf16 %v278
      %v333 = vunpack.c.l.bf16 %v279
      %vm334 = vcmask 130048
      %335 = vst.msk [vmem:[#allocation2] sm:$0xff] %vm334, %v280
      %336 = vst.msk [vmem:[#allocation2 + $0x8] sm:$0xff] %vm334, %v281
      %vm337 = vcmask 123904
      %338 = vst.msk [vmem:[#allocation2 + $0x10] sm:$0x3] %vm337, %v282
      %339 = vst.msk [vmem:[#allocation2 + $0x18] sm:$0xff] %vm334, %v283
      %340 = vst.msk [vmem:[#allocation2 + $0x20] sm:$0xff] %vm334, %v284
      %341 = vst.msk [vmem:[#allocation2 + $0x28] sm:$0x3] %vm337, %v285
      %342 = vst.msk [vmem:[#allocation2 + $0x30] sm:$0xff] %vm334, %v286
      %343 = vst.msk [vmem:[#allocation2 + $0x38] sm:$0xff] %vm334, %v287
      %344 = vst.msk [vmem:[#allocation2 + $0x40] sm:$0x3] %vm337, %v288
      %345 = vst.msk [vmem:[#allocation2 + $0x48] sm:$0xff] %vm334, %v289
      %346 = vst.msk [vmem:[#allocation2 + $0x50] sm:$0xff] %vm334, %v290
      %347 = vst.msk [vmem:[#allocation2 + $0x58] sm:$0x3] %vm337, %v291
      %348 = vst.msk [vmem:[#allocation2 + $0x60] sm:$0xff] %vm334, %v292
      %349 = vst.msk [vmem:[#allocation2 + $0x68] sm:$0xff] %vm334, %v293
      %350 = vst.msk [vmem:[#allocation2 + $0x70] sm:$0x3] %vm337, %v294
      %351 = vst.msk [vmem:[#allocation2 + $0x78] sm:$0xff] %vm334, %v295
      %352 = vst.msk [vmem:[#allocation2 + $0x80] sm:$0xff] %vm334, %v296
      %353 = vst.msk [vmem:[#allocation2 + $0x88] sm:$0x3] %vm337, %v297
      %354 = vst.msk [vmem:[#allocation2 + $0x90] sm:$0xff] %vm334, %v298
      %355 = vst.msk [vmem:[#allocation2 + $0x98] sm:$0xff] %vm334, %v299
      %356 = vst.msk [vmem:[#allocation2 + $0xa0] sm:$0x3] %vm337, %v300
      %357 = vst.msk [vmem:[#allocation2 + $0xa8] sm:$0xff] %vm334, %v301
      %358 = vst.msk [vmem:[#allocation2 + $0xb0] sm:$0xff] %vm334, %v302
      %359 = vst.msk [vmem:[#allocation2 + $0xb8] sm:$0x3] %vm337, %v303
      %360 = vst.msk [vmem:[#allocation2 + $0xc0] sm:$0xff] %vm334, %v304
      %361 = vst.msk [vmem:[#allocation2 + $0xc8] sm:$0xff] %vm334, %v305
      %362 = vst.msk [vmem:[#allocation2 + $0xd0] sm:$0x3] %vm337, %v306
      %363 = vst.msk [vmem:[#allocation2 + $0xd8] sm:$0xff] %vm334, %v307
      %364 = vst.msk [vmem:[#allocation2 + $0xe0] sm:$0xff] %vm334, %v308
      %365 = vst.msk [vmem:[#allocation2 + $0xe8] sm:$0x3] %vm337, %v309
      %366 = vst.msk [vmem:[#allocation2 + $0xf0] sm:$0xff] %vm334, %v310
      %367 = vst.msk [vmem:[#allocation2 + $0xf8] sm:$0xff] %vm334, %v311
      %368 = vst.msk [vmem:[#allocation2 + $0x100] sm:$0x3] %vm337, %v312
      %369 = vst.msk [vmem:[#allocation2 + $0x108] sm:$0xff] %vm334, %v313
      %370 = vst.msk [vmem:[#allocation2 + $0x110] sm:$0xff] %vm334, %v314
      %371 = vst.msk [vmem:[#allocation2 + $0x118] sm:$0x3] %vm337, %v315
      %372 = vst.msk [vmem:[#allocation2 + $0x120] sm:$0xff] %vm334, %v316
      %373 = vst.msk [vmem:[#allocation2 + $0x128] sm:$0xff] %vm334, %v317
      %374 = vst.msk [vmem:[#allocation2 + $0x130] sm:$0x3] %vm337, %v318
      %375 = vst.msk [vmem:[#allocation2 + $0x138] sm:$0xff] %vm334, %v319
      %376 = vst.msk [vmem:[#allocation2 + $0x140] sm:$0xff] %vm334, %v320
      %377 = vst.msk [vmem:[#allocation2 + $0x148] sm:$0x3] %vm337, %v321
      %378 = vst.msk [vmem:[#allocation2 + $0x150] sm:$0xff] %vm334, %v322
      %379 = vst.msk [vmem:[#allocation2 + $0x158] sm:$0xff] %vm334, %v323
      %380 = vst.msk [vmem:[#allocation2 + $0x160] sm:$0x3] %vm337, %v324
      %381 = vst.msk [vmem:[#allocation2 + $0x168] sm:$0xff] %vm334, %v325
      %382 = vst.msk [vmem:[#allocation2 + $0x170] sm:$0xff] %vm334, %v326
      %383 = vst.msk [vmem:[#allocation2 + $0x178] sm:$0x3] %vm337, %v327
      %384 = vst.msk [vmem:[#allocation2 + $0x180] sm:$0xff] %vm334, %v328
      %385 = vst.msk [vmem:[#allocation2 + $0x188] sm:$0xff] %vm334, %v329
      %386 = vst.msk [vmem:[#allocation2 + $0x190] sm:$0x3] %vm337, %v330
      %387 = vst.msk [vmem:[#allocation2 + $0x198] sm:$0xff] %vm334, %v331
      %388 = vst.msk [vmem:[#allocation2 + $0x1a0] sm:$0xff] %vm334, %v332
      %389 = vst.msk [vmem:[#allocation2 + $0x1a8] sm:$0x3] %vm337, %v333
      %v390 = vld [vmem:[#allocation2] sm:$0xff]
      %v391 = vld [vmem:[#allocation2 + $0x8] sm:$0xff]
      %v392 = vld [vmem:[#allocation2 + $0x18] sm:$0xff]
      %v393 = vld [vmem:[#allocation2 + $0x20] sm:$0xff]
      %v394 = vld [vmem:[#allocation2 + $0x30] sm:$0xff]
      %v395 = vld [vmem:[#allocation2 + $0x38] sm:$0xff]
      %v396 = vld [vmem:[#allocation2 + $0x48] sm:$0xff]
      %v397 = vld [vmem:[#allocation2 + $0x50] sm:$0xff]
      %v398 = vld [vmem:[#allocation2 + $0x60] sm:$0xff]
      %v399 = vld [vmem:[#allocation2 + $0x68] sm:$0xff]
      %v400 = vld [vmem:[#allocation2 + $0x78] sm:$0xff]
      %v401 = vld [vmem:[#allocation2 + $0x80] sm:$0xff]
      %v402 = vld [vmem:[#allocation2 + $0x90] sm:$0xff]
      %v403 = vld [vmem:[#allocation2 + $0x98] sm:$0xff]
      %v404 = vld [vmem:[#allocation2 + $0xa8] sm:$0xff]
      %v405 = vld [vmem:[#allocation2 + $0xb0] sm:$0xff]
      %v406 = vld [vmem:[#allocation2 + $0xc0] sm:$0xff]
      %v407 = vld [vmem:[#allocation2 + $0xc8] sm:$0xff]
      %v408 = vld [vmem:[#allocation2 + $0xd8] sm:$0xff]
      %v409 = vld [vmem:[#allocation2 + $0xe0] sm:$0xff]
      %v410 = vld [vmem:[#allocation2 + $0xf0] sm:$0xff]
      %v411 = vld [vmem:[#allocation2 + $0xf8] sm:$0xff]
      %v412 = vld [vmem:[#allocation2 + $0x108] sm:$0xff]
      %v413 = vld [vmem:[#allocation2 + $0x110] sm:$0xff]
      %v414 = vld [vmem:[#allocation2 + $0x120] sm:$0xff]
      %v415 = vld [vmem:[#allocation2 + $0x128] sm:$0xff]
      %v416 = vld [vmem:[#allocation2 + $0x138] sm:$0xff]
      %v417 = vld [vmem:[#allocation2 + $0x140] sm:$0xff]
      %v418 = vld [vmem:[#allocation2 + $0x150] sm:$0xff]
      %v419 = vld [vmem:[#allocation2 + $0x158] sm:$0xff]
      %v420 = vld [vmem:[#allocation2 + $0x168] sm:$0xff]
      %v421 = vld [vmem:[#allocation2 + $0x170] sm:$0xff]
      %v422 = vpack.c.bf16 %v391, %v390
      %v423 = vpack.c.bf16 %v393, %v392
      %v424 = vpack.c.bf16 %v395, %v394
      %v425 = vpack.c.bf16 %v397, %v396
      %v426 = vpack.c.bf16 %v399, %v398
      %v427 = vpack.c.bf16 %v401, %v400
      %v428 = vpack.c.bf16 %v403, %v402
      %v429 = vpack.c.bf16 %v405, %v404
      %v430 = vpack.c.bf16 %v407, %v406
      %v431 = vpack.c.bf16 %v409, %v408
      %v432 = vpack.c.bf16 %v411, %v410
      %v433 = vpack.c.bf16 %v413, %v412
      %v434 = vpack.c.bf16 %v415, %v414
      %v435 = vpack.c.bf16 %v417, %v416
      %v436 = vpack.c.bf16 %v419, %v418
      %v437 = vpack.c.bf16 %v421, %v420
      %v438 = vld [vmem:[%s1] sm:$0xf]
      %v439 = vld [vmem:[%s1 + $0x4] sm:$0xf]
      %v440 = vld [vmem:[#allocation2 + $0x1] sm:$0xff]
      %v441 = vld [vmem:[#allocation2 + $0x9] sm:$0xff]
      %v442 = vld [vmem:[#allocation2 + $0x19] sm:$0xff]
      %v443 = vld [vmem:[#allocation2 + $0x21] sm:$0xff]
      %v444 = vld [vmem:[#allocation2 + $0x31] sm:$0xff]
      %v445 = vld [vmem:[#allocation2 + $0x39] sm:$0xff]
      %v446 = vld [vmem:[#allocation2 + $0x49] sm:$0xff]
      %v447 = vld [vmem:[#allocation2 + $0x51] sm:$0xff]
      %v448 = vld [vmem:[#allocation2 + $0x61] sm:$0xff]
      %v449 = vld [vmem:[#allocation2 + $0x69] sm:$0xff]
      %v450 = vld [vmem:[#allocation2 + $0x79] sm:$0xff]
      %v451 = vld [vmem:[#allocation2 + $0x81] sm:$0xff]
      %v452 = vld [vmem:[#allocation2 + $0x91] sm:$0xff]
      %v453 = vld [vmem:[#allocation2 + $0x99] sm:$0xff]
      %v454 = vld [vmem:[#allocation2 + $0xa9] sm:$0xff]
      %v455 = vld [vmem:[#allocation2 + $0xb1] sm:$0xff]
      %v456 = vld [vmem:[#allocation2 + $0xc1] sm:$0xff]
      %v457 = vld [vmem:[#allocation2 + $0xc9] sm:$0xff]
      %v458 = vld [vmem:[#allocation2 + $0xd9] sm:$0xff]
      %v459 = vld [vmem:[#allocation2 + $0xe1] sm:$0xff]
      %v460 = vld [vmem:[#allocation2 + $0xf1] sm:$0xff]
      %v461 = vld [vmem:[#allocation2 + $0xf9] sm:$0xff]
      %v462 = vld [vmem:[#allocation2 + $0x109] sm:$0xff]
      %v463 = vld [vmem:[#allocation2 + $0x111] sm:$0xff]
      %v464 = vld [vmem:[#allocation2 + $0x121] sm:$0xff]
      %v465 = vld [vmem:[#allocation2 + $0x129] sm:$0xff]
      %v466 = vld [vmem:[#allocation2 + $0x139] sm:$0xff]
      %v467 = vld [vmem:[#allocation2 + $0x141] sm:$0xff]
      %v468 = vld [vmem:[#allocation2 + $0x151] sm:$0xff]
      %v469 = vld [vmem:[#allocation2 + $0x159] sm:$0xff]
      %v470 = vld [vmem:[#allocation2 + $0x169] sm:$0xff]
      %v471 = vld [vmem:[#allocation2 + $0x171] sm:$0xff]
      %v472 = vpack.c.bf16 %v441, %v440
      %v473 = vpack.c.bf16 %v443, %v442
      %v474 = vpack.c.bf16 %v445, %v444
      %v475 = vpack.c.bf16 %v447, %v446
      %v476 = vpack.c.bf16 %v449, %v448
      %v477 = vpack.c.bf16 %v451, %v450
      %v478 = vpack.c.bf16 %v453, %v452
      %v479 = vpack.c.bf16 %v455, %v454
      %v480 = vpack.c.bf16 %v457, %v456
      %v481 = vpack.c.bf16 %v459, %v458
      %v482 = vpack.c.bf16 %v461, %v460
      %v483 = vpack.c.bf16 %v463, %v462
      %v484 = vpack.c.bf16 %v465, %v464
      %v485 = vpack.c.bf16 %v467, %v466
      %v486 = vpack.c.bf16 %v469, %v468
      %v487 = vpack.c.bf16 %v471, %v470
      %s488 = scalar_lea.vmem %s1, 8
      %v489 = vld [vmem:[%s488] sm:$0xf]
      %v490 = vld [vmem:[%s488 + $0x4] sm:$0xf]
      %v493 = vunpack.c.l.b16 %v489
      %v494 = vunpack.c.l.b16 %v490
      %v495 = vpack.c.b16 %v494, %v493
      %v498 = vsel %vm334, %v472, 0
      %v501 = vsel %vm334, %v473, 0
      %v504 = vsel %vm334, %v474, 0
      %v507 = vsel %vm334, %v475, 0
      %v510 = vsel %vm334, %v476, 0
      %v513 = vsel %vm334, %v477, 0
      %v516 = vsel %vm334, %v478, 0
      %v519 = vsel %vm334, %v479, 0
      %v522 = vsel %vm334, %v480, 0
      %v525 = vsel %vm334, %v481, 0
      %v528 = vsel %vm334, %v482, 0
      %v531 = vsel %vm334, %v483, 0
      %v534 = vsel %vm334, %v484, 0
      %v537 = vsel %vm334, %v485, 0
      %v540 = vsel %vm334, %v486, 0
      %v543 = vsel %vm334, %v487, 0
      %545 = vmatprep.subr.bf16.mxu0 0
      %546 = vmatpush1.bf16.msra.mxu0 %v495
      %547 = vmatprep.subr.bf16.mxu0 0
      %548 = vmatpush1.bf16.msra.mxu0 0
      %549 = vmatprep.subr.bf16.mxu0 0
      %550 = vmatpush1.bf16.msra.mxu0 0
      %551 = vmatprep.subr.bf16.mxu0 0
      %552 = vmatpush1.bf16.msra.mxu0 0
      %553 = vmatprep.subr.bf16.mxu0 0
      %554 = vmatpush1.bf16.msra.mxu0 0
      %555 = vmatprep.subr.bf16.mxu0 0
      %556 = vmatpush1.bf16.msra.mxu0 0
      %557 = vmatprep.subr.bf16.mxu0 0
      %558 = vmatpush1.bf16.msra.mxu0 0
      %559 = vmatprep.subr.bf16.mxu0 0
      %560 = vmatpush1.bf16.msra.mxu0 0
      %561 = vmatprep.subr.bf16.mxu0 0
      %562 = vmatpush1.bf16.msra.mxu0 0
      %563 = vmatprep.subr.bf16.mxu0 0
      %564 = vmatpush1.bf16.msra.mxu0 0
      %565 = vmatprep.subr.bf16.mxu0 0
      %566 = vmatpush1.bf16.msra.mxu0 0
      %567 = vmatprep.subr.bf16.mxu0 0
      %568 = vmatpush1.bf16.msra.mxu0 0
      %569 = vmatprep.subr.bf16.mxu0 0
      %570 = vmatpush1.bf16.msra.mxu0 0
      %571 = vmatprep.subr.bf16.mxu0 0
      %572 = vmatpush1.bf16.msra.mxu0 0
      %573 = vmatprep.subr.bf16.mxu0 0
      %574 = vmatpush1.bf16.msra.mxu0 0
      %575 = vmatprep.subr.bf16.mxu0 0
      %576 = vmatpush1.bf16.msra.mxu0 0
      %577 = vmatprep.mubr.bf16.mxu0 0
      %578 = vmatmul.mubr.bf16.gmra.mrb[0].mxu0 %v498
      %v579 = vpop.f32.mrb[0].mxu0
      %v580 = vadd.f32 0.0, %v579
      %v581 = vpop.f32.mrb[0].mxu0
      %v582 = vpop.f32.mrb[0].mxu0
      %v583 = vadd.f32 0.0, %v582
      %v584 = vpop.f32.mrb[0].mxu0
      %585 = vmatprep.mubr.bf16.mxu0 0
      %586 = vmatmul.mubr.bf16.gmra.mrb[0].mxu0 %v501
      %v587 = vpop.f32.mrb[0].mxu0
      %v588 = vadd.f32 0.0, %v587
      %v589 = vpop.f32.mrb[0].mxu0
      %v590 = vpop.f32.mrb[0].mxu0
      %v591 = vadd.f32 0.0, %v590
      %v592 = vpop.f32.mrb[0].mxu0
      %593 = vmatprep.mubr.bf16.mxu0 0
      %594 = vmatmul.mubr.bf16.gmra.mrb[0].mxu0 %v504
      %v595 = vpop.f32.mrb[0].mxu0
      %v596 = vadd.f32 0.0, %v595
      %v597 = vpop.f32.mrb[0].mxu0
      %v598 = vpop.f32.mrb[0].mxu0
      %v599 = vadd.f32 0.0, %v598
      %v600 = vpop.f32.mrb[0].mxu0
      %601 = vmatprep.mubr.bf16.mxu0 0
      %602 = vmatmul.mubr.bf16.gmra.mrb[0].mxu0 %v507
      %v603 = vpop.f32.mrb[0].mxu0
      %v604 = vadd.f32 0.0, %v603
      %v605 = vpop.f32.mrb[0].mxu0
      %v606 = vpop.f32.mrb[0].mxu0
      %v607 = vadd.f32 0.0, %v606
      %v608 = vpop.f32.mrb[0].mxu0
      %609 = vmatprep.mubr.bf16.mxu0 0
      %610 = vmatmul.mubr.bf16.gmra.mrb[0].mxu0 %v510
      %v611 = vpop.f32.mrb[0].mxu0
      %v612 = vadd.f32 0.0, %v611
      %v613 = vpop.f32.mrb[0].mxu0
      %v614 = vpop.f32.mrb[0].mxu0
      %v615 = vadd.f32 0.0, %v614
      %v616 = vpop.f32.mrb[0].mxu0
      %617 = vmatprep.mubr.bf16.mxu0 0
      %618 = vmatmul.mubr.bf16.gmra.mrb[0].mxu0 %v513
      %v619 = vpop.f32.mrb[0].mxu0
      %v620 = vadd.f32 0.0, %v619
      %v621 = vpop.f32.mrb[0].mxu0
      %v622 = vpop.f32.mrb[0].mxu0
      %v623 = vadd.f32 0.0, %v622
      %v624 = vpop.f32.mrb[0].mxu0
      %625 = vmatprep.mubr.bf16.mxu0 0
      %626 = vmatmul.mubr.bf16.gmra.mrb[0].mxu0 %v516
      %v627 = vpop.f32.mrb[0].mxu0
      %v628 = vadd.f32 0.0, %v627
      %v629 = vpop.f32.mrb[0].mxu0
      %v630 = vpop.f32.mrb[0].mxu0
      %v631 = vadd.f32 0.0, %v630
      %v632 = vpop.f32.mrb[0].mxu0
      %633 = vmatprep.mubr.bf16.mxu0 0
      %634 = vmatmul.mubr.bf16.gmra.mrb[0].mxu0 %v519
      %v635 = vpop.f32.mrb[0].mxu0
      %v636 = vadd.f32 0.0, %v635
      %v637 = vpop.f32.mrb[0].mxu0
      %v638 = vpop.f32.mrb[0].mxu0
      %v639 = vadd.f32 0.0, %v638
      %v640 = vpop.f32.mrb[0].mxu0
      %641 = vmatprep.mubr.bf16.mxu0 0
      %642 = vmatmul.mubr.bf16.gmra.mrb[0].mxu0 %v522
      %v643 = vpop.f32.mrb[0].mxu0
      %v644 = vadd.f32 0.0, %v643
      %v645 = vpop.f32.mrb[0].mxu0
      %v646 = vpop.f32.mrb[0].mxu0
      %v647 = vadd.f32 0.0, %v646
      %v648 = vpop.f32.mrb[0].mxu0
      %649 = vmatprep.mubr.bf16.mxu0 0
      %650 = vmatmul.mubr.bf16.gmra.mrb[0].mxu0 %v525
      %v651 = vpop.f32.mrb[0].mxu0
      %v652 = vadd.f32 0.0, %v651
      %v653 = vpop.f32.mrb[0].mxu0
      %v654 = vpop.f32.mrb[0].mxu0
      %v655 = vadd.f32 0.0, %v654
      %v656 = vpop.f32.mrb[0].mxu0
      %657 = vmatprep.mubr.bf16.mxu0 0
      %658 = vmatmul.mubr.bf16.gmra.mrb[0].mxu0 %v528
      %v659 = vpop.f32.mrb[0].mxu0
      %v660 = vadd.f32 0.0, %v659
      %v661 = vpop.f32.mrb[0].mxu0
      %v662 = vpop.f32.mrb[0].mxu0
      %v663 = vadd.f32 0.0, %v662
      %v664 = vpop.f32.mrb[0].mxu0
      %665 = vmatprep.mubr.bf16.mxu0 0
      %666 = vmatmul.mubr.bf16.gmra.mrb[0].mxu0 %v531
      %v667 = vpop.f32.mrb[0].mxu0
      %v668 = vadd.f32 0.0, %v667
      %v669 = vpop.f32.mrb[0].mxu0
      %v670 = vpop.f32.mrb[0].mxu0
      %v671 = vadd.f32 0.0, %v670
      %v672 = vpop.f32.mrb[0].mxu0
      %673 = vmatprep.mubr.bf16.mxu0 0
      %674 = vmatmul.mubr.bf16.gmra.mrb[0].mxu0 %v534
      %v675 = vpop.f32.mrb[0].mxu0
      %v676 = vadd.f32 0.0, %v675
      %v677 = vpop.f32.mrb[0].mxu0
      %v678 = vpop.f32.mrb[0].mxu0
      %v679 = vadd.f32 0.0, %v678
      %v680 = vpop.f32.mrb[0].mxu0
      %681 = vmatprep.mubr.bf16.mxu0 0
      %682 = vmatmul.mubr.bf16.gmra.mrb[0].mxu0 %v537
      %v683 = vpop.f32.mrb[0].mxu0
      %v684 = vadd.f32 0.0, %v683
      %v685 = vpop.f32.mrb[0].mxu0
      %v686 = vpop.f32.mrb[0].mxu0
      %v687 = vadd.f32 0.0, %v686
      %v688 = vpop.f32.mrb[0].mxu0
      %689 = vmatprep.mubr.bf16.mxu0 0
      %690 = vmatmul.mubr.bf16.gmra.mrb[0].mxu0 %v540
      %v691 = vpop.f32.mrb[0].mxu0
      %v692 = vadd.f32 0.0, %v691
      %v693 = vpop.f32.mrb[0].mxu0
      %v694 = vpop.f32.mrb[0].mxu0
      %v695 = vadd.f32 0.0, %v694
      %v696 = vpop.f32.mrb[0].mxu0
      %697 = vmatprep.mubr.bf16.mxu0 0
      %698 = vmatmul.mubr.bf16.gmra.mrb[0].mxu0 %v543
      %v699 = vpop.f32.mrb[0].mxu0
      %v700 = vadd.f32 0.0, %v699
      %v701 = vpop.f32.mrb[0].mxu0
      %v702 = vpop.f32.mrb[0].mxu0
      %v703 = vadd.f32 0.0, %v702
      %v704 = vpop.f32.mrb[0].mxu0
      %705 = vdwg.mxu0
      %v708 = vunpack.c.l.b16 %v438
      %v709 = vunpack.c.l.b16 %v439
      %v710 = vpack.c.b16 %v709, %v708
      %v713 = vsel %vm334, %v422, 0
      %v716 = vsel %vm334, %v423, 0
      %v719 = vsel %vm334, %v424, 0
      %v722 = vsel %vm334, %v425, 0
      %v725 = vsel %vm334, %v426, 0
      %v728 = vsel %vm334, %v427, 0
      %v731 = vsel %vm334, %v428, 0
      %v734 = vsel %vm334, %v429, 0
      %v737 = vsel %vm334, %v430, 0
      %v740 = vsel %vm334, %v431, 0
      %v743 = vsel %vm334, %v432, 0
      %v746 = vsel %vm334, %v433, 0
      %v749 = vsel %vm334, %v434, 0
      %v752 = vsel %vm334, %v435, 0
      %v755 = vsel %vm334, %v436, 0
      %v758 = vsel %vm334, %v437, 0
      %760 = vmatprep.subr.bf16.mxu0 0
      %761 = vmatpush1.bf16.msra.mxu0 %v710
      %762 = vmatprep.subr.bf16.mxu0 0
      %763 = vmatpush1.bf16.msra.mxu0 0
      %764 = vmatprep.subr.bf16.mxu0 0
      %765 = vmatpush1.bf16.msra.mxu0 0
      %766 = vmatprep.subr.bf16.mxu0 0
      %767 = vmatpush1.bf16.msra.mxu0 0
      %768 = vmatprep.subr.bf16.mxu0 0
      %769 = vmatpush1.bf16.msra.mxu0 0
      %770 = vmatprep.subr.bf16.mxu0 0
      %771 = vmatpush1.bf16.msra.mxu0 0
      %772 = vmatprep.subr.bf16.mxu0 0
      %773 = vmatpush1.bf16.msra.mxu0 0
      %774 = vmatprep.subr.bf16.mxu0 0
      %775 = vmatpush1.bf16.msra.mxu0 0
      %776 = vmatprep.subr.bf16.mxu0 0
      %777 = vmatpush1.bf16.msra.mxu0 0
      %778 = vmatprep.subr.bf16.mxu0 0
      %779 = vmatpush1.bf16.msra.mxu0 0
      %780 = vmatprep.subr.bf16.mxu0 0
      %781 = vmatpush1.bf16.msra.mxu0 0
      %782 = vmatprep.subr.bf16.mxu0 0
      %783 = vmatpush1.bf16.msra.mxu0 0
      %784 = vmatprep.subr.bf16.mxu0 0
      %785 = vmatpush1.bf16.msra.mxu0 0
      %786 = vmatprep.subr.bf16.mxu0 0
      %787 = vmatpush1.bf16.msra.mxu0 0
      %788 = vmatprep.subr.bf16.mxu0 0
      %789 = vmatpush1.bf16.msra.mxu0 0
      %790 = vmatprep.subr.bf16.mxu0 0
      %791 = vmatpush1.bf16.msra.mxu0 0
      %792 = vmatprep.mubr.bf16.mxu0 0
      %793 = vmatmul.mubr.bf16.gmra.mrb[0].mxu0 %v713
      %v794 = vpop.f32.mrb[0].mxu0
      %v795 = vadd.f32 %v580, %v794
      %v796 = vpop.f32.mrb[0].mxu0
      %v797 = vpop.f32.mrb[0].mxu0
      %v798 = vadd.f32 %v583, %v797
      %v799 = vpop.f32.mrb[0].mxu0
      %800 = vmatprep.mubr.bf16.mxu0 0
      %801 = vmatmul.mubr.bf16.gmra.mrb[0].mxu0 %v716
      %v802 = vpop.f32.mrb[0].mxu0
      %v803 = vadd.f32 %v588, %v802
      %v804 = vpop.f32.mrb[0].mxu0
      %v805 = vpop.f32.mrb[0].mxu0
      %v806 = vadd.f32 %v591, %v805
      %v807 = vpop.f32.mrb[0].mxu0
      %808 = vmatprep.mubr.bf16.mxu0 0
      %809 = vmatmul.mubr.bf16.gmra.mrb[0].mxu0 %v719
      %v810 = vpop.f32.mrb[0].mxu0
      %v811 = vadd.f32 %v596, %v810
      %v812 = vpop.f32.mrb[0].mxu0
      %v813 = vpop.f32.mrb[0].mxu0
      %v814 = vadd.f32 %v599, %v813
      %v815 = vpop.f32.mrb[0].mxu0
      %816 = vmatprep.mubr.bf16.mxu0 0
      %817 = vmatmul.mubr.bf16.gmra.mrb[0].mxu0 %v722
      %v818 = vpop.f32.mrb[0].mxu0
      %v819 = vadd.f32 %v604, %v818
      %v820 = vpop.f32.mrb[0].mxu0
      %v821 = vpop.f32.mrb[0].mxu0
      %v822 = vadd.f32 %v607, %v821
      %v823 = vpop.f32.mrb[0].mxu0
      %824 = vmatprep.mubr.bf16.mxu0 0
      %825 = vmatmul.mubr.bf16.gmra.mrb[0].mxu0 %v725
      %v826 = vpop.f32.mrb[0].mxu0
      %v827 = vadd.f32 %v612, %v826
      %v828 = vpop.f32.mrb[0].mxu0
      %v829 = vpop.f32.mrb[0].mxu0
      %v830 = vadd.f32 %v615, %v829
      %v831 = vpop.f32.mrb[0].mxu0
      %832 = vmatprep.mubr.bf16.mxu0 0
      %833 = vmatmul.mubr.bf16.gmra.mrb[0].mxu0 %v728
      %v834 = vpop.f32.mrb[0].mxu0
      %v835 = vadd.f32 %v620, %v834
      %v836 = vpop.f32.mrb[0].mxu0
      %v837 = vpop.f32.mrb[0].mxu0
      %v838 = vadd.f32 %v623, %v837
      %v839 = vpop.f32.mrb[0].mxu0
      %840 = vmatprep.mubr.bf16.mxu0 0
      %841 = vmatmul.mubr.bf16.gmra.mrb[0].mxu0 %v731
      %v842 = vpop.f32.mrb[0].mxu0
      %v843 = vadd.f32 %v628, %v842
      %v844 = vpop.f32.mrb[0].mxu0
      %v845 = vpop.f32.mrb[0].mxu0
      %v846 = vadd.f32 %v631, %v845
      %v847 = vpop.f32.mrb[0].mxu0
      %848 = vmatprep.mubr.bf16.mxu0 0
      %849 = vmatmul.mubr.bf16.gmra.mrb[0].mxu0 %v734
      %v850 = vpop.f32.mrb[0].mxu0
      %v851 = vadd.f32 %v636, %v850
      %v852 = vpop.f32.mrb[0].mxu0
      %v853 = vpop.f32.mrb[0].mxu0
      %v854 = vadd.f32 %v639, %v853
      %v855 = vpop.f32.mrb[0].mxu0
      %856 = vmatprep.mubr.bf16.mxu0 0
      %857 = vmatmul.mubr.bf16.gmra.mrb[0].mxu0 %v737
      %v858 = vpop.f32.mrb[0].mxu0
      %v859 = vadd.f32 %v644, %v858
      %v860 = vpop.f32.mrb[0].mxu0
      %v861 = vpop.f32.mrb[0].mxu0
      %v862 = vadd.f32 %v647, %v861
      %v863 = vpop.f32.mrb[0].mxu0
      %864 = vmatprep.mubr.bf16.mxu0 0
      %865 = vmatmul.mubr.bf16.gmra.mrb[0].mxu0 %v740
      %v866 = vpop.f32.mrb[0].mxu0
      %v867 = vadd.f32 %v652, %v866
      %v868 = vpop.f32.mrb[0].mxu0
      %v869 = vpop.f32.mrb[0].mxu0
      %v870 = vadd.f32 %v655, %v869
      %v871 = vpop.f32.mrb[0].mxu0
      %872 = vmatprep.mubr.bf16.mxu0 0
      %873 = vmatmul.mubr.bf16.gmra.mrb[0].mxu0 %v743
      %v874 = vpop.f32.mrb[0].mxu0
      %v875 = vadd.f32 %v660, %v874
      %v876 = vpop.f32.mrb[0].mxu0
      %v877 = vpop.f32.mrb[0].mxu0
      %v878 = vadd.f32 %v663, %v877
      %v879 = vpop.f32.mrb[0].mxu0
      %880 = vmatprep.mubr.bf16.mxu0 0
      %881 = vmatmul.mubr.bf16.gmra.mrb[0].mxu0 %v746
      %v882 = vpop.f32.mrb[0].mxu0
      %v883 = vadd.f32 %v668, %v882
      %v884 = vpop.f32.mrb[0].mxu0
      %v885 = vpop.f32.mrb[0].mxu0
      %v886 = vadd.f32 %v671, %v885
      %v887 = vpop.f32.mrb[0].mxu0
      %888 = vmatprep.mubr.bf16.mxu0 0
      %889 = vmatmul.mubr.bf16.gmra.mrb[0].mxu0 %v749
      %v890 = vpop.f32.mrb[0].mxu0
      %v891 = vadd.f32 %v676, %v890
      %v892 = vpop.f32.mrb[0].mxu0
      %v893 = vpop.f32.mrb[0].mxu0
      %v894 = vadd.f32 %v679, %v893
      %v895 = vpop.f32.mrb[0].mxu0
      %896 = vmatprep.mubr.bf16.mxu0 0
      %897 = vmatmul.mubr.bf16.gmra.mrb[0].mxu0 %v752
      %v898 = vpop.f32.mrb[0].mxu0
      %v899 = vadd.f32 %v684, %v898
      %v900 = vpop.f32.mrb[0].mxu0
      %v901 = vpop.f32.mrb[0].mxu0
      %v902 = vadd.f32 %v687, %v901
      %v903 = vpop.f32.mrb[0].mxu0
      %904 = vmatprep.mubr.bf16.mxu0 0
      %905 = vmatmul.mubr.bf16.gmra.mrb[0].mxu0 %v755
      %v906 = vpop.f32.mrb[0].mxu0
      %v907 = vadd.f32 %v692, %v906
      %v908 = vpop.f32.mrb[0].mxu0
      %v909 = vpop.f32.mrb[0].mxu0
      %v910 = vadd.f32 %v695, %v909
      %v911 = vpop.f32.mrb[0].mxu0
      %912 = vmatprep.mubr.bf16.mxu0 0
      %913 = vmatmul.mubr.bf16.gmra.mrb[0].mxu0 %v758
      %v914 = vpop.f32.mrb[0].mxu0
      %v915 = vadd.f32 %v700, %v914
      %v916 = vpop.f32.mrb[0].mxu0
      %v917 = vpop.f32.mrb[0].mxu0
      %v918 = vadd.f32 %v703, %v917
      %v919 = vpop.f32.mrb[0].mxu0
      %920 = vdwg.mxu0
      %v921 = vld [vmem:[#allocation2 + $0x2] sm:$0xff]
      %v922 = vld [vmem:[#allocation2 + $0xa] sm:$0xff]
      %v923 = vld [vmem:[#allocation2 + $0x1a] sm:$0xff]
      %v924 = vld [vmem:[#allocation2 + $0x22] sm:$0xff]
      %v925 = vld [vmem:[#allocation2 + $0x32] sm:$0xff]
      %v926 = vld [vmem:[#allocation2 + $0x3a] sm:$0xff]
      %v927 = vld [vmem:[#allocation2 + $0x4a] sm:$0xff]
      %v928 = vld [vmem:[#allocation2 + $0x52] sm:$0xff]
      %v929 = vld [vmem:[#allocation2 + $0x62] sm:$0xff]
      %v930 = vld [vmem:[#allocation2 + $0x6a] sm:$0xff]
      %v931 = vld [vmem:[#allocation2 + $0x7a] sm:$0xff]
      %v932 = vld [vmem:[#allocation2 + $0x82] sm:$0xff]
      %v933 = vld [vmem:[#allocation2 + $0x92] sm:$0xff]
      %v934 = vld [vmem:[#allocation2 + $0x9a] sm:$0xff]
      %v935 = vld [vmem:[#allocation2 + $0xaa] sm:$0xff]
      %v936 = vld [vmem:[#allocation2 + $0xb2] sm:$0xff]
      %v937 = vld [vmem:[#allocation2 + $0xc2] sm:$0xff]
      %v938 = vld [vmem:[#allocation2 + $0xca] sm:$0xff]
      %v939 = vld [vmem:[#allocation2 + $0xda] sm:$0xff]
      %v940 = vld [vmem:[#allocation2 + $0xe2] sm:$0xff]
      %v941 = vld [vmem:[#allocation2 + $0xf2] sm:$0xff]
      %v942 = vld [vmem:[#allocation2 + $0xfa] sm:$0xff]
      %v943 = vld [vmem:[#allocation2 + $0x10a] sm:$0xff]
      %v944 = vld [vmem:[#allocation2 + $0x112] sm:$0xff]
      %v945 = vld [vmem:[#allocation2 + $0x122] sm:$0xff]
      %v946 = vld [vmem:[#allocation2 + $0x12a] sm:$0xff]
      %v947 = vld [vmem:[#allocation2 + $0x13a] sm:$0xff]
      %v948 = vld [vmem:[#allocation2 + $0x142] sm:$0xff]
      %v949 = vld [vmem:[#allocation2 + $0x152] sm:$0xff]
      %v950 = vld [vmem:[#allocation2 + $0x15a] sm:$0xff]
      %v951 = vld [vmem:[#allocation2 + $0x16a] sm:$0xff]
      %v952 = vld [vmem:[#allocation2 + $0x172] sm:$0xff]
      %v953 = vpack.c.bf16 %v922, %v921
      %v954 = vpack.c.bf16 %v924, %v923
      %v955 = vpack.c.bf16 %v926, %v925
      %v956 = vpack.c.bf16 %v928, %v927
      %v957 = vpack.c.bf16 %v930, %v929
      %v958 = vpack.c.bf16 %v932, %v931
      %v959 = vpack.c.bf16 %v934, %v933
      %v960 = vpack.c.bf16 %v936, %v935
      %v961 = vpack.c.bf16 %v938, %v937
      %v962 = vpack.c.bf16 %v940, %v939
      %v963 = vpack.c.bf16 %v942, %v941
      %v964 = vpack.c.bf16 %v944, %v943
      %v965 = vpack.c.bf16 %v946, %v945
      %v966 = vpack.c.bf16 %v948, %v947
      %v967 = vpack.c.bf16 %v950, %v949
      %v968 = vpack.c.bf16 %v952, %v951
      %s969 = scalar_lea.vmem %s1, 16
      %v970 = vld [vmem:[%s969] sm:$0xf]
      %v971 = vld [vmem:[%s969 + $0x4] sm:$0xf]
      %v974 = vunpack.c.l.b16 %v970
      %v975 = vunpack.c.l.b16 %v971
      %v976 = vpack.c.b16 %v975, %v974
      %v979 = vsel %vm334, %v953, 0
      %v982 = vsel %vm334, %v954, 0
      %v985 = vsel %vm334, %v955, 0
      %v988 = vsel %vm334, %v956, 0
      %v991 = vsel %vm334, %v957, 0
      %v994 = vsel %vm334, %v958, 0
      %v997 = vsel %vm334, %v959, 0
      %v1000 = vsel %vm334, %v960, 0
      %v1003 = vsel %vm334, %v961, 0
      %v1006 = vsel %vm334, %v962, 0
      %v1009 = vsel %vm334, %v963, 0
      %v1012 = vsel %vm334, %v964, 0
      %v1015 = vsel %vm334, %v965, 0
      %v1018 = vsel %vm334, %v966, 0
      %v1021 = vsel %vm334, %v967, 0
      %v1024 = vsel %vm334, %v968, 0
      %1026 = vmatprep.subr.bf16.mxu0 0
      %1027 = vmatpush1.bf16.msra.mxu0 %v976
      %1028 = vmatprep.subr.bf16.mxu0 0
      %1029 = vmatpush1.bf16.msra.mxu0 0
      %1030 = vmatprep.subr.bf16.mxu0 0
      %1031 = vmatpush1.bf16.msra.mxu0 0
      %1032 = vmatprep.subr.bf16.mxu0 0
      %1033 = vmatpush1.bf16.msra.mxu0 0
      %1034 = vmatprep.subr.bf16.mxu0 0
      %1035 = vmatpush1.bf16.msra.mxu0 0
      %1036 = vmatprep.subr.bf16.mxu0 0
      %1037 = vmatpush1.bf16.msra.mxu0 0
      %1038 = vmatprep.subr.bf16.mxu0 0
      %1039 = vmatpush1.bf16.msra.mxu0 0
      %1040 = vmatprep.subr.bf16.mxu0 0
      %1041 = vmatpush1.bf16.msra.mxu0 0
      %1042 = vmatprep.subr.bf16.mxu0 0
      %1043 = vmatpush1.bf16.msra.mxu0 0
      %1044 = vmatprep.subr.bf16.mxu0 0
      %1045 = vmatpush1.bf16.msra.mxu0 0
      %1046 = vmatprep.subr.bf16.mxu0 0
      %1047 = vmatpush1.bf16.msra.mxu0 0
      %1048 = vmatprep.subr.bf16.mxu0 0
      %1049 = vmatpush1.bf16.msra.mxu0 0
      %1050 = vmatprep.subr.bf16.mxu0 0
      %1051 = vmatpush1.bf16.msra.mxu0 0
      %1052 = vmatprep.subr.bf16.mxu0 0
      %1053 = vmatpush1.bf16.msra.mxu0 0
      %1054 = vmatprep.subr.bf16.mxu0 0
      %1055 = vmatpush1.bf16.msra.mxu0 0
      %1056 = vmatprep.subr.bf16.mxu0 0
      %1057 = vmatpush1.bf16.msra.mxu0 0
      %1058 = vmatprep.mubr.bf16.mxu0 0
      %1059 = vmatmul.mubr.bf16.gmra.mrb[0].mxu0 %v979
      %v1060 = vpop.f32.mrb[0].mxu0
      %v1061 = vadd.f32 0.0, %v1060
      %v1062 = vpop.f32.mrb[0].mxu0
      %v1063 = vpop.f32.mrb[0].mxu0
      %v1064 = vadd.f32 0.0, %v1063
      %v1065 = vpop.f32.mrb[0].mxu0
      %1066 = vmatprep.mubr.bf16.mxu0 0
      %1067 = vmatmul.mubr.bf16.gmra.mrb[0].mxu0 %v982
      %v1068 = vpop.f32.mrb[0].mxu0
      %v1069 = vadd.f32 0.0, %v1068
      %v1070 = vpop.f32.mrb[0].mxu0
      %v1071 = vpop.f32.mrb[0].mxu0
      %v1072 = vadd.f32 0.0, %v1071
      %v1073 = vpop.f32.mrb[0].mxu0
      %1074 = vmatprep.mubr.bf16.mxu0 0
      %1075 = vmatmul.mubr.bf16.gmra.mrb[0].mxu0 %v985
      %v1076 = vpop.f32.mrb[0].mxu0
      %v1077 = vadd.f32 0.0, %v1076
      %v1078 = vpop.f32.mrb[0].mxu0
      %v1079 = vpop.f32.mrb[0].mxu0
      %v1080 = vadd.f32 0.0, %v1079
      %v1081 = vpop.f32.mrb[0].mxu0
      %1082 = vmatprep.mubr.bf16.mxu0 0
      %1083 = vmatmul.mubr.bf16.gmra.mrb[0].mxu0 %v988
      %v1084 = vpop.f32.mrb[0].mxu0
      %v1085 = vadd.f32 0.0, %v1084
      %v1086 = vpop.f32.mrb[0].mxu0
      %v1087 = vpop.f32.mrb[0].mxu0
      %v1088 = vadd.f32 0.0, %v1087
      %v1089 = vpop.f32.mrb[0].mxu0
      %1090 = vmatprep.mubr.bf16.mxu0 0
      %1091 = vmatmul.mubr.bf16.gmra.mrb[0].mxu0 %v991
      %v1092 = vpop.f32.mrb[0].mxu0
      %v1093 = vadd.f32 0.0, %v1092
      %v1094 = vpop.f32.mrb[0].mxu0
      %v1095 = vpop.f32.mrb[0].mxu0
      %v1096 = vadd.f32 0.0, %v1095
      %v1097 = vpop.f32.mrb[0].mxu0
      %1098 = vmatprep.mubr.bf16.mxu0 0
      %1099 = vmatmul.mubr.bf16.gmra.mrb[0].mxu0 %v994
      %v1100 = vpop.f32.mrb[0].mxu0
      %v1101 = vadd.f32 0.0, %v1100
      %v1102 = vpop.f32.mrb[0].mxu0
      %v1103 = vpop.f32.mrb[0].mxu0
      %v1104 = vadd.f32 0.0, %v1103
      %v1105 = vpop.f32.mrb[0].mxu0
      %1106 = vmatprep.mubr.bf16.mxu0 0
      %1107 = vmatmul.mubr.bf16.gmra.mrb[0].mxu0 %v997
      %v1108 = vpop.f32.mrb[0].mxu0
      %v1109 = vadd.f32 0.0, %v1108
      %v1110 = vpop.f32.mrb[0].mxu0
      %v1111 = vpop.f32.mrb[0].mxu0
      %v1112 = vadd.f32 0.0, %v1111
      %v1113 = vpop.f32.mrb[0].mxu0
      %1114 = vmatprep.mubr.bf16.mxu0 0
      %1115 = vmatmul.mubr.bf16.gmra.mrb[0].mxu0 %v1000
      %v1116 = vpop.f32.mrb[0].mxu0
      %v1117 = vadd.f32 0.0, %v1116
      %v1118 = vpop.f32.mrb[0].mxu0
      %v1119 = vpop.f32.mrb[0].mxu0
      %v1120 = vadd.f32 0.0, %v1119
      %v1121 = vpop.f32.mrb[0].mxu0
      %1122 = vmatprep.mubr.bf16.mxu0 0
      %1123 = vmatmul.mubr.bf16.gmra.mrb[0].mxu0 %v1003
      %v1124 = vpop.f32.mrb[0].mxu0
      %v1125 = vadd.f32 0.0, %v1124
      %v1126 = vpop.f32.mrb[0].mxu0
      %v1127 = vpop.f32.mrb[0].mxu0
      %v1128 = vadd.f32 0.0, %v1127
      %v1129 = vpop.f32.mrb[0].mxu0
      %1130 = vmatprep.mubr.bf16.mxu0 0
      %1131 = vmatmul.mubr.bf16.gmra.mrb[0].mxu0 %v1006
      %v1132 = vpop.f32.mrb[0].mxu0
      %v1133 = vadd.f32 0.0, %v1132
      %v1134 = vpop.f32.mrb[0].mxu0
      %v1135 = vpop.f32.mrb[0].mxu0
      %v1136 = vadd.f32 0.0, %v1135
      %v1137 = vpop.f32.mrb[0].mxu0
      %1138 = vmatprep.mubr.bf16.mxu0 0
      %1139 = vmatmul.mubr.bf16.gmra.mrb[0].mxu0 %v1009
      %v1140 = vpop.f32.mrb[0].mxu0
      %v1141 = vadd.f32 0.0, %v1140
      %v1142 = vpop.f32.mrb[0].mxu0
      %v1143 = vpop.f32.mrb[0].mxu0
      %v1144 = vadd.f32 0.0, %v1143
      %v1145 = vpop.f32.mrb[0].mxu0
      %1146 = vmatprep.mubr.bf16.mxu0 0
      %1147 = vmatmul.mubr.bf16.gmra.mrb[0].mxu0 %v1012
      %v1148 = vpop.f32.mrb[0].mxu0
      %v1149 = vadd.f32 0.0, %v1148
      %v1150 = vpop.f32.mrb[0].mxu0
      %v1151 = vpop.f32.mrb[0].mxu0
      %v1152 = vadd.f32 0.0, %v1151
      %v1153 = vpop.f32.mrb[0].mxu0
      %1154 = vmatprep.mubr.bf16.mxu0 0
      %1155 = vmatmul.mubr.bf16.gmra.mrb[0].mxu0 %v1015
      %v1156 = vpop.f32.mrb[0].mxu0
      %v1157 = vadd.f32 0.0, %v1156
      %v1158 = vpop.f32.mrb[0].mxu0
      %v1159 = vpop.f32.mrb[0].mxu0
      %v1160 = vadd.f32 0.0, %v1159
      %v1161 = vpop.f32.mrb[0].mxu0
      %1162 = vmatprep.mubr.bf16.mxu0 0
      %1163 = vmatmul.mubr.bf16.gmra.mrb[0].mxu0 %v1018
      %v1164 = vpop.f32.mrb[0].mxu0
      %v1165 = vadd.f32 0.0, %v1164
      %v1166 = vpop.f32.mrb[0].mxu0
      %v1167 = vpop.f32.mrb[0].mxu0
      %v1168 = vadd.f32 0.0, %v1167
      %v1169 = vpop.f32.mrb[0].mxu0
      %1170 = vmatprep.mubr.bf16.mxu0 0
      %1171 = vmatmul.mubr.bf16.gmra.mrb[0].mxu0 %v1021
      %v1172 = vpop.f32.mrb[0].mxu0
      %v1173 = vadd.f32 0.0, %v1172
      %v1174 = vpop.f32.mrb[0].mxu0
      %v1175 = vpop.f32.mrb[0].mxu0
      %v1176 = vadd.f32 0.0, %v1175
      %v1177 = vpop.f32.mrb[0].mxu0
      %1178 = vmatprep.mubr.bf16.mxu0 0
      %1179 = vmatmul.mubr.bf16.gmra.mrb[0].mxu0 %v1024
      %v1180 = vpop.f32.mrb[0].mxu0
      %v1181 = vadd.f32 0.0, %v1180
      %v1182 = vpop.f32.mrb[0].mxu0
      %v1183 = vpop.f32.mrb[0].mxu0
      %v1184 = vadd.f32 0.0, %v1183
      %v1185 = vpop.f32.mrb[0].mxu0
      %1186 = vdwg.mxu0
      %v1187 = vadd.f32 %v795, %v1061
      %v1188 = vadd.f32 %v798, %v1064
      %v1189 = vadd.f32 %v803, %v1069
      %v1190 = vadd.f32 %v806, %v1072
      %v1191 = vadd.f32 %v811, %v1077
      %v1192 = vadd.f32 %v814, %v1080
      %v1193 = vadd.f32 %v819, %v1085
      %v1194 = vadd.f32 %v822, %v1088
      %v1195 = vadd.f32 %v827, %v1093
      %v1196 = vadd.f32 %v830, %v1096
      %v1197 = vadd.f32 %v835, %v1101
      %v1198 = vadd.f32 %v838, %v1104
      %v1199 = vadd.f32 %v843, %v1109
      %v1200 = vadd.f32 %v846, %v1112
      %v1201 = vadd.f32 %v851, %v1117
      %v1202 = vadd.f32 %v854, %v1120
      %v1203 = vadd.f32 %v859, %v1125
      %v1204 = vadd.f32 %v862, %v1128
      %v1205 = vadd.f32 %v867, %v1133
      %v1206 = vadd.f32 %v870, %v1136
      %v1207 = vadd.f32 %v875, %v1141
      %v1208 = vadd.f32 %v878, %v1144
      %v1209 = vadd.f32 %v883, %v1149
      %v1210 = vadd.f32 %v886, %v1152
      %v1211 = vadd.f32 %v891, %v1157
      %v1212 = vadd.f32 %v894, %v1160
      %v1213 = vadd.f32 %v899, %v1165
      %v1214 = vadd.f32 %v902, %v1168
      %v1215 = vadd.f32 %v907, %v1173
      %v1216 = vadd.f32 %v910, %v1176
      %v1217 = vadd.f32 %v915, %v1181
      %v1218 = vadd.f32 %v918, %v1184
      %s1219 = scalar_lea.vmem [#allocation2], 24
      %v1220 = vld [vmem:[%s1219] sm:$0xff]
      %v1221 = vld [vmem:[%s1219 + $0x8] sm:$0xff]
      %v1222 = vld [vmem:[%s1219 + $0x18] sm:$0xff]
      %v1223 = vld [vmem:[%s1219 + $0x20] sm:$0xff]
      %v1224 = vld [vmem:[%s1219 + $0x30] sm:$0xff]
      %v1225 = vld [vmem:[%s1219 + $0x38] sm:$0xff]
      %v1226 = vld [vmem:[%s1219 + $0x48] sm:$0xff]
      %v1227 = vld [vmem:[%s1219 + $0x50] sm:$0xff]
      %v1228 = vld [vmem:[%s1219 + $0x60] sm:$0xff]
      %v1229 = vld [vmem:[%s1219 + $0x68] sm:$0xff]
      %v1230 = vld [vmem:[%s1219 + $0x78] sm:$0xff]
      %v1231 = vld [vmem:[%s1219 + $0x80] sm:$0xff]
      %v1232 = vld [vmem:[%s1219 + $0x90] sm:$0xff]
      %v1233 = vld [vmem:[%s1219 + $0x98] sm:$0xff]
      %v1234 = vld [vmem:[%s1219 + $0xa8] sm:$0xff]
      %v1235 = vld [vmem:[%s1219 + $0xb0] sm:$0xff]
      %v1236 = vld [vmem:[%s1219 + $0xc0] sm:$0xff]
      %v1237 = vld [vmem:[%s1219 + $0xc8] sm:$0xff]
      %v1238 = vld [vmem:[%s1219 + $0xd8] sm:$0xff]
      %v1239 = vld [vmem:[%s1219 + $0xe0] sm:$0xff]
      %v1240 = vld [vmem:[%s1219 + $0xf0] sm:$0xff]
      %v1241 = vld [vmem:[%s1219 + $0xf8] sm:$0xff]
      %v1242 = vld [vmem:[%s1219 + $0x108] sm:$0xff]
      %v1243 = vld [vmem:[%s1219 + $0x110] sm:$0xff]
      %v1244 = vld [vmem:[%s1219 + $0x120] sm:$0xff]
      %v1245 = vld [vmem:[%s1219 + $0x128] sm:$0xff]
      %v1246 = vld [vmem:[%s1219 + $0x138] sm:$0xff]
      %v1247 = vld [vmem:[%s1219 + $0x140] sm:$0xff]
      %v1248 = vld [vmem:[%s1219 + $0x150] sm:$0xff]
      %v1249 = vld [vmem:[%s1219 + $0x158] sm:$0xff]
      %v1250 = vld [vmem:[%s1219 + $0x168] sm:$0xff]
      %v1251 = vld [vmem:[%s1219 + $0x170] sm:$0xff]
      %v1252 = vpack.c.bf16 %v1221, %v1220
      %v1253 = vpack.c.bf16 %v1223, %v1222
      %v1254 = vpack.c.bf16 %v1225, %v1224
      %v1255 = vpack.c.bf16 %v1227, %v1226
      %v1256 = vpack.c.bf16 %v1229, %v1228
      %v1257 = vpack.c.bf16 %v1231, %v1230
      %v1258 = vpack.c.bf16 %v1233, %v1232
      %v1259 = vpack.c.bf16 %v1235, %v1234
      %v1260 = vpack.c.bf16 %v1237, %v1236
      %v1261 = vpack.c.bf16 %v1239, %v1238
      %v1262 = vpack.c.bf16 %v1241, %v1240
      %v1263 = vpack.c.bf16 %v1243, %v1242
      %v1264 = vpack.c.bf16 %v1245, %v1244
      %v1265 = vpack.c.bf16 %v1247, %v1246
      %v1266 = vpack.c.bf16 %v1249, %v1248
      %v1267 = vpack.c.bf16 %v1251, %v1250
      %s1268 = scalar_lea.vmem %s1, 24
      %v1269 = vld [vmem:[%s1268] sm:$0xf]
      %v1270 = vld [vmem:[%s1268 + $0x4] sm:$0xf]
      %v1273 = vunpack.c.l.b16 %v1269
      %v1274 = vunpack.c.l.b16 %v1270
      %v1275 = vpack.c.b16 %v1274, %v1273
      %v1278 = vsel %vm334, %v1252, 0
      %v1281 = vsel %vm334, %v1253, 0
      %v1284 = vsel %vm334, %v1254, 0
      %v1287 = vsel %vm334, %v1255, 0
      %v1290 = vsel %vm334, %v1256, 0
      %v1293 = vsel %vm334, %v1257, 0
      %v1296 = vsel %vm334, %v1258, 0
      %v1299 = vsel %vm334, %v1259, 0
      %v1302 = vsel %vm334, %v1260, 0
      %v1305 = vsel %vm334, %v1261, 0
      %v1308 = vsel %vm334, %v1262, 0
      %v1311 = vsel %vm334, %v1263, 0
      %v1314 = vsel %vm334, %v1264, 0
      %v1317 = vsel %vm334, %v1265, 0
      %v1320 = vsel %vm334, %v1266, 0
      %v1323 = vsel %vm334, %v1267, 0
      %1325 = vmatprep.subr.bf16.mxu0 0
      %1326 = vmatpush1.bf16.msra.mxu0 %v1275
      %1327 = vmatprep.subr.bf16.mxu0 0
      %1328 = vmatpush1.bf16.msra.mxu0 0
      %1329 = vmatprep.subr.bf16.mxu0 0
      %1330 = vmatpush1.bf16.msra.mxu0 0
      %1331 = vmatprep.subr.bf16.mxu0 0
      %1332 = vmatpush1.bf16.msra.mxu0 0
      %1333 = vmatprep.subr.bf16.mxu0 0
      %1334 = vmatpush1.bf16.msra.mxu0 0
      %1335 = vmatprep.subr.bf16.mxu0 0
      %1336 = vmatpush1.bf16.msra.mxu0 0
      %1337 = vmatprep.subr.bf16.mxu0 0
      %1338 = vmatpush1.bf16.msra.mxu0 0
      %1339 = vmatprep.subr.bf16.mxu0 0
      %1340 = vmatpush1.bf16.msra.mxu0 0
      %1341 = vmatprep.subr.bf16.mxu0 0
      %1342 = vmatpush1.bf16.msra.mxu0 0
      %1343 = vmatprep.subr.bf16.mxu0 0
      %1344 = vmatpush1.bf16.msra.mxu0 0
      %1345 = vmatprep.subr.bf16.mxu0 0
      %1346 = vmatpush1.bf16.msra.mxu0 0
      %1347 = vmatprep.subr.bf16.mxu0 0
      %1348 = vmatpush1.bf16.msra.mxu0 0
      %1349 = vmatprep.subr.bf16.mxu0 0
      %1350 = vmatpush1.bf16.msra.mxu0 0
      %1351 = vmatprep.subr.bf16.mxu0 0
      %1352 = vmatpush1.bf16.msra.mxu0 0
      %1353 = vmatprep.subr.bf16.mxu0 0
      %1354 = vmatpush1.bf16.msra.mxu0 0
      %1355 = vmatprep.subr.bf16.mxu0 0
      %1356 = vmatpush1.bf16.msra.mxu0 0
      %1357 = vmatprep.mubr.bf16.mxu0 0
      %1358 = vmatmul.mubr.bf16.gmra.mrb[0].mxu0 %v1278
      %v1359 = vpop.f32.mrb[0].mxu0
      %v1360 = vadd.f32 0.0, %v1359
      %v1361 = vpop.f32.mrb[0].mxu0
      %v1362 = vpop.f32.mrb[0].mxu0
      %v1363 = vadd.f32 0.0, %v1362
      %v1364 = vpop.f32.mrb[0].mxu0
      %1365 = vmatprep.mubr.bf16.mxu0 0
      %1366 = vmatmul.mubr.bf16.gmra.mrb[0].mxu0 %v1281
      %v1367 = vpop.f32.mrb[0].mxu0
      %v1368 = vadd.f32 0.0, %v1367
      %v1369 = vpop.f32.mrb[0].mxu0
      %v1370 = vpop.f32.mrb[0].mxu0
      %v1371 = vadd.f32 0.0, %v1370
      %v1372 = vpop.f32.mrb[0].mxu0
      %1373 = vmatprep.mubr.bf16.mxu0 0
      %1374 = vmatmul.mubr.bf16.gmra.mrb[0].mxu0 %v1284
      %v1375 = vpop.f32.mrb[0].mxu0
      %v1376 = vadd.f32 0.0, %v1375
      %v1377 = vpop.f32.mrb[0].mxu0
      %v1378 = vpop.f32.mrb[0].mxu0
      %v1379 = vadd.f32 0.0, %v1378
      %v1380 = vpop.f32.mrb[0].mxu0
      %1381 = vmatprep.mubr.bf16.mxu0 0
      %1382 = vmatmul.mubr.bf16.gmra.mrb[0].mxu0 %v1287
      %v1383 = vpop.f32.mrb[0].mxu0
      %v1384 = vadd.f32 0.0, %v1383
      %v1385 = vpop.f32.mrb[0].mxu0
      %v1386 = vpop.f32.mrb[0].mxu0
      %v1387 = vadd.f32 0.0, %v1386
      %v1388 = vpop.f32.mrb[0].mxu0
      %1389 = vmatprep.mubr.bf16.mxu0 0
      %1390 = vmatmul.mubr.bf16.gmra.mrb[0].mxu0 %v1290
      %v1391 = vpop.f32.mrb[0].mxu0
      %v1392 = vadd.f32 0.0, %v1391
      %v1393 = vpop.f32.mrb[0].mxu0
      %v1394 = vpop.f32.mrb[0].mxu0
      %v1395 = vadd.f32 0.0, %v1394
      %v1396 = vpop.f32.mrb[0].mxu0
      %1397 = vmatprep.mubr.bf16.mxu0 0
      %1398 = vmatmul.mubr.bf16.gmra.mrb[0].mxu0 %v1293
      %v1399 = vpop.f32.mrb[0].mxu0
      %v1400 = vadd.f32 0.0, %v1399
      %v1401 = vpop.f32.mrb[0].mxu0
      %v1402 = vpop.f32.mrb[0].mxu0
      %v1403 = vadd.f32 0.0, %v1402
      %v1404 = vpop.f32.mrb[0].mxu0
      %1405 = vmatprep.mubr.bf16.mxu0 0
      %1406 = vmatmul.mubr.bf16.gmra.mrb[0].mxu0 %v1296
      %v1407 = vpop.f32.mrb[0].mxu0
      %v1408 = vadd.f32 0.0, %v1407
      %v1409 = vpop.f32.mrb[0].mxu0
      %v1410 = vpop.f32.mrb[0].mxu0
      %v1411 = vadd.f32 0.0, %v1410
      %v1412 = vpop.f32.mrb[0].mxu0
      %1413 = vmatprep.mubr.bf16.mxu0 0
      %1414 = vmatmul.mubr.bf16.gmra.mrb[0].mxu0 %v1299
      %v1415 = vpop.f32.mrb[0].mxu0
      %v1416 = vadd.f32 0.0, %v1415
      %v1417 = vpop.f32.mrb[0].mxu0
      %v1418 = vpop.f32.mrb[0].mxu0
      %v1419 = vadd.f32 0.0, %v1418
      %v1420 = vpop.f32.mrb[0].mxu0
      %1421 = vmatprep.mubr.bf16.mxu0 0
      %1422 = vmatmul.mubr.bf16.gmra.mrb[0].mxu0 %v1302
      %v1423 = vpop.f32.mrb[0].mxu0
      %v1424 = vadd.f32 0.0, %v1423
      %v1425 = vpop.f32.mrb[0].mxu0
      %v1426 = vpop.f32.mrb[0].mxu0
      %v1427 = vadd.f32 0.0, %v1426
      %v1428 = vpop.f32.mrb[0].mxu0
      %1429 = vmatprep.mubr.bf16.mxu0 0
      %1430 = vmatmul.mubr.bf16.gmra.mrb[0].mxu0 %v1305
      %v1431 = vpop.f32.mrb[0].mxu0
      %v1432 = vadd.f32 0.0, %v1431
      %v1433 = vpop.f32.mrb[0].mxu0
      %v1434 = vpop.f32.mrb[0].mxu0
      %v1435 = vadd.f32 0.0, %v1434
      %v1436 = vpop.f32.mrb[0].mxu0
      %1437 = vmatprep.mubr.bf16.mxu0 0
      %1438 = vmatmul.mubr.bf16.gmra.mrb[0].mxu0 %v1308
      %v1439 = vpop.f32.mrb[0].mxu0
      %v1440 = vadd.f32 0.0, %v1439
      %v1441 = vpop.f32.mrb[0].mxu0
      %v1442 = vpop.f32.mrb[0].mxu0
      %v1443 = vadd.f32 0.0, %v1442
      %v1444 = vpop.f32.mrb[0].mxu0
      %1445 = vmatprep.mubr.bf16.mxu0 0
      %1446 = vmatmul.mubr.bf16.gmra.mrb[0].mxu0 %v1311
      %v1447 = vpop.f32.mrb[0].mxu0
      %v1448 = vadd.f32 0.0, %v1447
      %v1449 = vpop.f32.mrb[0].mxu0
      %v1450 = vpop.f32.mrb[0].mxu0
      %v1451 = vadd.f32 0.0, %v1450
      %v1452 = vpop.f32.mrb[0].mxu0
      %1453 = vmatprep.mubr.bf16.mxu0 0
      %1454 = vmatmul.mubr.bf16.gmra.mrb[0].mxu0 %v1314
      %v1455 = vpop.f32.mrb[0].mxu0
      %v1456 = vadd.f32 0.0, %v1455
      %v1457 = vpop.f32.mrb[0].mxu0
      %v1458 = vpop.f32.mrb[0].mxu0
      %v1459 = vadd.f32 0.0, %v1458
      %v1460 = vpop.f32.mrb[0].mxu0
      %1461 = vmatprep.mubr.bf16.mxu0 0
      %1462 = vmatmul.mubr.bf16.gmra.mrb[0].mxu0 %v1317
      %v1463 = vpop.f32.mrb[0].mxu0
      %v1464 = vadd.f32 0.0, %v1463
      %v1465 = vpop.f32.mrb[0].mxu0
      %v1466 = vpop.f32.mrb[0].mxu0
      %v1467 = vadd.f32 0.0, %v1466
      %v1468 = vpop.f32.mrb[0].mxu0
      %1469 = vmatprep.mubr.bf16.mxu0 0
      %1470 = vmatmul.mubr.bf16.gmra.mrb[0].mxu0 %v1320
      %v1471 = vpop.f32.mrb[0].mxu0
      %v1472 = vadd.f32 0.0, %v1471
      %v1473 = vpop.f32.mrb[0].mxu0
      %v1474 = vpop.f32.mrb[0].mxu0
      %v1475 = vadd.f32 0.0, %v1474
      %v1476 = vpop.f32.mrb[0].mxu0
      %1477 = vmatprep.mubr.bf16.mxu0 0
      %1478 = vmatmul.mubr.bf16.gmra.mrb[0].mxu0 %v1323
      %v1479 = vpop.f32.mrb[0].mxu0
      %v1480 = vadd.f32 0.0, %v1479
      %v1481 = vpop.f32.mrb[0].mxu0
      %v1482 = vpop.f32.mrb[0].mxu0
      %v1483 = vadd.f32 0.0, %v1482
      %v1484 = vpop.f32.mrb[0].mxu0
      %1485 = vdwg.mxu0
      %v1486 = vadd.f32 %v1187, %v1360
      %v1487 = vadd.f32 %v1188, %v1363
      %v1488 = vadd.f32 %v1189, %v1368
      %v1489 = vadd.f32 %v1190, %v1371
      %v1490 = vadd.f32 %v1191, %v1376
      %v1491 = vadd.f32 %v1192, %v1379
      %v1492 = vadd.f32 %v1193, %v1384
      %v1493 = vadd.f32 %v1194, %v1387
      %v1494 = vadd.f32 %v1195, %v1392
      %v1495 = vadd.f32 %v1196, %v1395
      %v1496 = vadd.f32 %v1197, %v1400
      %v1497 = vadd.f32 %v1198, %v1403
      %v1498 = vadd.f32 %v1199, %v1408
      %v1499 = vadd.f32 %v1200, %v1411
      %v1500 = vadd.f32 %v1201, %v1416
      %v1501 = vadd.f32 %v1202, %v1419
      %v1502 = vadd.f32 %v1203, %v1424
      %v1503 = vadd.f32 %v1204, %v1427
      %v1504 = vadd.f32 %v1205, %v1432
      %v1505 = vadd.f32 %v1206, %v1435
      %v1506 = vadd.f32 %v1207, %v1440
      %v1507 = vadd.f32 %v1208, %v1443
      %v1508 = vadd.f32 %v1209, %v1448
      %v1509 = vadd.f32 %v1210, %v1451
      %v1510 = vadd.f32 %v1211, %v1456
      %v1511 = vadd.f32 %v1212, %v1459
      %v1512 = vadd.f32 %v1213, %v1464
      %v1513 = vadd.f32 %v1214, %v1467
      %v1514 = vadd.f32 %v1215, %v1472
      %v1515 = vadd.f32 %v1216, %v1475
      %v1516 = vadd.f32 %v1217, %v1480
      %v1517 = vadd.f32 %v1218, %v1483
      %v1518 = vld [vmem:[%s1219 + $0x1] sm:$0xff]
      %v1519 = vld [vmem:[%s1219 + $0x9] sm:$0xff]
      %v1520 = vld [vmem:[%s1219 + $0x19] sm:$0xff]
      %v1521 = vld [vmem:[%s1219 + $0x21] sm:$0xff]
      %v1522 = vld [vmem:[%s1219 + $0x31] sm:$0xff]
      %v1523 = vld [vmem:[%s1219 + $0x39] sm:$0xff]
      %v1524 = vld [vmem:[%s1219 + $0x49] sm:$0xff]
      %v1525 = vld [vmem:[%s1219 + $0x51] sm:$0xff]
      %v1526 = vld [vmem:[%s1219 + $0x61] sm:$0xff]
      %v1527 = vld [vmem:[%s1219 + $0x69] sm:$0xff]
      %v1528 = vld [vmem:[%s1219 + $0x79] sm:$0xff]
      %v1529 = vld [vmem:[%s1219 + $0x81] sm:$0xff]
      %v1530 = vld [vmem:[%s1219 + $0x91] sm:$0xff]
      %v1531 = vld [vmem:[%s1219 + $0x99] sm:$0xff]
      %v1532 = vld [vmem:[%s1219 + $0xa9] sm:$0xff]
      %v1533 = vld [vmem:[%s1219 + $0xb1] sm:$0xff]
      %v1534 = vld [vmem:[%s1219 + $0xc1] sm:$0xff]
      %v1535 = vld [vmem:[%s1219 + $0xc9] sm:$0xff]
      %v1536 = vld [vmem:[%s1219 + $0xd9] sm:$0xff]
      %v1537 = vld [vmem:[%s1219 + $0xe1] sm:$0xff]
      %v1538 = vld [vmem:[%s1219 + $0xf1] sm:$0xff]
      %v1539 = vld [vmem:[%s1219 + $0xf9] sm:$0xff]
      %v1540 = vld [vmem:[%s1219 + $0x109] sm:$0xff]
      %v1541 = vld [vmem:[%s1219 + $0x111] sm:$0xff]
      %v1542 = vld [vmem:[%s1219 + $0x121] sm:$0xff]
      %v1543 = vld [vmem:[%s1219 + $0x129] sm:$0xff]
      %v1544 = vld [vmem:[%s1219 + $0x139] sm:$0xff]
      %v1545 = vld [vmem:[%s1219 + $0x141] sm:$0xff]
      %v1546 = vld [vmem:[%s1219 + $0x151] sm:$0xff]
      %v1547 = vld [vmem:[%s1219 + $0x159] sm:$0xff]
      %v1548 = vld [vmem:[%s1219 + $0x169] sm:$0xff]
      %v1549 = vld [vmem:[%s1219 + $0x171] sm:$0xff]
      %v1550 = vpack.c.bf16 %v1519, %v1518
      %v1551 = vpack.c.bf16 %v1521, %v1520
      %v1552 = vpack.c.bf16 %v1523, %v1522
      %v1553 = vpack.c.bf16 %v1525, %v1524
      %v1554 = vpack.c.bf16 %v1527, %v1526
      %v1555 = vpack.c.bf16 %v1529, %v1528
      %v1556 = vpack.c.bf16 %v1531, %v1530
      %v1557 = vpack.c.bf16 %v1533, %v1532
      %v1558 = vpack.c.bf16 %v1535, %v1534
      %v1559 = vpack.c.bf16 %v1537, %v1536
      %v1560 = vpack.c.bf16 %v1539, %v1538
      %v1561 = vpack.c.bf16 %v1541, %v1540
      %v1562 = vpack.c.bf16 %v1543, %v1542
      %v1563 = vpack.c.bf16 %v1545, %v1544
      %v1564 = vpack.c.bf16 %v1547, %v1546
      %v1565 = vpack.c.bf16 %v1549, %v1548
      %s1566 = scalar_lea.vmem %s1, 32
      %v1567 = vld [vmem:[%s1566] sm:$0xf]
      %v1568 = vld [vmem:[%s1566 + $0x4] sm:$0xf]
      %v1571 = vunpack.c.l.b16 %v1567
      %v1572 = vunpack.c.l.b16 %v1568
      %v1573 = vpack.c.b16 %v1572, %v1571
      %v1576 = vsel %vm334, %v1550, 0
      %v1579 = vsel %vm334, %v1551, 0
      %v1582 = vsel %vm334, %v1552, 0
      %v1585 = vsel %vm334, %v1553, 0
      %v1588 = vsel %vm334, %v1554, 0
      %v1591 = vsel %vm334, %v1555, 0
      %v1594 = vsel %vm334, %v1556, 0
      %v1597 = vsel %vm334, %v1557, 0
      %v1600 = vsel %vm334, %v1558, 0
      %v1603 = vsel %vm334, %v1559, 0
      %v1606 = vsel %vm334, %v1560, 0
      %v1609 = vsel %vm334, %v1561, 0
      %v1612 = vsel %vm334, %v1562, 0
      %v1615 = vsel %vm334, %v1563, 0
      %v1618 = vsel %vm334, %v1564, 0
      %v1621 = vsel %vm334, %v1565, 0
      %1623 = vmatprep.subr.bf16.mxu0 0
      %1624 = vmatpush1.bf16.msra.mxu0 %v1573
      %1625 = vmatprep.subr.bf16.mxu0 0
      %1626 = vmatpush1.bf16.msra.mxu0 0
      %1627 = vmatprep.subr.bf16.mxu0 0
      %1628 = vmatpush1.bf16.msra.mxu0 0
      %1629 = vmatprep.subr.bf16.mxu0 0
      %1630 = vmatpush1.bf16.msra.mxu0 0
      %1631 = vmatprep.subr.bf16.mxu0 0
      %1632 = vmatpush1.bf16.msra.mxu0 0
      %1633 = vmatprep.subr.bf16.mxu0 0
      %1634 = vmatpush1.bf16.msra.mxu0 0
      %1635 = vmatprep.subr.bf16.mxu0 0
      %1636 = vmatpush1.bf16.msra.mxu0 0
      %1637 = vmatprep.subr.bf16.mxu0 0
      %1638 = vmatpush1.bf16.msra.mxu0 0
      %1639 = vmatprep.subr.bf16.mxu0 0
      %1640 = vmatpush1.bf16.msra.mxu0 0
      %1641 = vmatprep.subr.bf16.mxu0 0
      %1642 = vmatpush1.bf16.msra.mxu0 0
      %1643 = vmatprep.subr.bf16.mxu0 0
      %1644 = vmatpush1.bf16.msra.mxu0 0
      %1645 = vmatprep.subr.bf16.mxu0 0
      %1646 = vmatpush1.bf16.msra.mxu0 0
      %1647 = vmatprep.subr.bf16.mxu0 0
      %1648 = vmatpush1.bf16.msra.mxu0 0
      %1649 = vmatprep.subr.bf16.mxu0 0
      %1650 = vmatpush1.bf16.msra.mxu0 0
      %1651 = vmatprep.subr.bf16.mxu0 0
      %1652 = vmatpush1.bf16.msra.mxu0 0
      %1653 = vmatprep.subr.bf16.mxu0 0
      %1654 = vmatpush1.bf16.msra.mxu0 0
      %1655 = vmatprep.mubr.bf16.mxu0 0
      %1656 = vmatmul.mubr.bf16.gmra.mrb[0].mxu0 %v1576
      %v1657 = vpop.f32.mrb[0].mxu0
      %v1658 = vadd.f32 0.0, %v1657
      %v1659 = vpop.f32.mrb[0].mxu0
      %v1660 = vpop.f32.mrb[0].mxu0
      %v1661 = vadd.f32 0.0, %v1660
      %v1662 = vpop.f32.mrb[0].mxu0
      %1663 = vmatprep.mubr.bf16.mxu0 0
      %1664 = vmatmul.mubr.bf16.gmra.mrb[0].mxu0 %v1579
      %v1665 = vpop.f32.mrb[0].mxu0
      %v1666 = vadd.f32 0.0, %v1665
      %v1667 = vpop.f32.mrb[0].mxu0
      %v1668 = vpop.f32.mrb[0].mxu0
      %v1669 = vadd.f32 0.0, %v1668
      %v1670 = vpop.f32.mrb[0].mxu0
      %1671 = vmatprep.mubr.bf16.mxu0 0
      %1672 = vmatmul.mubr.bf16.gmra.mrb[0].mxu0 %v1582
      %v1673 = vpop.f32.mrb[0].mxu0
      %v1674 = vadd.f32 0.0, %v1673
      %v1675 = vpop.f32.mrb[0].mxu0
      %v1676 = vpop.f32.mrb[0].mxu0
      %v1677 = vadd.f32 0.0, %v1676
      %v1678 = vpop.f32.mrb[0].mxu0
      %1679 = vmatprep.mubr.bf16.mxu0 0
      %1680 = vmatmul.mubr.bf16.gmra.mrb[0].mxu0 %v1585
      %v1681 = vpop.f32.mrb[0].mxu0
      %v1682 = vadd.f32 0.0, %v1681
      %v1683 = vpop.f32.mrb[0].mxu0
      %v1684 = vpop.f32.mrb[0].mxu0
      %v1685 = vadd.f32 0.0, %v1684
      %v1686 = vpop.f32.mrb[0].mxu0
      %1687 = vmatprep.mubr.bf16.mxu0 0
      %1688 = vmatmul.mubr.bf16.gmra.mrb[0].mxu0 %v1588
      %v1689 = vpop.f32.mrb[0].mxu0
      %v1690 = vadd.f32 0.0, %v1689
      %v1691 = vpop.f32.mrb[0].mxu0
      %v1692 = vpop.f32.mrb[0].mxu0
      %v1693 = vadd.f32 0.0, %v1692
      %v1694 = vpop.f32.mrb[0].mxu0
      %1695 = vmatprep.mubr.bf16.mxu0 0
      %1696 = vmatmul.mubr.bf16.gmra.mrb[0].mxu0 %v1591
      %v1697 = vpop.f32.mrb[0].mxu0
      %v1698 = vadd.f32 0.0, %v1697
      %v1699 = vpop.f32.mrb[0].mxu0
      %v1700 = vpop.f32.mrb[0].mxu0
      %v1701 = vadd.f32 0.0, %v1700
      %v1702 = vpop.f32.mrb[0].mxu0
      %1703 = vmatprep.mubr.bf16.mxu0 0
      %1704 = vmatmul.mubr.bf16.gmra.mrb[0].mxu0 %v1594
      %v1705 = vpop.f32.mrb[0].mxu0
      %v1706 = vadd.f32 0.0, %v1705
      %v1707 = vpop.f32.mrb[0].mxu0
      %v1708 = vpop.f32.mrb[0].mxu0
      %v1709 = vadd.f32 0.0, %v1708
      %v1710 = vpop.f32.mrb[0].mxu0
      %1711 = vmatprep.mubr.bf16.mxu0 0
      %1712 = vmatmul.mubr.bf16.gmra.mrb[0].mxu0 %v1597
      %v1713 = vpop.f32.mrb[0].mxu0
      %v1714 = vadd.f32 0.0, %v1713
      %v1715 = vpop.f32.mrb[0].mxu0
      %v1716 = vpop.f32.mrb[0].mxu0
      %v1717 = vadd.f32 0.0, %v1716
      %v1718 = vpop.f32.mrb[0].mxu0
      %1719 = vmatprep.mubr.bf16.mxu0 0
      %1720 = vmatmul.mubr.bf16.gmra.mrb[0].mxu0 %v1600
      %v1721 = vpop.f32.mrb[0].mxu0
      %v1722 = vadd.f32 0.0, %v1721
      %v1723 = vpop.f32.mrb[0].mxu0
      %v1724 = vpop.f32.mrb[0].mxu0
      %v1725 = vadd.f32 0.0, %v1724
      %v1726 = vpop.f32.mrb[0].mxu0
      %1727 = vmatprep.mubr.bf16.mxu0 0
      %1728 = vmatmul.mubr.bf16.gmra.mrb[0].mxu0 %v1603
      %v1729 = vpop.f32.mrb[0].mxu0
      %v1730 = vadd.f32 0.0, %v1729
      %v1731 = vpop.f32.mrb[0].mxu0
      %v1732 = vpop.f32.mrb[0].mxu0
      %v1733 = vadd.f32 0.0, %v1732
      %v1734 = vpop.f32.mrb[0].mxu0
      %1735 = vmatprep.mubr.bf16.mxu0 0
      %1736 = vmatmul.mubr.bf16.gmra.mrb[0].mxu0 %v1606
      %v1737 = vpop.f32.mrb[0].mxu0
      %v1738 = vadd.f32 0.0, %v1737
      %v1739 = vpop.f32.mrb[0].mxu0
      %v1740 = vpop.f32.mrb[0].mxu0
      %v1741 = vadd.f32 0.0, %v1740
      %v1742 = vpop.f32.mrb[0].mxu0
      %1743 = vmatprep.mubr.bf16.mxu0 0
      %1744 = vmatmul.mubr.bf16.gmra.mrb[0].mxu0 %v1609
      %v1745 = vpop.f32.mrb[0].mxu0
      %v1746 = vadd.f32 0.0, %v1745
      %v1747 = vpop.f32.mrb[0].mxu0
      %v1748 = vpop.f32.mrb[0].mxu0
      %v1749 = vadd.f32 0.0, %v1748
      %v1750 = vpop.f32.mrb[0].mxu0
      %1751 = vmatprep.mubr.bf16.mxu0 0
      %1752 = vmatmul.mubr.bf16.gmra.mrb[0].mxu0 %v1612
      %v1753 = vpop.f32.mrb[0].mxu0
      %v1754 = vadd.f32 0.0, %v1753
      %v1755 = vpop.f32.mrb[0].mxu0
      %v1756 = vpop.f32.mrb[0].mxu0
      %v1757 = vadd.f32 0.0, %v1756
      %v1758 = vpop.f32.mrb[0].mxu0
      %1759 = vmatprep.mubr.bf16.mxu0 0
      %1760 = vmatmul.mubr.bf16.gmra.mrb[0].mxu0 %v1615
      %v1761 = vpop.f32.mrb[0].mxu0
      %v1762 = vadd.f32 0.0, %v1761
      %v1763 = vpop.f32.mrb[0].mxu0
      %v1764 = vpop.f32.mrb[0].mxu0
      %v1765 = vadd.f32 0.0, %v1764
      %v1766 = vpop.f32.mrb[0].mxu0
      %1767 = vmatprep.mubr.bf16.mxu0 0
      %1768 = vmatmul.mubr.bf16.gmra.mrb[0].mxu0 %v1618
      %v1769 = vpop.f32.mrb[0].mxu0
      %v1770 = vadd.f32 0.0, %v1769
      %v1771 = vpop.f32.mrb[0].mxu0
      %v1772 = vpop.f32.mrb[0].mxu0
      %v1773 = vadd.f32 0.0, %v1772
      %v1774 = vpop.f32.mrb[0].mxu0
      %1775 = vmatprep.mubr.bf16.mxu0 0
      %1776 = vmatmul.mubr.bf16.gmra.mrb[0].mxu0 %v1621
      %v1777 = vpop.f32.mrb[0].mxu0
      %v1778 = vadd.f32 0.0, %v1777
      %v1779 = vpop.f32.mrb[0].mxu0
      %v1780 = vpop.f32.mrb[0].mxu0
      %v1781 = vadd.f32 0.0, %v1780
      %v1782 = vpop.f32.mrb[0].mxu0
      %1783 = vdwg.mxu0
      %v1784 = vadd.f32 %v1486, %v1658
      %v1785 = vadd.f32 %v1487, %v1661
      %v1786 = vadd.f32 %v1488, %v1666
      %v1787 = vadd.f32 %v1489, %v1669
      %v1788 = vadd.f32 %v1490, %v1674
      %v1789 = vadd.f32 %v1491, %v1677
      %v1790 = vadd.f32 %v1492, %v1682
      %v1791 = vadd.f32 %v1493, %v1685
      %v1792 = vadd.f32 %v1494, %v1690
      %v1793 = vadd.f32 %v1495, %v1693
      %v1794 = vadd.f32 %v1496, %v1698
      %v1795 = vadd.f32 %v1497, %v1701
      %v1796 = vadd.f32 %v1498, %v1706
      %v1797 = vadd.f32 %v1499, %v1709
      %v1798 = vadd.f32 %v1500, %v1714
      %v1799 = vadd.f32 %v1501, %v1717
      %v1800 = vadd.f32 %v1502, %v1722
      %v1801 = vadd.f32 %v1503, %v1725
      %v1802 = vadd.f32 %v1504, %v1730
      %v1803 = vadd.f32 %v1505, %v1733
      %v1804 = vadd.f32 %v1506, %v1738
      %v1805 = vadd.f32 %v1507, %v1741
      %v1806 = vadd.f32 %v1508, %v1746
      %v1807 = vadd.f32 %v1509, %v1749
      %v1808 = vadd.f32 %v1510, %v1754
      %v1809 = vadd.f32 %v1511, %v1757
      %v1810 = vadd.f32 %v1512, %v1762
      %v1811 = vadd.f32 %v1513, %v1765
      %v1812 = vadd.f32 %v1514, %v1770
      %v1813 = vadd.f32 %v1515, %v1773
      %v1814 = vadd.f32 %v1516, %v1778
      %v1815 = vadd.f32 %v1517, %v1781
      %v1816 = vld [vmem:[%s1219 + $0x2] sm:$0xff]
      %v1817 = vld [vmem:[%s1219 + $0xa] sm:$0xff]
      %v1818 = vld [vmem:[%s1219 + $0x1a] sm:$0xff]
      %v1819 = vld [vmem:[%s1219 + $0x22] sm:$0xff]
      %v1820 = vld [vmem:[%s1219 + $0x32] sm:$0xff]
      %v1821 = vld [vmem:[%s1219 + $0x3a] sm:$0xff]
      %v1822 = vld [vmem:[%s1219 + $0x4a] sm:$0xff]
      %v1823 = vld [vmem:[%s1219 + $0x52] sm:$0xff]
      %v1824 = vld [vmem:[%s1219 + $0x62] sm:$0xff]
      %v1825 = vld [vmem:[%s1219 + $0x6a] sm:$0xff]
      %v1826 = vld [vmem:[%s1219 + $0x7a] sm:$0xff]
      %v1827 = vld [vmem:[%s1219 + $0x82] sm:$0xff]
      %v1828 = vld [vmem:[%s1219 + $0x92] sm:$0xff]
      %v1829 = vld [vmem:[%s1219 + $0x9a] sm:$0xff]
      %v1830 = vld [vmem:[%s1219 + $0xaa] sm:$0xff]
      %v1831 = vld [vmem:[%s1219 + $0xb2] sm:$0xff]
      %v1832 = vld [vmem:[%s1219 + $0xc2] sm:$0xff]
      %v1833 = vld [vmem:[%s1219 + $0xca] sm:$0xff]
      %v1834 = vld [vmem:[%s1219 + $0xda] sm:$0xff]
      %v1835 = vld [vmem:[%s1219 + $0xe2] sm:$0xff]
      %v1836 = vld [vmem:[%s1219 + $0xf2] sm:$0xff]
      %v1837 = vld [vmem:[%s1219 + $0xfa] sm:$0xff]
      %v1838 = vld [vmem:[%s1219 + $0x10a] sm:$0xff]
      %v1839 = vld [vmem:[%s1219 + $0x112] sm:$0xff]
      %v1840 = vld [vmem:[%s1219 + $0x122] sm:$0xff]
      %v1841 = vld [vmem:[%s1219 + $0x12a] sm:$0xff]
      %v1842 = vld [vmem:[%s1219 + $0x13a] sm:$0xff]
      %v1843 = vld [vmem:[%s1219 + $0x142] sm:$0xff]
      %v1844 = vld [vmem:[%s1219 + $0x152] sm:$0xff]
      %v1845 = vld [vmem:[%s1219 + $0x15a] sm:$0xff]
      %v1846 = vld [vmem:[%s1219 + $0x16a] sm:$0xff]
      %v1847 = vld [vmem:[%s1219 + $0x172] sm:$0xff]
      %v1848 = vpack.c.bf16 %v1817, %v1816
      %v1849 = vpack.c.bf16 %v1819, %v1818
      %v1850 = vpack.c.bf16 %v1821, %v1820
      %v1851 = vpack.c.bf16 %v1823, %v1822
      %v1852 = vpack.c.bf16 %v1825, %v1824
      %v1853 = vpack.c.bf16 %v1827, %v1826
      %v1854 = vpack.c.bf16 %v1829, %v1828
      %v1855 = vpack.c.bf16 %v1831, %v1830
      %v1856 = vpack.c.bf16 %v1833, %v1832
      %v1857 = vpack.c.bf16 %v1835, %v1834
      %v1858 = vpack.c.bf16 %v1837, %v1836
      %v1859 = vpack.c.bf16 %v1839, %v1838
      %v1860 = vpack.c.bf16 %v1841, %v1840
      %v1861 = vpack.c.bf16 %v1843, %v1842
      %v1862 = vpack.c.bf16 %v1845, %v1844
      %v1863 = vpack.c.bf16 %v1847, %v1846
      %s1864 = scalar_lea.vmem %s1, 40
      %v1865 = vld [vmem:[%s1864] sm:$0xf]
      %v1866 = vld [vmem:[%s1864 + $0x4] sm:$0xf]
      %v1869 = vunpack.c.l.b16 %v1865
      %v1870 = vunpack.c.l.b16 %v1866
      %v1871 = vpack.c.b16 %v1870, %v1869
      %v1874 = vsel %vm334, %v1848, 0
      %v1877 = vsel %vm334, %v1849, 0
      %v1880 = vsel %vm334, %v1850, 0
      %v1883 = vsel %vm334, %v1851, 0
      %v1886 = vsel %vm334, %v1852, 0
      %v1889 = vsel %vm334, %v1853, 0
      %v1892 = vsel %vm334, %v1854, 0
      %v1895 = vsel %vm334, %v1855, 0
      %v1898 = vsel %vm334, %v1856, 0
      %v1901 = vsel %vm334, %v1857, 0
      %v1904 = vsel %vm334, %v1858, 0
      %v1907 = vsel %vm334, %v1859, 0
      %v1910 = vsel %vm334, %v1860, 0
      %v1913 = vsel %vm334, %v1861, 0
      %v1916 = vsel %vm334, %v1862, 0
      %v1919 = vsel %vm334, %v1863, 0
      %1921 = vmatprep.subr.bf16.mxu0 0
      %1922 = vmatpush1.bf16.msra.mxu0 %v1871
      %1923 = vmatprep.subr.bf16.mxu0 0
      %1924 = vmatpush1.bf16.msra.mxu0 0
      %1925 = vmatprep.subr.bf16.mxu0 0
      %1926 = vmatpush1.bf16.msra.mxu0 0
      %1927 = vmatprep.subr.bf16.mxu0 0
      %1928 = vmatpush1.bf16.msra.mxu0 0
      %1929 = vmatprep.subr.bf16.mxu0 0
      %1930 = vmatpush1.bf16.msra.mxu0 0
      %1931 = vmatprep.subr.bf16.mxu0 0
      %1932 = vmatpush1.bf16.msra.mxu0 0
      %1933 = vmatprep.subr.bf16.mxu0 0
      %1934 = vmatpush1.bf16.msra.mxu0 0
      %1935 = vmatprep.subr.bf16.mxu0 0
      %1936 = vmatpush1.bf16.msra.mxu0 0
      %1937 = vmatprep.subr.bf16.mxu0 0
      %1938 = vmatpush1.bf16.msra.mxu0 0
      %1939 = vmatprep.subr.bf16.mxu0 0
      %1940 = vmatpush1.bf16.msra.mxu0 0
      %1941 = vmatprep.subr.bf16.mxu0 0
      %1942 = vmatpush1.bf16.msra.mxu0 0
      %1943 = vmatprep.subr.bf16.mxu0 0
      %1944 = vmatpush1.bf16.msra.mxu0 0
      %1945 = vmatprep.subr.bf16.mxu0 0
      %1946 = vmatpush1.bf16.msra.mxu0 0
      %1947 = vmatprep.subr.bf16.mxu0 0
      %1948 = vmatpush1.bf16.msra.mxu0 0
      %1949 = vmatprep.subr.bf16.mxu0 0
      %1950 = vmatpush1.bf16.msra.mxu0 0
      %1951 = vmatprep.subr.bf16.mxu0 0
      %1952 = vmatpush1.bf16.msra.mxu0 0
      %1953 = vmatprep.mubr.bf16.mxu0 0
      %1954 = vmatmul.mubr.bf16.gmra.mrb[0].mxu0 %v1874
      %v1955 = vpop.f32.mrb[0].mxu0
      %v1956 = vadd.f32 0.0, %v1955
      %v1957 = vpop.f32.mrb[0].mxu0
      %v1958 = vpop.f32.mrb[0].mxu0
      %v1959 = vadd.f32 0.0, %v1958
      %v1960 = vpop.f32.mrb[0].mxu0
      %1961 = vmatprep.mubr.bf16.mxu0 0
      %1962 = vmatmul.mubr.bf16.gmra.mrb[0].mxu0 %v1877
      %v1963 = vpop.f32.mrb[0].mxu0
      %v1964 = vadd.f32 0.0, %v1963
      %v1965 = vpop.f32.mrb[0].mxu0
      %v1966 = vpop.f32.mrb[0].mxu0
      %v1967 = vadd.f32 0.0, %v1966
      %v1968 = vpop.f32.mrb[0].mxu0
      %1969 = vmatprep.mubr.bf16.mxu0 0
      %1970 = vmatmul.mubr.bf16.gmra.mrb[0].mxu0 %v1880
      %v1971 = vpop.f32.mrb[0].mxu0
      %v1972 = vadd.f32 0.0, %v1971
      %v1973 = vpop.f32.mrb[0].mxu0
      %v1974 = vpop.f32.mrb[0].mxu0
      %v1975 = vadd.f32 0.0, %v1974
      %v1976 = vpop.f32.mrb[0].mxu0
      %1977 = vmatprep.mubr.bf16.mxu0 0
      %1978 = vmatmul.mubr.bf16.gmra.mrb[0].mxu0 %v1883
      %v1979 = vpop.f32.mrb[0].mxu0
      %v1980 = vadd.f32 0.0, %v1979
      %v1981 = vpop.f32.mrb[0].mxu0
      %v1982 = vpop.f32.mrb[0].mxu0
      %v1983 = vadd.f32 0.0, %v1982
      %v1984 = vpop.f32.mrb[0].mxu0
      %1985 = vmatprep.mubr.bf16.mxu0 0
      %1986 = vmatmul.mubr.bf16.gmra.mrb[0].mxu0 %v1886
      %v1987 = vpop.f32.mrb[0].mxu0
      %v1988 = vadd.f32 0.0, %v1987
      %v1989 = vpop.f32.mrb[0].mxu0
      %v1990 = vpop.f32.mrb[0].mxu0
      %v1991 = vadd.f32 0.0, %v1990
      %v1992 = vpop.f32.mrb[0].mxu0
      %1993 = vmatprep.mubr.bf16.mxu0 0
      %1994 = vmatmul.mubr.bf16.gmra.mrb[0].mxu0 %v1889
      %v1995 = vpop.f32.mrb[0].mxu0
      %v1996 = vadd.f32 0.0, %v1995
      %v1997 = vpop.f32.mrb[0].mxu0
      %v1998 = vpop.f32.mrb[0].mxu0
      %v1999 = vadd.f32 0.0, %v1998
      %v2000 = vpop.f32.mrb[0].mxu0
      %2001 = vmatprep.mubr.bf16.mxu0 0
      %2002 = vmatmul.mubr.bf16.gmra.mrb[0].mxu0 %v1892
      %v2003 = vpop.f32.mrb[0].mxu0
      %v2004 = vadd.f32 0.0, %v2003
      %v2005 = vpop.f32.mrb[0].mxu0
      %v2006 = vpop.f32.mrb[0].mxu0
      %v2007 = vadd.f32 0.0, %v2006
      %v2008 = vpop.f32.mrb[0].mxu0
      %2009 = vmatprep.mubr.bf16.mxu0 0
      %2010 = vmatmul.mubr.bf16.gmra.mrb[0].mxu0 %v1895
      %v2011 = vpop.f32.mrb[0].mxu0
      %v2012 = vadd.f32 0.0, %v2011
      %v2013 = vpop.f32.mrb[0].mxu0
      %v2014 = vpop.f32.mrb[0].mxu0
      %v2015 = vadd.f32 0.0, %v2014
      %v2016 = vpop.f32.mrb[0].mxu0
      %2017 = vmatprep.mubr.bf16.mxu0 0
      %2018 = vmatmul.mubr.bf16.gmra.mrb[0].mxu0 %v1898
      %v2019 = vpop.f32.mrb[0].mxu0
      %v2020 = vadd.f32 0.0, %v2019
      %v2021 = vpop.f32.mrb[0].mxu0
      %v2022 = vpop.f32.mrb[0].mxu0
      %v2023 = vadd.f32 0.0, %v2022
      %v2024 = vpop.f32.mrb[0].mxu0
      %2025 = vmatprep.mubr.bf16.mxu0 0
      %2026 = vmatmul.mubr.bf16.gmra.mrb[0].mxu0 %v1901
      %v2027 = vpop.f32.mrb[0].mxu0
      %v2028 = vadd.f32 0.0, %v2027
      %v2029 = vpop.f32.mrb[0].mxu0
      %v2030 = vpop.f32.mrb[0].mxu0
      %v2031 = vadd.f32 0.0, %v2030
      %v2032 = vpop.f32.mrb[0].mxu0
      %2033 = vmatprep.mubr.bf16.mxu0 0
      %2034 = vmatmul.mubr.bf16.gmra.mrb[0].mxu0 %v1904
      %v2035 = vpop.f32.mrb[0].mxu0
      %v2036 = vadd.f32 0.0, %v2035
      %v2037 = vpop.f32.mrb[0].mxu0
      %v2038 = vpop.f32.mrb[0].mxu0
      %v2039 = vadd.f32 0.0, %v2038
      %v2040 = vpop.f32.mrb[0].mxu0
      %2041 = vmatprep.mubr.bf16.mxu0 0
      %2042 = vmatmul.mubr.bf16.gmra.mrb[0].mxu0 %v1907
      %v2043 = vpop.f32.mrb[0].mxu0
      %v2044 = vadd.f32 0.0, %v2043
      %v2045 = vpop.f32.mrb[0].mxu0
      %v2046 = vpop.f32.mrb[0].mxu0
      %v2047 = vadd.f32 0.0, %v2046
      %v2048 = vpop.f32.mrb[0].mxu0
      %2049 = vmatprep.mubr.bf16.mxu0 0
      %2050 = vmatmul.mubr.bf16.gmra.mrb[0].mxu0 %v1910
      %v2051 = vpop.f32.mrb[0].mxu0
      %v2052 = vadd.f32 0.0, %v2051
      %v2053 = vpop.f32.mrb[0].mxu0
      %v2054 = vpop.f32.mrb[0].mxu0
      %v2055 = vadd.f32 0.0, %v2054
      %v2056 = vpop.f32.mrb[0].mxu0
      %2057 = vmatprep.mubr.bf16.mxu0 0
      %2058 = vmatmul.mubr.bf16.gmra.mrb[0].mxu0 %v1913
      %v2059 = vpop.f32.mrb[0].mxu0
      %v2060 = vadd.f32 0.0, %v2059
      %v2061 = vpop.f32.mrb[0].mxu0
      %v2062 = vpop.f32.mrb[0].mxu0
      %v2063 = vadd.f32 0.0, %v2062
      %v2064 = vpop.f32.mrb[0].mxu0
      %2065 = vmatprep.mubr.bf16.mxu0 0
      %2066 = vmatmul.mubr.bf16.gmra.mrb[0].mxu0 %v1916
      %v2067 = vpop.f32.mrb[0].mxu0
      %v2068 = vadd.f32 0.0, %v2067
      %v2069 = vpop.f32.mrb[0].mxu0
      %v2070 = vpop.f32.mrb[0].mxu0
      %v2071 = vadd.f32 0.0, %v2070
      %v2072 = vpop.f32.mrb[0].mxu0
      %2073 = vmatprep.mubr.bf16.mxu0 0
      %2074 = vmatmul.mubr.bf16.gmra.mrb[0].mxu0 %v1919
      %v2075 = vpop.f32.mrb[0].mxu0
      %v2076 = vadd.f32 0.0, %v2075
      %v2077 = vpop.f32.mrb[0].mxu0
      %v2078 = vpop.f32.mrb[0].mxu0
      %v2079 = vadd.f32 0.0, %v2078
      %v2080 = vpop.f32.mrb[0].mxu0
      %2081 = vdwg.mxu0
      %v2082 = vadd.f32 %v1784, %v1956
      %v2083 = vadd.f32 %v1785, %v1959
      %v2084 = vadd.f32 %v1786, %v1964
      %v2085 = vadd.f32 %v1787, %v1967
      %v2086 = vadd.f32 %v1788, %v1972
      %v2087 = vadd.f32 %v1789, %v1975
      %v2088 = vadd.f32 %v1790, %v1980
      %v2089 = vadd.f32 %v1791, %v1983
      %v2090 = vadd.f32 %v1792, %v1988
      %v2091 = vadd.f32 %v1793, %v1991
      %v2092 = vadd.f32 %v1794, %v1996
      %v2093 = vadd.f32 %v1795, %v1999
      %v2094 = vadd.f32 %v1796, %v2004
      %v2095 = vadd.f32 %v1797, %v2007
      %v2096 = vadd.f32 %v1798, %v2012
      %v2097 = vadd.f32 %v1799, %v2015
      %v2098 = vadd.f32 %v1800, %v2020
      %v2099 = vadd.f32 %v1801, %v2023
      %v2100 = vadd.f32 %v1802, %v2028
      %v2101 = vadd.f32 %v1803, %v2031
      %v2102 = vadd.f32 %v1804, %v2036
      %v2103 = vadd.f32 %v1805, %v2039
      %v2104 = vadd.f32 %v1806, %v2044
      %v2105 = vadd.f32 %v1807, %v2047
      %v2106 = vadd.f32 %v1808, %v2052
      %v2107 = vadd.f32 %v1809, %v2055
      %v2108 = vadd.f32 %v1810, %v2060
      %v2109 = vadd.f32 %v1811, %v2063
      %v2110 = vadd.f32 %v1812, %v2068
      %v2111 = vadd.f32 %v1813, %v2071
      %v2112 = vadd.f32 %v1814, %v2076
      %v2113 = vadd.f32 %v1815, %v2079
      %s2114 = scalar_lea.vmem [#allocation2], 48
      %v2115 = vld [vmem:[%s2114] sm:$0xff]
      %v2116 = vld [vmem:[%s2114 + $0x8] sm:$0xff]
      %v2117 = vld [vmem:[%s2114 + $0x18] sm:$0xff]
      %v2118 = vld [vmem:[%s2114 + $0x20] sm:$0xff]
      %v2119 = vld [vmem:[%s2114 + $0x30] sm:$0xff]
      %v2120 = vld [vmem:[%s2114 + $0x38] sm:$0xff]
      %v2121 = vld [vmem:[%s2114 + $0x48] sm:$0xff]
      %v2122 = vld [vmem:[%s2114 + $0x50] sm:$0xff]
      %v2123 = vld [vmem:[%s2114 + $0x60] sm:$0xff]
      %v2124 = vld [vmem:[%s2114 + $0x68] sm:$0xff]
      %v2125 = vld [vmem:[%s2114 + $0x78] sm:$0xff]
      %v2126 = vld [vmem:[%s2114 + $0x80] sm:$0xff]
      %v2127 = vld [vmem:[%s2114 + $0x90] sm:$0xff]
      %v2128 = vld [vmem:[%s2114 + $0x98] sm:$0xff]
      %v2129 = vld [vmem:[%s2114 + $0xa8] sm:$0xff]
      %v2130 = vld [vmem:[%s2114 + $0xb0] sm:$0xff]
      %v2131 = vld [vmem:[%s2114 + $0xc0] sm:$0xff]
      %v2132 = vld [vmem:[%s2114 + $0xc8] sm:$0xff]
      %v2133 = vld [vmem:[%s2114 + $0xd8] sm:$0xff]
      %v2134 = vld [vmem:[%s2114 + $0xe0] sm:$0xff]
      %v2135 = vld [vmem:[%s2114 + $0xf0] sm:$0xff]
      %v2136 = vld [vmem:[%s2114 + $0xf8] sm:$0xff]
      %v2137 = vld [vmem:[%s2114 + $0x108] sm:$0xff]
      %v2138 = vld [vmem:[%s2114 + $0x110] sm:$0xff]
      %v2139 = vld [vmem:[%s2114 + $0x120] sm:$0xff]
      %v2140 = vld [vmem:[%s2114 + $0x128] sm:$0xff]
      %v2141 = vld [vmem:[%s2114 + $0x138] sm:$0xff]
      %v2142 = vld [vmem:[%s2114 + $0x140] sm:$0xff]
      %v2143 = vld [vmem:[%s2114 + $0x150] sm:$0xff]
      %v2144 = vld [vmem:[%s2114 + $0x158] sm:$0xff]
      %v2145 = vld [vmem:[%s2114 + $0x168] sm:$0xff]
      %v2146 = vld [vmem:[%s2114 + $0x170] sm:$0xff]
      %v2147 = vpack.c.bf16 %v2116, %v2115
      %v2148 = vpack.c.bf16 %v2118, %v2117
      %v2149 = vpack.c.bf16 %v2120, %v2119
      %v2150 = vpack.c.bf16 %v2122, %v2121
      %v2151 = vpack.c.bf16 %v2124, %v2123
      %v2152 = vpack.c.bf16 %v2126, %v2125
      %v2153 = vpack.c.bf16 %v2128, %v2127
      %v2154 = vpack.c.bf16 %v2130, %v2129
      %v2155 = vpack.c.bf16 %v2132, %v2131
      %v2156 = vpack.c.bf16 %v2134, %v2133
      %v2157 = vpack.c.bf16 %v2136, %v2135
      %v2158 = vpack.c.bf16 %v2138, %v2137
      %v2159 = vpack.c.bf16 %v2140, %v2139
      %v2160 = vpack.c.bf16 %v2142, %v2141
      %v2161 = vpack.c.bf16 %v2144, %v2143
      %v2162 = vpack.c.bf16 %v2146, %v2145
      %s2163 = scalar_lea.vmem %s1, 48
      %v2164 = vld [vmem:[%s2163] sm:$0xf]
      %v2165 = vld [vmem:[%s2163 + $0x4] sm:$0xf]
      %v2168 = vunpack.c.l.b16 %v2164
      %v2169 = vunpack.c.l.b16 %v2165
      %v2170 = vpack.c.b16 %v2169, %v2168
      %v2173 = vsel %vm334, %v2147, 0
      %v2176 = vsel %vm334, %v2148, 0
      %v2179 = vsel %vm334, %v2149, 0
      %v2182 = vsel %vm334, %v2150, 0
      %v2185 = vsel %vm334, %v2151, 0
      %v2188 = vsel %vm334, %v2152, 0
      %v2191 = vsel %vm334, %v2153, 0
      %v2194 = vsel %vm334, %v2154, 0
      %v2197 = vsel %vm334, %v2155, 0
      %v2200 = vsel %vm334, %v2156, 0
      %v2203 = vsel %vm334, %v2157, 0
      %v2206 = vsel %vm334, %v2158, 0
      %v2209 = vsel %vm334, %v2159, 0
      %v2212 = vsel %vm334, %v2160, 0
      %v2215 = vsel %vm334, %v2161, 0
      %v2218 = vsel %vm334, %v2162, 0
      %2220 = vmatprep.subr.bf16.mxu0 0
      %2221 = vmatpush1.bf16.msra.mxu0 %v2170
      %2222 = vmatprep.subr.bf16.mxu0 0
      %2223 = vmatpush1.bf16.msra.mxu0 0
      %2224 = vmatprep.subr.bf16.mxu0 0
      %2225 = vmatpush1.bf16.msra.mxu0 0
      %2226 = vmatprep.subr.bf16.mxu0 0
      %2227 = vmatpush1.bf16.msra.mxu0 0
      %2228 = vmatprep.subr.bf16.mxu0 0
      %2229 = vmatpush1.bf16.msra.mxu0 0
      %2230 = vmatprep.subr.bf16.mxu0 0
      %2231 = vmatpush1.bf16.msra.mxu0 0
      %2232 = vmatprep.subr.bf16.mxu0 0
      %2233 = vmatpush1.bf16.msra.mxu0 0
      %2234 = vmatprep.subr.bf16.mxu0 0
      %2235 = vmatpush1.bf16.msra.mxu0 0
      %2236 = vmatprep.subr.bf16.mxu0 0
      %2237 = vmatpush1.bf16.msra.mxu0 0
      %2238 = vmatprep.subr.bf16.mxu0 0
      %2239 = vmatpush1.bf16.msra.mxu0 0
      %2240 = vmatprep.subr.bf16.mxu0 0
      %2241 = vmatpush1.bf16.msra.mxu0 0
      %2242 = vmatprep.subr.bf16.mxu0 0
      %2243 = vmatpush1.bf16.msra.mxu0 0
      %2244 = vmatprep.subr.bf16.mxu0 0
      %2245 = vmatpush1.bf16.msra.mxu0 0
      %2246 = vmatprep.subr.bf16.mxu0 0
      %2247 = vmatpush1.bf16.msra.mxu0 0
      %2248 = vmatprep.subr.bf16.mxu0 0
      %2249 = vmatpush1.bf16.msra.mxu0 0
      %2250 = vmatprep.subr.bf16.mxu0 0
      %2251 = vmatpush1.bf16.msra.mxu0 0
      %2252 = vmatprep.mubr.bf16.mxu0 0
      %2253 = vmatmul.mubr.bf16.gmra.mrb[0].mxu0 %v2173
      %v2254 = vpop.f32.mrb[0].mxu0
      %v2255 = vadd.f32 0.0, %v2254
      %v2256 = vpop.f32.mrb[0].mxu0
      %v2257 = vpop.f32.mrb[0].mxu0
      %v2258 = vadd.f32 0.0, %v2257
      %v2259 = vpop.f32.mrb[0].mxu0
      %2260 = vmatprep.mubr.bf16.mxu0 0
      %2261 = vmatmul.mubr.bf16.gmra.mrb[0].mxu0 %v2176
      %v2262 = vpop.f32.mrb[0].mxu0
      %v2263 = vadd.f32 0.0, %v2262
      %v2264 = vpop.f32.mrb[0].mxu0
      %v2265 = vpop.f32.mrb[0].mxu0
      %v2266 = vadd.f32 0.0, %v2265
      %v2267 = vpop.f32.mrb[0].mxu0
      %2268 = vmatprep.mubr.bf16.mxu0 0
      %2269 = vmatmul.mubr.bf16.gmra.mrb[0].mxu0 %v2179
      %v2270 = vpop.f32.mrb[0].mxu0
      %v2271 = vadd.f32 0.0, %v2270
      %v2272 = vpop.f32.mrb[0].mxu0
      %v2273 = vpop.f32.mrb[0].mxu0
      %v2274 = vadd.f32 0.0, %v2273
      %v2275 = vpop.f32.mrb[0].mxu0
      %2276 = vmatprep.mubr.bf16.mxu0 0
      %2277 = vmatmul.mubr.bf16.gmra.mrb[0].mxu0 %v2182
      %v2278 = vpop.f32.mrb[0].mxu0
      %v2279 = vadd.f32 0.0, %v2278
      %v2280 = vpop.f32.mrb[0].mxu0
      %v2281 = vpop.f32.mrb[0].mxu0
      %v2282 = vadd.f32 0.0, %v2281
      %v2283 = vpop.f32.mrb[0].mxu0
      %2284 = vmatprep.mubr.bf16.mxu0 0
      %2285 = vmatmul.mubr.bf16.gmra.mrb[0].mxu0 %v2185
      %v2286 = vpop.f32.mrb[0].mxu0
      %v2287 = vadd.f32 0.0, %v2286
      %v2288 = vpop.f32.mrb[0].mxu0
      %v2289 = vpop.f32.mrb[0].mxu0
      %v2290 = vadd.f32 0.0, %v2289
      %v2291 = vpop.f32.mrb[0].mxu0
      %2292 = vmatprep.mubr.bf16.mxu0 0
      %2293 = vmatmul.mubr.bf16.gmra.mrb[0].mxu0 %v2188
      %v2294 = vpop.f32.mrb[0].mxu0
      %v2295 = vadd.f32 0.0, %v2294
      %v2296 = vpop.f32.mrb[0].mxu0
      %v2297 = vpop.f32.mrb[0].mxu0
      %v2298 = vadd.f32 0.0, %v2297
      %v2299 = vpop.f32.mrb[0].mxu0
      %2300 = vmatprep.mubr.bf16.mxu0 0
      %2301 = vmatmul.mubr.bf16.gmra.mrb[0].mxu0 %v2191
      %v2302 = vpop.f32.mrb[0].mxu0
      %v2303 = vadd.f32 0.0, %v2302
      %v2304 = vpop.f32.mrb[0].mxu0
      %v2305 = vpop.f32.mrb[0].mxu0
      %v2306 = vadd.f32 0.0, %v2305
      %v2307 = vpop.f32.mrb[0].mxu0
      %2308 = vmatprep.mubr.bf16.mxu0 0
      %2309 = vmatmul.mubr.bf16.gmra.mrb[0].mxu0 %v2194
      %v2310 = vpop.f32.mrb[0].mxu0
      %v2311 = vadd.f32 0.0, %v2310
      %v2312 = vpop.f32.mrb[0].mxu0
      %v2313 = vpop.f32.mrb[0].mxu0
      %v2314 = vadd.f32 0.0, %v2313
      %v2315 = vpop.f32.mrb[0].mxu0
      %2316 = vmatprep.mubr.bf16.mxu0 0
      %2317 = vmatmul.mubr.bf16.gmra.mrb[0].mxu0 %v2197
      %v2318 = vpop.f32.mrb[0].mxu0
      %v2319 = vadd.f32 0.0, %v2318
      %v2320 = vpop.f32.mrb[0].mxu0
      %v2321 = vpop.f32.mrb[0].mxu0
      %v2322 = vadd.f32 0.0, %v2321
      %v2323 = vpop.f32.mrb[0].mxu0
      %2324 = vmatprep.mubr.bf16.mxu0 0
      %2325 = vmatmul.mubr.bf16.gmra.mrb[0].mxu0 %v2200
      %v2326 = vpop.f32.mrb[0].mxu0
      %v2327 = vadd.f32 0.0, %v2326
      %v2328 = vpop.f32.mrb[0].mxu0
      %v2329 = vpop.f32.mrb[0].mxu0
      %v2330 = vadd.f32 0.0, %v2329
      %v2331 = vpop.f32.mrb[0].mxu0
      %2332 = vmatprep.mubr.bf16.mxu0 0
      %2333 = vmatmul.mubr.bf16.gmra.mrb[0].mxu0 %v2203
      %v2334 = vpop.f32.mrb[0].mxu0
      %v2335 = vadd.f32 0.0, %v2334
      %v2336 = vpop.f32.mrb[0].mxu0
      %v2337 = vpop.f32.mrb[0].mxu0
      %v2338 = vadd.f32 0.0, %v2337
      %v2339 = vpop.f32.mrb[0].mxu0
      %2340 = vmatprep.mubr.bf16.mxu0 0
      %2341 = vmatmul.mubr.bf16.gmra.mrb[0].mxu0 %v2206
      %v2342 = vpop.f32.mrb[0].mxu0
      %v2343 = vadd.f32 0.0, %v2342
      %v2344 = vpop.f32.mrb[0].mxu0
      %v2345 = vpop.f32.mrb[0].mxu0
      %v2346 = vadd.f32 0.0, %v2345
      %v2347 = vpop.f32.mrb[0].mxu0
      %2348 = vmatprep.mubr.bf16.mxu0 0
      %2349 = vmatmul.mubr.bf16.gmra.mrb[0].mxu0 %v2209
      %v2350 = vpop.f32.mrb[0].mxu0
      %v2351 = vadd.f32 0.0, %v2350
      %v2352 = vpop.f32.mrb[0].mxu0
      %v2353 = vpop.f32.mrb[0].mxu0
      %v2354 = vadd.f32 0.0, %v2353
      %v2355 = vpop.f32.mrb[0].mxu0
      %2356 = vmatprep.mubr.bf16.mxu0 0
      %2357 = vmatmul.mubr.bf16.gmra.mrb[0].mxu0 %v2212
      %v2358 = vpop.f32.mrb[0].mxu0
      %v2359 = vadd.f32 0.0, %v2358
      %v2360 = vpop.f32.mrb[0].mxu0
      %v2361 = vpop.f32.mrb[0].mxu0
      %v2362 = vadd.f32 0.0, %v2361
      %v2363 = vpop.f32.mrb[0].mxu0
      %2364 = vmatprep.mubr.bf16.mxu0 0
      %2365 = vmatmul.mubr.bf16.gmra.mrb[0].mxu0 %v2215
      %v2366 = vpop.f32.mrb[0].mxu0
      %v2367 = vadd.f32 0.0, %v2366
      %v2368 = vpop.f32.mrb[0].mxu0
      %v2369 = vpop.f32.mrb[0].mxu0
      %v2370 = vadd.f32 0.0, %v2369
      %v2371 = vpop.f32.mrb[0].mxu0
      %2372 = vmatprep.mubr.bf16.mxu0 0
      %2373 = vmatmul.mubr.bf16.gmra.mrb[0].mxu0 %v2218
      %v2374 = vpop.f32.mrb[0].mxu0
      %v2375 = vadd.f32 0.0, %v2374
      %v2376 = vpop.f32.mrb[0].mxu0
      %v2377 = vpop.f32.mrb[0].mxu0
      %v2378 = vadd.f32 0.0, %v2377
      %v2379 = vpop.f32.mrb[0].mxu0
      %2380 = vdwg.mxu0
      %v2381 = vadd.f32 %v2082, %v2255
      %v2382 = vadd.f32 %v2083, %v2258
      %v2383 = vadd.f32 %v2084, %v2263
      %v2384 = vadd.f32 %v2085, %v2266
      %v2385 = vadd.f32 %v2086, %v2271
      %v2386 = vadd.f32 %v2087, %v2274
      %v2387 = vadd.f32 %v2088, %v2279
      %v2388 = vadd.f32 %v2089, %v2282
      %v2389 = vadd.f32 %v2090, %v2287
      %v2390 = vadd.f32 %v2091, %v2290
      %v2391 = vadd.f32 %v2092, %v2295
      %v2392 = vadd.f32 %v2093, %v2298
      %v2393 = vadd.f32 %v2094, %v2303
      %v2394 = vadd.f32 %v2095, %v2306
      %v2395 = vadd.f32 %v2096, %v2311
      %v2396 = vadd.f32 %v2097, %v2314
      %v2397 = vadd.f32 %v2098, %v2319
      %v2398 = vadd.f32 %v2099, %v2322
      %v2399 = vadd.f32 %v2100, %v2327
      %v2400 = vadd.f32 %v2101, %v2330
      %v2401 = vadd.f32 %v2102, %v2335
      %v2402 = vadd.f32 %v2103, %v2338
      %v2403 = vadd.f32 %v2104, %v2343
      %v2404 = vadd.f32 %v2105, %v2346
      %v2405 = vadd.f32 %v2106, %v2351
      %v2406 = vadd.f32 %v2107, %v2354
      %v2407 = vadd.f32 %v2108, %v2359
      %v2408 = vadd.f32 %v2109, %v2362
      %v2409 = vadd.f32 %v2110, %v2367
      %v2410 = vadd.f32 %v2111, %v2370
      %v2411 = vadd.f32 %v2112, %v2375
      %v2412 = vadd.f32 %v2113, %v2378
      %v2413 = vld [vmem:[%s2114 + $0x1] sm:$0xff]
      %v2414 = vld [vmem:[%s2114 + $0x9] sm:$0xff]
      %v2415 = vld [vmem:[%s2114 + $0x19] sm:$0xff]
      %v2416 = vld [vmem:[%s2114 + $0x21] sm:$0xff]
      %v2417 = vld [vmem:[%s2114 + $0x31] sm:$0xff]
      %v2418 = vld [vmem:[%s2114 + $0x39] sm:$0xff]
      %v2419 = vld [vmem:[%s2114 + $0x49] sm:$0xff]
      %v2420 = vld [vmem:[%s2114 + $0x51] sm:$0xff]
      %v2421 = vld [vmem:[%s2114 + $0x61] sm:$0xff]
      %v2422 = vld [vmem:[%s2114 + $0x69] sm:$0xff]
      %v2423 = vld [vmem:[%s2114 + $0x79] sm:$0xff]
      %v2424 = vld [vmem:[%s2114 + $0x81] sm:$0xff]
      %v2425 = vld [vmem:[%s2114 + $0x91] sm:$0xff]
      %v2426 = vld [vmem:[%s2114 + $0x99] sm:$0xff]
      %v2427 = vld [vmem:[%s2114 + $0xa9] sm:$0xff]
      %v2428 = vld [vmem:[%s2114 + $0xb1] sm:$0xff]
      %v2429 = vld [vmem:[%s2114 + $0xc1] sm:$0xff]
      %v2430 = vld [vmem:[%s2114 + $0xc9] sm:$0xff]
      %v2431 = vld [vmem:[%s2114 + $0xd9] sm:$0xff]
      %v2432 = vld [vmem:[%s2114 + $0xe1] sm:$0xff]
      %v2433 = vld [vmem:[%s2114 + $0xf1] sm:$0xff]
      %v2434 = vld [vmem:[%s2114 + $0xf9] sm:$0xff]
      %v2435 = vld [vmem:[%s2114 + $0x109] sm:$0xff]
      %v2436 = vld [vmem:[%s2114 + $0x111] sm:$0xff]
      %v2437 = vld [vmem:[%s2114 + $0x121] sm:$0xff]
      %v2438 = vld [vmem:[%s2114 + $0x129] sm:$0xff]
      %v2439 = vld [vmem:[%s2114 + $0x139] sm:$0xff]
      %v2440 = vld [vmem:[%s2114 + $0x141] sm:$0xff]
      %v2441 = vld [vmem:[%s2114 + $0x151] sm:$0xff]
      %v2442 = vld [vmem:[%s2114 + $0x159] sm:$0xff]
      %v2443 = vld [vmem:[%s2114 + $0x169] sm:$0xff]
      %v2444 = vld [vmem:[%s2114 + $0x171] sm:$0xff]
      %v2445 = vpack.c.bf16 %v2414, %v2413
      %v2446 = vpack.c.bf16 %v2416, %v2415
      %v2447 = vpack.c.bf16 %v2418, %v2417
      %v2448 = vpack.c.bf16 %v2420, %v2419
      %v2449 = vpack.c.bf16 %v2422, %v2421
      %v2450 = vpack.c.bf16 %v2424, %v2423
      %v2451 = vpack.c.bf16 %v2426, %v2425
      %v2452 = vpack.c.bf16 %v2428, %v2427
      %v2453 = vpack.c.bf16 %v2430, %v2429
      %v2454 = vpack.c.bf16 %v2432, %v2431
      %v2455 = vpack.c.bf16 %v2434, %v2433
      %v2456 = vpack.c.bf16 %v2436, %v2435
      %v2457 = vpack.c.bf16 %v2438, %v2437
      %v2458 = vpack.c.bf16 %v2440, %v2439
      %v2459 = vpack.c.bf16 %v2442, %v2441
      %v2460 = vpack.c.bf16 %v2444, %v2443
      %s2461 = scalar_lea.vmem %s1, 56
      %v2462 = vld [vmem:[%s2461] sm:$0xf]
      %v2463 = vld [vmem:[%s2461 + $0x4] sm:$0xf]
      %v2466 = vunpack.c.l.b16 %v2462
      %v2467 = vunpack.c.l.b16 %v2463
      %v2468 = vpack.c.b16 %v2467, %v2466
      %v2471 = vsel %vm334, %v2445, 0
      %v2474 = vsel %vm334, %v2446, 0
      %v2477 = vsel %vm334, %v2447, 0
      %v2480 = vsel %vm334, %v2448, 0
      %v2483 = vsel %vm334, %v2449, 0
      %v2486 = vsel %vm334, %v2450, 0
      %v2489 = vsel %vm334, %v2451, 0
      %v2492 = vsel %vm334, %v2452, 0
      %v2495 = vsel %vm334, %v2453, 0
      %v2498 = vsel %vm334, %v2454, 0
      %v2501 = vsel %vm334, %v2455, 0
      %v2504 = vsel %vm334, %v2456, 0
      %v2507 = vsel %vm334, %v2457, 0
      %v2510 = vsel %vm334, %v2458, 0
      %v2513 = vsel %vm334, %v2459, 0
      %v2516 = vsel %vm334, %v2460, 0
      %2518 = vmatprep.subr.bf16.mxu0 0
      %2519 = vmatpush1.bf16.msra.mxu0 %v2468
      %2520 = vmatprep.subr.bf16.mxu0 0
      %2521 = vmatpush1.bf16.msra.mxu0 0
      %2522 = vmatprep.subr.bf16.mxu0 0
      %2523 = vmatpush1.bf16.msra.mxu0 0
      %2524 = vmatprep.subr.bf16.mxu0 0
      %2525 = vmatpush1.bf16.msra.mxu0 0
      %2526 = vmatprep.subr.bf16.mxu0 0
      %2527 = vmatpush1.bf16.msra.mxu0 0
      %2528 = vmatprep.subr.bf16.mxu0 0
      %2529 = vmatpush1.bf16.msra.mxu0 0
      %2530 = vmatprep.subr.bf16.mxu0 0
      %2531 = vmatpush1.bf16.msra.mxu0 0
      %2532 = vmatprep.subr.bf16.mxu0 0
      %2533 = vmatpush1.bf16.msra.mxu0 0
      %2534 = vmatprep.subr.bf16.mxu0 0
      %2535 = vmatpush1.bf16.msra.mxu0 0
      %2536 = vmatprep.subr.bf16.mxu0 0
      %2537 = vmatpush1.bf16.msra.mxu0 0
      %2538 = vmatprep.subr.bf16.mxu0 0
      %2539 = vmatpush1.bf16.msra.mxu0 0
      %2540 = vmatprep.subr.bf16.mxu0 0
      %2541 = vmatpush1.bf16.msra.mxu0 0
      %2542 = vmatprep.subr.bf16.mxu0 0
      %2543 = vmatpush1.bf16.msra.mxu0 0
      %2544 = vmatprep.subr.bf16.mxu0 0
      %2545 = vmatpush1.bf16.msra.mxu0 0
      %2546 = vmatprep.subr.bf16.mxu0 0
      %2547 = vmatpush1.bf16.msra.mxu0 0
      %2548 = vmatprep.subr.bf16.mxu0 0
      %2549 = vmatpush1.bf16.msra.mxu0 0
      %2550 = vmatprep.mubr.bf16.mxu0 0
      %2551 = vmatmul.mubr.bf16.gmra.mrb[0].mxu0 %v2471
      %v2552 = vpop.f32.mrb[0].mxu0
      %v2553 = vadd.f32 0.0, %v2552
      %v2554 = vpop.f32.mrb[0].mxu0
      %v2555 = vpop.f32.mrb[0].mxu0
      %v2556 = vadd.f32 0.0, %v2555
      %v2557 = vpop.f32.mrb[0].mxu0
      %2558 = vmatprep.mubr.bf16.mxu0 0
      %2559 = vmatmul.mubr.bf16.gmra.mrb[0].mxu0 %v2474
      %v2560 = vpop.f32.mrb[0].mxu0
      %v2561 = vadd.f32 0.0, %v2560
      %v2562 = vpop.f32.mrb[0].mxu0
      %v2563 = vpop.f32.mrb[0].mxu0
      %v2564 = vadd.f32 0.0, %v2563
      %v2565 = vpop.f32.mrb[0].mxu0
      %2566 = vmatprep.mubr.bf16.mxu0 0
      %2567 = vmatmul.mubr.bf16.gmra.mrb[0].mxu0 %v2477
      %v2568 = vpop.f32.mrb[0].mxu0
      %v2569 = vadd.f32 0.0, %v2568
      %v2570 = vpop.f32.mrb[0].mxu0
      %v2571 = vpop.f32.mrb[0].mxu0
      %v2572 = vadd.f32 0.0, %v2571
      %v2573 = vpop.f32.mrb[0].mxu0
      %2574 = vmatprep.mubr.bf16.mxu0 0
      %2575 = vmatmul.mubr.bf16.gmra.mrb[0].mxu0 %v2480
      %v2576 = vpop.f32.mrb[0].mxu0
      %v2577 = vadd.f32 0.0, %v2576
      %v2578 = vpop.f32.mrb[0].mxu0
      %v2579 = vpop.f32.mrb[0].mxu0
      %v2580 = vadd.f32 0.0, %v2579
      %v2581 = vpop.f32.mrb[0].mxu0
      %2582 = vmatprep.mubr.bf16.mxu0 0
      %2583 = vmatmul.mubr.bf16.gmra.mrb[0].mxu0 %v2483
      %v2584 = vpop.f32.mrb[0].mxu0
      %v2585 = vadd.f32 0.0, %v2584
      %v2586 = vpop.f32.mrb[0].mxu0
      %v2587 = vpop.f32.mrb[0].mxu0
      %v2588 = vadd.f32 0.0, %v2587
      %v2589 = vpop.f32.mrb[0].mxu0
      %2590 = vmatprep.mubr.bf16.mxu0 0
      %2591 = vmatmul.mubr.bf16.gmra.mrb[0].mxu0 %v2486
      %v2592 = vpop.f32.mrb[0].mxu0
      %v2593 = vadd.f32 0.0, %v2592
      %v2594 = vpop.f32.mrb[0].mxu0
      %v2595 = vpop.f32.mrb[0].mxu0
      %v2596 = vadd.f32 0.0, %v2595
      %v2597 = vpop.f32.mrb[0].mxu0
      %2598 = vmatprep.mubr.bf16.mxu0 0
      %2599 = vmatmul.mubr.bf16.gmra.mrb[0].mxu0 %v2489
      %v2600 = vpop.f32.mrb[0].mxu0
      %v2601 = vadd.f32 0.0, %v2600
      %v2602 = vpop.f32.mrb[0].mxu0
      %v2603 = vpop.f32.mrb[0].mxu0
      %v2604 = vadd.f32 0.0, %v2603
      %v2605 = vpop.f32.mrb[0].mxu0
      %2606 = vmatprep.mubr.bf16.mxu0 0
      %2607 = vmatmul.mubr.bf16.gmra.mrb[0].mxu0 %v2492
      %v2608 = vpop.f32.mrb[0].mxu0
      %v2609 = vadd.f32 0.0, %v2608
      %v2610 = vpop.f32.mrb[0].mxu0
      %v2611 = vpop.f32.mrb[0].mxu0
      %v2612 = vadd.f32 0.0, %v2611
      %v2613 = vpop.f32.mrb[0].mxu0
      %2614 = vmatprep.mubr.bf16.mxu0 0
      %2615 = vmatmul.mubr.bf16.gmra.mrb[0].mxu0 %v2495
      %v2616 = vpop.f32.mrb[0].mxu0
      %v2617 = vadd.f32 0.0, %v2616
      %v2618 = vpop.f32.mrb[0].mxu0
      %v2619 = vpop.f32.mrb[0].mxu0
      %v2620 = vadd.f32 0.0, %v2619
      %v2621 = vpop.f32.mrb[0].mxu0
      %2622 = vmatprep.mubr.bf16.mxu0 0
      %2623 = vmatmul.mubr.bf16.gmra.mrb[0].mxu0 %v2498
      %v2624 = vpop.f32.mrb[0].mxu0
      %v2625 = vadd.f32 0.0, %v2624
      %v2626 = vpop.f32.mrb[0].mxu0
      %v2627 = vpop.f32.mrb[0].mxu0
      %v2628 = vadd.f32 0.0, %v2627
      %v2629 = vpop.f32.mrb[0].mxu0
      %2630 = vmatprep.mubr.bf16.mxu0 0
      %2631 = vmatmul.mubr.bf16.gmra.mrb[0].mxu0 %v2501
      %v2632 = vpop.f32.mrb[0].mxu0
      %v2633 = vadd.f32 0.0, %v2632
      %v2634 = vpop.f32.mrb[0].mxu0
      %v2635 = vpop.f32.mrb[0].mxu0
      %v2636 = vadd.f32 0.0, %v2635
      %v2637 = vpop.f32.mrb[0].mxu0
      %2638 = vmatprep.mubr.bf16.mxu0 0
      %2639 = vmatmul.mubr.bf16.gmra.mrb[0].mxu0 %v2504
      %v2640 = vpop.f32.mrb[0].mxu0
      %v2641 = vadd.f32 0.0, %v2640
      %v2642 = vpop.f32.mrb[0].mxu0
      %v2643 = vpop.f32.mrb[0].mxu0
      %v2644 = vadd.f32 0.0, %v2643
      %v2645 = vpop.f32.mrb[0].mxu0
      %2646 = vmatprep.mubr.bf16.mxu0 0
      %2647 = vmatmul.mubr.bf16.gmra.mrb[0].mxu0 %v2507
      %v2648 = vpop.f32.mrb[0].mxu0
      %v2649 = vadd.f32 0.0, %v2648
      %v2650 = vpop.f32.mrb[0].mxu0
      %v2651 = vpop.f32.mrb[0].mxu0
      %v2652 = vadd.f32 0.0, %v2651
      %v2653 = vpop.f32.mrb[0].mxu0
      %2654 = vmatprep.mubr.bf16.mxu0 0
      %2655 = vmatmul.mubr.bf16.gmra.mrb[0].mxu0 %v2510
      %v2656 = vpop.f32.mrb[0].mxu0
      %v2657 = vadd.f32 0.0, %v2656
      %v2658 = vpop.f32.mrb[0].mxu0
      %v2659 = vpop.f32.mrb[0].mxu0
      %v2660 = vadd.f32 0.0, %v2659
      %v2661 = vpop.f32.mrb[0].mxu0
      %2662 = vmatprep.mubr.bf16.mxu0 0
      %2663 = vmatmul.mubr.bf16.gmra.mrb[0].mxu0 %v2513
      %v2664 = vpop.f32.mrb[0].mxu0
      %v2665 = vadd.f32 0.0, %v2664
      %v2666 = vpop.f32.mrb[0].mxu0
      %v2667 = vpop.f32.mrb[0].mxu0
      %v2668 = vadd.f32 0.0, %v2667
      %v2669 = vpop.f32.mrb[0].mxu0
      %2670 = vmatprep.mubr.bf16.mxu0 0
      %2671 = vmatmul.mubr.bf16.gmra.mrb[0].mxu0 %v2516
      %v2672 = vpop.f32.mrb[0].mxu0
      %v2673 = vadd.f32 0.0, %v2672
      %v2674 = vpop.f32.mrb[0].mxu0
      %v2675 = vpop.f32.mrb[0].mxu0
      %v2676 = vadd.f32 0.0, %v2675
      %v2677 = vpop.f32.mrb[0].mxu0
      %2678 = vdwg.mxu0
      %v2679 = vadd.f32 %v2381, %v2553
      %v2680 = vadd.f32 %v2382, %v2556
      %v2681 = vadd.f32 %v2383, %v2561
      %v2682 = vadd.f32 %v2384, %v2564
      %v2683 = vadd.f32 %v2385, %v2569
      %v2684 = vadd.f32 %v2386, %v2572
      %v2685 = vadd.f32 %v2387, %v2577
      %v2686 = vadd.f32 %v2388, %v2580
      %v2687 = vadd.f32 %v2389, %v2585
      %v2688 = vadd.f32 %v2390, %v2588
      %v2689 = vadd.f32 %v2391, %v2593
      %v2690 = vadd.f32 %v2392, %v2596
      %v2691 = vadd.f32 %v2393, %v2601
      %v2692 = vadd.f32 %v2394, %v2604
      %v2693 = vadd.f32 %v2395, %v2609
      %v2694 = vadd.f32 %v2396, %v2612
      %v2695 = vadd.f32 %v2397, %v2617
      %v2696 = vadd.f32 %v2398, %v2620
      %v2697 = vadd.f32 %v2399, %v2625
      %v2698 = vadd.f32 %v2400, %v2628
      %v2699 = vadd.f32 %v2401, %v2633
      %v2700 = vadd.f32 %v2402, %v2636
      %v2701 = vadd.f32 %v2403, %v2641
      %v2702 = vadd.f32 %v2404, %v2644
      %v2703 = vadd.f32 %v2405, %v2649
      %v2704 = vadd.f32 %v2406, %v2652
      %v2705 = vadd.f32 %v2407, %v2657
      %v2706 = vadd.f32 %v2408, %v2660
      %v2707 = vadd.f32 %v2409, %v2665
      %v2708 = vadd.f32 %v2410, %v2668
      %v2709 = vadd.f32 %v2411, %v2673
      %v2710 = vadd.f32 %v2412, %v2676
      %v2711 = vld [vmem:[%s2114 + $0x2] sm:$0xff]
      %v2712 = vld [vmem:[%s2114 + $0xa] sm:$0xff]
      %v2713 = vld [vmem:[%s2114 + $0x1a] sm:$0xff]
      %v2714 = vld [vmem:[%s2114 + $0x22] sm:$0xff]
      %v2715 = vld [vmem:[%s2114 + $0x32] sm:$0xff]
      %v2716 = vld [vmem:[%s2114 + $0x3a] sm:$0xff]
      %v2717 = vld [vmem:[%s2114 + $0x4a] sm:$0xff]
      %v2718 = vld [vmem:[%s2114 + $0x52] sm:$0xff]
      %v2719 = vld [vmem:[%s2114 + $0x62] sm:$0xff]
      %v2720 = vld [vmem:[%s2114 + $0x6a] sm:$0xff]
      %v2721 = vld [vmem:[%s2114 + $0x7a] sm:$0xff]
      %v2722 = vld [vmem:[%s2114 + $0x82] sm:$0xff]
      %v2723 = vld [vmem:[%s2114 + $0x92] sm:$0xff]
      %v2724 = vld [vmem:[%s2114 + $0x9a] sm:$0xff]
      %v2725 = vld [vmem:[%s2114 + $0xaa] sm:$0xff]
      %v2726 = vld [vmem:[%s2114 + $0xb2] sm:$0xff]
      %v2727 = vld [vmem:[%s2114 + $0xc2] sm:$0xff]
      %v2728 = vld [vmem:[%s2114 + $0xca] sm:$0xff]
      %v2729 = vld [vmem:[%s2114 + $0xda] sm:$0xff]
      %v2730 = vld [vmem:[%s2114 + $0xe2] sm:$0xff]
      %v2731 = vld [vmem:[%s2114 + $0xf2] sm:$0xff]
      %v2732 = vld [vmem:[%s2114 + $0xfa] sm:$0xff]
      %v2733 = vld [vmem:[%s2114 + $0x10a] sm:$0xff]
      %v2734 = vld [vmem:[%s2114 + $0x112] sm:$0xff]
      %v2735 = vld [vmem:[%s2114 + $0x122] sm:$0xff]
      %v2736 = vld [vmem:[%s2114 + $0x12a] sm:$0xff]
      %v2737 = vld [vmem:[%s2114 + $0x13a] sm:$0xff]
      %v2738 = vld [vmem:[%s2114 + $0x142] sm:$0xff]
      %v2739 = vld [vmem:[%s2114 + $0x152] sm:$0xff]
      %v2740 = vld [vmem:[%s2114 + $0x15a] sm:$0xff]
      %v2741 = vld [vmem:[%s2114 + $0x16a] sm:$0xff]
      %v2742 = vld [vmem:[%s2114 + $0x172] sm:$0xff]
      %v2743 = vpack.c.bf16 %v2712, %v2711
      %v2744 = vpack.c.bf16 %v2714, %v2713
      %v2745 = vpack.c.bf16 %v2716, %v2715
      %v2746 = vpack.c.bf16 %v2718, %v2717
      %v2747 = vpack.c.bf16 %v2720, %v2719
      %v2748 = vpack.c.bf16 %v2722, %v2721
      %v2749 = vpack.c.bf16 %v2724, %v2723
      %v2750 = vpack.c.bf16 %v2726, %v2725
      %v2751 = vpack.c.bf16 %v2728, %v2727
      %v2752 = vpack.c.bf16 %v2730, %v2729
      %v2753 = vpack.c.bf16 %v2732, %v2731
      %v2754 = vpack.c.bf16 %v2734, %v2733
      %v2755 = vpack.c.bf16 %v2736, %v2735
      %v2756 = vpack.c.bf16 %v2738, %v2737
      %v2757 = vpack.c.bf16 %v2740, %v2739
      %v2758 = vpack.c.bf16 %v2742, %v2741
      %s2759 = scalar_lea.vmem %s1, 64
      %v2760 = vld [vmem:[%s2759] sm:$0xf]
      %v2761 = vld [vmem:[%s2759 + $0x4] sm:$0xf]
      %v2764 = vunpack.c.l.b16 %v2760
      %v2765 = vunpack.c.l.b16 %v2761
      %v2766 = vpack.c.b16 %v2765, %v2764
      %v2769 = vsel %vm334, %v2743, 0
      %v2772 = vsel %vm334, %v2744, 0
      %v2775 = vsel %vm334, %v2745, 0
      %v2778 = vsel %vm334, %v2746, 0
      %v2781 = vsel %vm334, %v2747, 0
      %v2784 = vsel %vm334, %v2748, 0
      %v2787 = vsel %vm334, %v2749, 0
      %v2790 = vsel %vm334, %v2750, 0
      %v2793 = vsel %vm334, %v2751, 0
      %v2796 = vsel %vm334, %v2752, 0
      %v2799 = vsel %vm334, %v2753, 0
      %v2802 = vsel %vm334, %v2754, 0
      %v2805 = vsel %vm334, %v2755, 0
      %v2808 = vsel %vm334, %v2756, 0
      %v2811 = vsel %vm334, %v2757, 0
      %v2814 = vsel %vm334, %v2758, 0
      %2816 = vmatprep.subr.bf16.mxu0 0
      %2817 = vmatpush1.bf16.msra.mxu0 %v2766
      %2818 = vmatprep.subr.bf16.mxu0 0
      %2819 = vmatpush1.bf16.msra.mxu0 0
      %2820 = vmatprep.subr.bf16.mxu0 0
      %2821 = vmatpush1.bf16.msra.mxu0 0
      %2822 = vmatprep.subr.bf16.mxu0 0
      %2823 = vmatpush1.bf16.msra.mxu0 0
      %2824 = vmatprep.subr.bf16.mxu0 0
      %2825 = vmatpush1.bf16.msra.mxu0 0
      %2826 = vmatprep.subr.bf16.mxu0 0
      %2827 = vmatpush1.bf16.msra.mxu0 0
      %2828 = vmatprep.subr.bf16.mxu0 0
      %2829 = vmatpush1.bf16.msra.mxu0 0
      %2830 = vmatprep.subr.bf16.mxu0 0
      %2831 = vmatpush1.bf16.msra.mxu0 0
      %2832 = vmatprep.subr.bf16.mxu0 0
      %2833 = vmatpush1.bf16.msra.mxu0 0
      %2834 = vmatprep.subr.bf16.mxu0 0
      %2835 = vmatpush1.bf16.msra.mxu0 0
      %2836 = vmatprep.subr.bf16.mxu0 0
      %2837 = vmatpush1.bf16.msra.mxu0 0
      %2838 = vmatprep.subr.bf16.mxu0 0
      %2839 = vmatpush1.bf16.msra.mxu0 0
      %2840 = vmatprep.subr.bf16.mxu0 0
      %2841 = vmatpush1.bf16.msra.mxu0 0
      %2842 = vmatprep.subr.bf16.mxu0 0
      %2843 = vmatpush1.bf16.msra.mxu0 0
      %2844 = vmatprep.subr.bf16.mxu0 0
      %2845 = vmatpush1.bf16.msra.mxu0 0
      %2846 = vmatprep.subr.bf16.mxu0 0
      %2847 = vmatpush1.bf16.msra.mxu0 0
      %2848 = vmatprep.mubr.bf16.mxu0 0
      %2849 = vmatmul.mubr.bf16.gmra.mrb[0].mxu0 %v2769
      %v2850 = vpop.f32.mrb[0].mxu0
      %v2851 = vadd.f32 0.0, %v2850
      %v2852 = vpop.f32.mrb[0].mxu0
      %v2853 = vpop.f32.mrb[0].mxu0
      %v2854 = vadd.f32 0.0, %v2853
      %v2855 = vpop.f32.mrb[0].mxu0
      %2856 = vmatprep.mubr.bf16.mxu0 0
      %2857 = vmatmul.mubr.bf16.gmra.mrb[0].mxu0 %v2772
      %v2858 = vpop.f32.mrb[0].mxu0
      %v2859 = vadd.f32 0.0, %v2858
      %v2860 = vpop.f32.mrb[0].mxu0
      %v2861 = vpop.f32.mrb[0].mxu0
      %v2862 = vadd.f32 0.0, %v2861
      %v2863 = vpop.f32.mrb[0].mxu0
      %2864 = vmatprep.mubr.bf16.mxu0 0
      %2865 = vmatmul.mubr.bf16.gmra.mrb[0].mxu0 %v2775
      %v2866 = vpop.f32.mrb[0].mxu0
      %v2867 = vadd.f32 0.0, %v2866
      %v2868 = vpop.f32.mrb[0].mxu0
      %v2869 = vpop.f32.mrb[0].mxu0
      %v2870 = vadd.f32 0.0, %v2869
      %v2871 = vpop.f32.mrb[0].mxu0
      %2872 = vmatprep.mubr.bf16.mxu0 0
      %2873 = vmatmul.mubr.bf16.gmra.mrb[0].mxu0 %v2778
      %v2874 = vpop.f32.mrb[0].mxu0
      %v2875 = vadd.f32 0.0, %v2874
      %v2876 = vpop.f32.mrb[0].mxu0
      %v2877 = vpop.f32.mrb[0].mxu0
      %v2878 = vadd.f32 0.0, %v2877
      %v2879 = vpop.f32.mrb[0].mxu0
      %2880 = vmatprep.mubr.bf16.mxu0 0
      %2881 = vmatmul.mubr.bf16.gmra.mrb[0].mxu0 %v2781
      %v2882 = vpop.f32.mrb[0].mxu0
      %v2883 = vadd.f32 0.0, %v2882
      %v2884 = vpop.f32.mrb[0].mxu0
      %v2885 = vpop.f32.mrb[0].mxu0
      %v2886 = vadd.f32 0.0, %v2885
      %v2887 = vpop.f32.mrb[0].mxu0
      %2888 = vmatprep.mubr.bf16.mxu0 0
      %2889 = vmatmul.mubr.bf16.gmra.mrb[0].mxu0 %v2784
      %v2890 = vpop.f32.mrb[0].mxu0
      %v2891 = vadd.f32 0.0, %v2890
      %v2892 = vpop.f32.mrb[0].mxu0
      %v2893 = vpop.f32.mrb[0].mxu0
      %v2894 = vadd.f32 0.0, %v2893
      %v2895 = vpop.f32.mrb[0].mxu0
      %2896 = vmatprep.mubr.bf16.mxu0 0
      %2897 = vmatmul.mubr.bf16.gmra.mrb[0].mxu0 %v2787
      %v2898 = vpop.f32.mrb[0].mxu0
      %v2899 = vadd.f32 0.0, %v2898
      %v2900 = vpop.f32.mrb[0].mxu0
      %v2901 = vpop.f32.mrb[0].mxu0
      %v2902 = vadd.f32 0.0, %v2901
      %v2903 = vpop.f32.mrb[0].mxu0
      %2904 = vmatprep.mubr.bf16.mxu0 0
      %2905 = vmatmul.mubr.bf16.gmra.mrb[0].mxu0 %v2790
      %v2906 = vpop.f32.mrb[0].mxu0
      %v2907 = vadd.f32 0.0, %v2906
      %v2908 = vpop.f32.mrb[0].mxu0
      %v2909 = vpop.f32.mrb[0].mxu0
      %v2910 = vadd.f32 0.0, %v2909
      %v2911 = vpop.f32.mrb[0].mxu0
      %2912 = vmatprep.mubr.bf16.mxu0 0
      %2913 = vmatmul.mubr.bf16.gmra.mrb[0].mxu0 %v2793
      %v2914 = vpop.f32.mrb[0].mxu0
      %v2915 = vadd.f32 0.0, %v2914
      %v2916 = vpop.f32.mrb[0].mxu0
      %v2917 = vpop.f32.mrb[0].mxu0
      %v2918 = vadd.f32 0.0, %v2917
      %v2919 = vpop.f32.mrb[0].mxu0
      %2920 = vmatprep.mubr.bf16.mxu0 0
      %2921 = vmatmul.mubr.bf16.gmra.mrb[0].mxu0 %v2796
      %v2922 = vpop.f32.mrb[0].mxu0
      %v2923 = vadd.f32 0.0, %v2922
      %v2924 = vpop.f32.mrb[0].mxu0
      %v2925 = vpop.f32.mrb[0].mxu0
      %v2926 = vadd.f32 0.0, %v2925
      %v2927 = vpop.f32.mrb[0].mxu0
      %2928 = vmatprep.mubr.bf16.mxu0 0
      %2929 = vmatmul.mubr.bf16.gmra.mrb[0].mxu0 %v2799
      %v2930 = vpop.f32.mrb[0].mxu0
      %v2931 = vadd.f32 0.0, %v2930
      %v2932 = vpop.f32.mrb[0].mxu0
      %v2933 = vpop.f32.mrb[0].mxu0
      %v2934 = vadd.f32 0.0, %v2933
      %v2935 = vpop.f32.mrb[0].mxu0
      %2936 = vmatprep.mubr.bf16.mxu0 0
      %2937 = vmatmul.mubr.bf16.gmra.mrb[0].mxu0 %v2802
      %v2938 = vpop.f32.mrb[0].mxu0
      %v2939 = vadd.f32 0.0, %v2938
      %v2940 = vpop.f32.mrb[0].mxu0
      %v2941 = vpop.f32.mrb[0].mxu0
      %v2942 = vadd.f32 0.0, %v2941
      %v2943 = vpop.f32.mrb[0].mxu0
      %2944 = vmatprep.mubr.bf16.mxu0 0
      %2945 = vmatmul.mubr.bf16.gmra.mrb[0].mxu0 %v2805
      %v2946 = vpop.f32.mrb[0].mxu0
      %v2947 = vadd.f32 0.0, %v2946
      %v2948 = vpop.f32.mrb[0].mxu0
      %v2949 = vpop.f32.mrb[0].mxu0
      %v2950 = vadd.f32 0.0, %v2949
      %v2951 = vpop.f32.mrb[0].mxu0
      %2952 = vmatprep.mubr.bf16.mxu0 0
      %2953 = vmatmul.mubr.bf16.gmra.mrb[0].mxu0 %v2808
      %v2954 = vpop.f32.mrb[0].mxu0
      %v2955 = vadd.f32 0.0, %v2954
      %v2956 = vpop.f32.mrb[0].mxu0
      %v2957 = vpop.f32.mrb[0].mxu0
      %v2958 = vadd.f32 0.0, %v2957
      %v2959 = vpop.f32.mrb[0].mxu0
      %2960 = vmatprep.mubr.bf16.mxu0 0
      %2961 = vmatmul.mubr.bf16.gmra.mrb[0].mxu0 %v2811
      %v2962 = vpop.f32.mrb[0].mxu0
      %v2963 = vadd.f32 0.0, %v2962
      %v2964 = vpop.f32.mrb[0].mxu0
      %v2965 = vpop.f32.mrb[0].mxu0
      %v2966 = vadd.f32 0.0, %v2965
      %v2967 = vpop.f32.mrb[0].mxu0
      %2968 = vmatprep.mubr.bf16.mxu0 0
      %2969 = vmatmul.mubr.bf16.gmra.mrb[0].mxu0 %v2814
      %v2970 = vpop.f32.mrb[0].mxu0
      %v2971 = vadd.f32 0.0, %v2970
      %v2972 = vpop.f32.mrb[0].mxu0
      %v2973 = vpop.f32.mrb[0].mxu0
      %v2974 = vadd.f32 0.0, %v2973
      %v2975 = vpop.f32.mrb[0].mxu0
      %2976 = vdwg.mxu0
      %v2977 = vadd.f32 %v2679, %v2851
      %v2978 = vadd.f32 %v2680, %v2854
      %v2979 = vadd.f32 %v2681, %v2859
      %v2980 = vadd.f32 %v2682, %v2862
      %v2981 = vadd.f32 %v2683, %v2867
      %v2982 = vadd.f32 %v2684, %v2870
      %v2983 = vadd.f32 %v2685, %v2875
      %v2984 = vadd.f32 %v2686, %v2878
      %v2985 = vadd.f32 %v2687, %v2883
      %v2986 = vadd.f32 %v2688, %v2886
      %v2987 = vadd.f32 %v2689, %v2891
      %v2988 = vadd.f32 %v2690, %v2894
      %v2989 = vadd.f32 %v2691, %v2899
      %v2990 = vadd.f32 %v2692, %v2902
      %v2991 = vadd.f32 %v2693, %v2907
      %v2992 = vadd.f32 %v2694, %v2910
      %v2993 = vadd.f32 %v2695, %v2915
      %v2994 = vadd.f32 %v2696, %v2918
      %v2995 = vadd.f32 %v2697, %v2923
      %v2996 = vadd.f32 %v2698, %v2926
      %v2997 = vadd.f32 %v2699, %v2931
      %v2998 = vadd.f32 %v2700, %v2934
      %v2999 = vadd.f32 %v2701, %v2939
      %v3000 = vadd.f32 %v2702, %v2942
      %v3001 = vadd.f32 %v2703, %v2947
      %v3002 = vadd.f32 %v2704, %v2950
      %v3003 = vadd.f32 %v2705, %v2955
      %v3004 = vadd.f32 %v2706, %v2958
      %v3005 = vadd.f32 %v2707, %v2963
      %v3006 = vadd.f32 %v2708, %v2966
      %v3007 = vadd.f32 %v2709, %v2971
      %v3008 = vadd.f32 %v2710, %v2974
      %v3009 = vld [vmem:[%s2] sm:$0x1]
      %v3011 = vlaneseq
      %v3012 = vshrl.u32 %v3011, 7
      %v3013 = vsub.s32 0, %v3012
      %v3014 = vrot.slane %v3009, %v3013
      %v3016 = vadd.f32 %v2977, %v3014
      %v3017 = vadd.f32 %v2978, %v3014
      %v3018 = vadd.f32 %v2979, %v3014
      %v3019 = vadd.f32 %v2980, %v3014
      %v3020 = vadd.f32 %v2981, %v3014
      %v3021 = vadd.f32 %v2982, %v3014
      %v3022 = vadd.f32 %v2983, %v3014
      %v3023 = vadd.f32 %v2984, %v3014
      %v3024 = vadd.f32 %v2985, %v3014
      %v3025 = vadd.f32 %v2986, %v3014
      %v3026 = vadd.f32 %v2987, %v3014
      %v3027 = vadd.f32 %v2988, %v3014
      %v3028 = vadd.f32 %v2989, %v3014
      %v3029 = vadd.f32 %v2990, %v3014
      %v3030 = vadd.f32 %v2991, %v3014
      %v3031 = vadd.f32 %v2992, %v3014
      %v3032 = vadd.f32 %v2993, %v3014
      %v3033 = vadd.f32 %v2994, %v3014
      %v3034 = vadd.f32 %v2995, %v3014
      %v3035 = vadd.f32 %v2996, %v3014
      %v3036 = vadd.f32 %v2997, %v3014
      %v3037 = vadd.f32 %v2998, %v3014
      %v3038 = vadd.f32 %v2999, %v3014
      %v3039 = vadd.f32 %v3000, %v3014
      %v3040 = vadd.f32 %v3001, %v3014
      %v3041 = vadd.f32 %v3002, %v3014
      %v3042 = vadd.f32 %v3003, %v3014
      %v3043 = vadd.f32 %v3004, %v3014
      %v3044 = vadd.f32 %v3005, %v3014
      %v3045 = vadd.f32 %v3006, %v3014
      %v3046 = vadd.f32 %v3007, %v3014
      %v3047 = vadd.f32 %v3008, %v3014
      %v3048 = vmax.f32 %v3016, 0.0
      %v3049 = vmax.f32 %v3017, 0.0
      %v3050 = vmax.f32 %v3018, 0.0
      %v3051 = vmax.f32 %v3019, 0.0
      %v3052 = vmax.f32 %v3020, 0.0
      %v3053 = vmax.f32 %v3021, 0.0
      %v3054 = vmax.f32 %v3022, 0.0
      %v3055 = vmax.f32 %v3023, 0.0
      %v3056 = vmax.f32 %v3024, 0.0
      %v3057 = vmax.f32 %v3025, 0.0
      %v3058 = vmax.f32 %v3026, 0.0
      %v3059 = vmax.f32 %v3027, 0.0
      %v3060 = vmax.f32 %v3028, 0.0
      %v3061 = vmax.f32 %v3029, 0.0
      %v3062 = vmax.f32 %v3030, 0.0
      %v3063 = vmax.f32 %v3031, 0.0
      %v3064 = vmax.f32 %v3032, 0.0
      %v3065 = vmax.f32 %v3033, 0.0
      %v3066 = vmax.f32 %v3034, 0.0
      %v3067 = vmax.f32 %v3035, 0.0
      %v3068 = vmax.f32 %v3036, 0.0
      %v3069 = vmax.f32 %v3037, 0.0
      %v3070 = vmax.f32 %v3038, 0.0
      %v3071 = vmax.f32 %v3039, 0.0
      %v3072 = vmax.f32 %v3040, 0.0
      %v3073 = vmax.f32 %v3041, 0.0
      %v3074 = vmax.f32 %v3042, 0.0
      %v3075 = vmax.f32 %v3043, 0.0
      %v3076 = vmax.f32 %v3044, 0.0
      %v3077 = vmax.f32 %v3045, 0.0
      %v3078 = vmax.f32 %v3046, 0.0
      %v3079 = vmax.f32 %v3047, 0.0
      %3080 = vst.msk [vmem:[#allocation3] sm:$0xff] %vm334, 0.0
      %3081 = vst.msk [vmem:[#allocation3 + $0x8] sm:$0xff] %vm334, 0.0
      %3082 = vst.msk [vmem:[#allocation3 + $0x10] sm:$0x3] %vm337, 0.0
      %3083 = vst.msk [vmem:[#allocation3 + $0x18] sm:$0xff] %vm334, 0.0
      %3084 = vst.msk [vmem:[#allocation3 + $0x20] sm:$0xff] %vm334, 0.0
      %3085 = vst.msk [vmem:[#allocation3 + $0x28] sm:$0x3] %vm337, 0.0
      %3086 = vst.msk [vmem:[#allocation3 + $0x30] sm:$0xff] %vm334, 0.0
      %3087 = vst.msk [vmem:[#allocation3 + $0x38] sm:$0xff] %vm334, 0.0
      %3088 = vst.msk [vmem:[#allocation3 + $0x40] sm:$0x3] %vm337, 0.0
      %3089 = vst.msk [vmem:[#allocation3 + $0x48] sm:$0xff] %vm334, 0.0
      %3090 = vst.msk [vmem:[#allocation3 + $0x50] sm:$0xff] %vm334, 0.0
      %3091 = vst.msk [vmem:[#allocation3 + $0x58] sm:$0x3] %vm337, 0.0
      %3092 = vst.msk [vmem:[#allocation3 + $0x60] sm:$0xff] %vm334, 0.0
      %3093 = vst.msk [vmem:[#allocation3 + $0x68] sm:$0xff] %vm334, 0.0
      %3094 = vst.msk [vmem:[#allocation3 + $0x70] sm:$0x3] %vm337, 0.0
      %3095 = vst.msk [vmem:[#allocation3 + $0x78] sm:$0xff] %vm334, 0.0
      %3096 = vst.msk [vmem:[#allocation3 + $0x80] sm:$0xff] %vm334, 0.0
      %3097 = vst.msk [vmem:[#allocation3 + $0x88] sm:$0x3] %vm337, 0.0
      %3098 = vst.msk [vmem:[#allocation3 + $0x90] sm:$0xff] %vm334, 0.0
      %3099 = vst.msk [vmem:[#allocation3 + $0x98] sm:$0xff] %vm334, 0.0
      %3100 = vst.msk [vmem:[#allocation3 + $0xa0] sm:$0x3] %vm337, 0.0
      %3101 = vst.msk [vmem:[#allocation3 + $0xa8] sm:$0xff] %vm334, 0.0
      %3102 = vst.msk [vmem:[#allocation3 + $0xb0] sm:$0xff] %vm334, 0.0
      %3103 = vst.msk [vmem:[#allocation3 + $0xb8] sm:$0x3] %vm337, 0.0
      %3104 = vst.msk [vmem:[#allocation3 + $0xc0] sm:$0xff] %vm334, 0.0
      %3105 = vst.msk [vmem:[#allocation3 + $0xc8] sm:$0xff] %vm334, 0.0
      %3106 = vst.msk [vmem:[#allocation3 + $0xd0] sm:$0x3] %vm337, 0.0
      %3107 = vst.msk [vmem:[#allocation3 + $0xd8] sm:$0xff] %vm334, 0.0
      %3108 = vst.msk [vmem:[#allocation3 + $0xe0] sm:$0xff] %vm334, 0.0
      %3109 = vst.msk [vmem:[#allocation3 + $0xe8] sm:$0x3] %vm337, 0.0
      %3110 = vst.msk [vmem:[#allocation3 + $0xf0] sm:$0xff] %vm334, 0.0
      %3111 = vst.msk [vmem:[#allocation3 + $0xf8] sm:$0xff] %vm334, 0.0
      %3112 = vst.msk [vmem:[#allocation3 + $0x100] sm:$0x3] %vm337, 0.0
      %3113 = vst.msk [vmem:[#allocation3 + $0x108] sm:$0xff] %vm334, 0.0
      %3114 = vst.msk [vmem:[#allocation3 + $0x110] sm:$0xff] %vm334, 0.0
      %3115 = vst.msk [vmem:[#allocation3 + $0x118] sm:$0x3] %vm337, 0.0
      %3116 = vst.msk [vmem:[#allocation3 + $0x120] sm:$0xff] %vm334, 0.0
      %3117 = vst.msk [vmem:[#allocation3 + $0x128] sm:$0xff] %vm334, 0.0
      %3118 = vst.msk [vmem:[#allocation3 + $0x130] sm:$0x3] %vm337, 0.0
      %3119 = vst.msk [vmem:[#allocation3 + $0x138] sm:$0xff] %vm334, 0.0
      %3120 = vst.msk [vmem:[#allocation3 + $0x140] sm:$0xff] %vm334, 0.0
      %3121 = vst.msk [vmem:[#allocation3 + $0x148] sm:$0x3] %vm337, 0.0
      %3122 = vst.msk [vmem:[#allocation3 + $0x150] sm:$0xff] %vm334, 0.0
      %3123 = vst.msk [vmem:[#allocation3 + $0x158] sm:$0xff] %vm334, 0.0
      %3124 = vst.msk [vmem:[#allocation3 + $0x160] sm:$0x3] %vm337, 0.0
      %3125 = vst.msk [vmem:[#allocation3 + $0x168] sm:$0xff] %vm334, 0.0
      %3126 = vst.msk [vmem:[#allocation3 + $0x170] sm:$0xff] %vm334, 0.0
      %3127 = vst.msk [vmem:[#allocation3 + $0x178] sm:$0x3] %vm337, 0.0
      %3128 = vst.msk [vmem:[#allocation3 + $0x180] sm:$0xff] %vm334, 0.0
      %3129 = vst.msk [vmem:[#allocation3 + $0x188] sm:$0xff] %vm334, 0.0
      %3130 = vst.msk [vmem:[#allocation3 + $0x190] sm:$0x3] %vm337, 0.0
      %3131 = vst.msk [vmem:[#allocation3 + $0x198] sm:$0xff] %vm334, 0.0
      %3132 = vst.msk [vmem:[#allocation3 + $0x1a0] sm:$0xff] %vm334, 0.0
      %3133 = vst.msk [vmem:[#allocation3 + $0x1a8] sm:$0x3] %vm337, 0.0
      %s3134 = scalar_lea.vmem [#allocation3], 24
      %3135 = vst.msk [vmem:[%s3134 + $0x1] sm:$0xff] %vm334, %v3048
      %3136 = vst.msk [vmem:[%s3134 + $0x9] sm:$0xff] %vm334, %v3049
      %3137 = vst.msk [vmem:[%s3134 + $0x19] sm:$0xff] %vm334, %v3050
      %3138 = vst.msk [vmem:[%s3134 + $0x21] sm:$0xff] %vm334, %v3051
      %3139 = vst.msk [vmem:[%s3134 + $0x31] sm:$0xff] %vm334, %v3052
      %3140 = vst.msk [vmem:[%s3134 + $0x39] sm:$0xff] %vm334, %v3053
      %3141 = vst.msk [vmem:[%s3134 + $0x49] sm:$0xff] %vm334, %v3054
      %3142 = vst.msk [vmem:[%s3134 + $0x51] sm:$0xff] %vm334, %v3055
      %3143 = vst.msk [vmem:[%s3134 + $0x61] sm:$0xff] %vm334, %v3056
      %3144 = vst.msk [vmem:[%s3134 + $0x69] sm:$0xff] %vm334, %v3057
      %3145 = vst.msk [vmem:[%s3134 + $0x79] sm:$0xff] %vm334, %v3058
      %3146 = vst.msk [vmem:[%s3134 + $0x81] sm:$0xff] %vm334, %v3059
      %3147 = vst.msk [vmem:[%s3134 + $0x91] sm:$0xff] %vm334, %v3060
      %3148 = vst.msk [vmem:[%s3134 + $0x99] sm:$0xff] %vm334, %v3061
      %3149 = vst.msk [vmem:[%s3134 + $0xa9] sm:$0xff] %vm334, %v3062
      %3150 = vst.msk [vmem:[%s3134 + $0xb1] sm:$0xff] %vm334, %v3063
      %3151 = vst.msk [vmem:[%s3134 + $0xc1] sm:$0xff] %vm334, %v3064
      %3152 = vst.msk [vmem:[%s3134 + $0xc9] sm:$0xff] %vm334, %v3065
      %3153 = vst.msk [vmem:[%s3134 + $0xd9] sm:$0xff] %vm334, %v3066
      %3154 = vst.msk [vmem:[%s3134 + $0xe1] sm:$0xff] %vm334, %v3067
      %3155 = vst.msk [vmem:[%s3134 + $0xf1] sm:$0xff] %vm334, %v3068
      %3156 = vst.msk [vmem:[%s3134 + $0xf9] sm:$0xff] %vm334, %v3069
      %3157 = vst.msk [vmem:[%s3134 + $0x109] sm:$0xff] %vm334, %v3070
      %3158 = vst.msk [vmem:[%s3134 + $0x111] sm:$0xff] %vm334, %v3071
      %3159 = vst.msk [vmem:[%s3134 + $0x121] sm:$0xff] %vm334, %v3072
      %3160 = vst.msk [vmem:[%s3134 + $0x129] sm:$0xff] %vm334, %v3073
      %3161 = vst.msk [vmem:[%s3134 + $0x139] sm:$0xff] %vm334, %v3074
      %3162 = vst.msk [vmem:[%s3134 + $0x141] sm:$0xff] %vm334, %v3075
      %3163 = vst.msk [vmem:[%s3134 + $0x151] sm:$0xff] %vm334, %v3076
      %3164 = vst.msk [vmem:[%s3134 + $0x159] sm:$0xff] %vm334, %v3077
      %3165 = vst.msk [vmem:[%s3134 + $0x169] sm:$0xff] %vm334, %v3078
      %3166 = vst.msk [vmem:[%s3134 + $0x171] sm:$0xff] %vm334, %v3079
      %v3167 = vld [vmem:[#allocation3] sm:$0xff]
      %v3168 = vld [vmem:[#allocation3 + $0x8] sm:$0xff]
      %v3169 = vld [vmem:[#allocation3 + $0x18] sm:$0xff]
      %v3170 = vld [vmem:[#allocation3 + $0x20] sm:$0xff]
      %v3171 = vld [vmem:[#allocation3 + $0x30] sm:$0xff]
      %v3172 = vld [vmem:[#allocation3 + $0x38] sm:$0xff]
      %v3173 = vld [vmem:[#allocation3 + $0x48] sm:$0xff]
      %v3174 = vld [vmem:[#allocation3 + $0x50] sm:$0xff]
      %v3175 = vld [vmem:[#allocation3 + $0x60] sm:$0xff]
      %v3176 = vld [vmem:[#allocation3 + $0x68] sm:$0xff]
      %v3177 = vld [vmem:[#allocation3 + $0x78] sm:$0xff]
      %v3178 = vld [vmem:[#allocation3 + $0x80] sm:$0xff]
      %v3179 = vld [vmem:[#allocation3 + $0x90] sm:$0xff]
      %v3180 = vld [vmem:[#allocation3 + $0x98] sm:$0xff]
      %v3181 = vld [vmem:[#allocation3 + $0xa8] sm:$0xff]
      %v3182 = vld [vmem:[#allocation3 + $0xb0] sm:$0xff]
      %v3183 = vld [vmem:[#allocation3 + $0xc0] sm:$0xff]
      %v3184 = vld [vmem:[#allocation3 + $0xc8] sm:$0xff]
      %v3185 = vld [vmem:[#allocation3 + $0xd8] sm:$0xff]
      %v3186 = vld [vmem:[#allocation3 + $0xe0] sm:$0xff]
      %v3187 = vld [vmem:[#allocation3 + $0xf0] sm:$0xff]
      %v3188 = vld [vmem:[#allocation3 + $0xf8] sm:$0xff]
      %v3189 = vld [vmem:[#allocation3 + $0x108] sm:$0xff]
      %v3190 = vld [vmem:[#allocation3 + $0x110] sm:$0xff]
      %v3191 = vld [vmem:[#allocation3 + $0x120] sm:$0xff]
      %v3192 = vld [vmem:[#allocation3 + $0x128] sm:$0xff]
      %v3193 = vld [vmem:[#allocation3 + $0x138] sm:$0xff]
      %v3194 = vld [vmem:[#allocation3 + $0x140] sm:$0xff]
      %v3195 = vld [vmem:[#allocation3 + $0x150] sm:$0xff]
      %v3196 = vld [vmem:[#allocation3 + $0x158] sm:$0xff]
      %v3197 = vld [vmem:[#allocation3 + $0x168] sm:$0xff]
      %v3198 = vld [vmem:[#allocation3 + $0x170] sm:$0xff]
      %v3199 = vpack.c.bf16 %v3168, %v3167
      %v3200 = vpack.c.bf16 %v3170, %v3169
      %v3201 = vpack.c.bf16 %v3172, %v3171
      %v3202 = vpack.c.bf16 %v3174, %v3173
      %v3203 = vpack.c.bf16 %v3176, %v3175
      %v3204 = vpack.c.bf16 %v3178, %v3177
      %v3205 = vpack.c.bf16 %v3180, %v3179
      %v3206 = vpack.c.bf16 %v3182, %v3181
      %v3207 = vpack.c.bf16 %v3184, %v3183
      %v3208 = vpack.c.bf16 %v3186, %v3185
      %v3209 = vpack.c.bf16 %v3188, %v3187
      %v3210 = vpack.c.bf16 %v3190, %v3189
      %v3211 = vpack.c.bf16 %v3192, %v3191
      %v3212 = vpack.c.bf16 %v3194, %v3193
      %v3213 = vpack.c.bf16 %v3196, %v3195
      %v3214 = vpack.c.bf16 %v3198, %v3197
      %v3215 = vld [vmem:[%s3] sm:$0xf]
      %v3216 = vld [vmem:[%s3 + $0x4] sm:$0xf]
      %v3217 = vld [vmem:[#allocation3 + $0x1] sm:$0xff]
      %v3218 = vld [vmem:[#allocation3 + $0x9] sm:$0xff]
      %v3219 = vld [vmem:[#allocation3 + $0x19] sm:$0xff]
      %v3220 = vld [vmem:[#allocation3 + $0x21] sm:$0xff]
      %v3221 = vld [vmem:[#allocation3 + $0x31] sm:$0xff]
      %v3222 = vld [vmem:[#allocation3 + $0x39] sm:$0xff]
      %v3223 = vld [vmem:[#allocation3 + $0x49] sm:$0xff]
      %v3224 = vld [vmem:[#allocation3 + $0x51] sm:$0xff]
      %v3225 = vld [vmem:[#allocation3 + $0x61] sm:$0xff]
      %v3226 = vld [vmem:[#allocation3 + $0x69] sm:$0xff]
      %v3227 = vld [vmem:[#allocation3 + $0x79] sm:$0xff]
      %v3228 = vld [vmem:[#allocation3 + $0x81] sm:$0xff]
      %v3229 = vld [vmem:[#allocation3 + $0x91] sm:$0xff]
      %v3230 = vld [vmem:[#allocation3 + $0x99] sm:$0xff]
      %v3231 = vld [vmem:[#allocation3 + $0xa9] sm:$0xff]
      %v3232 = vld [vmem:[#allocation3 + $0xb1] sm:$0xff]
      %v3233 = vld [vmem:[#allocation3 + $0xc1] sm:$0xff]
      %v3234 = vld [vmem:[#allocation3 + $0xc9] sm:$0xff]
      %v3235 = vld [vmem:[#allocation3 + $0xd9] sm:$0xff]
      %v3236 = vld [vmem:[#allocation3 + $0xe1] sm:$0xff]
      %v3237 = vld [vmem:[#allocation3 + $0xf1] sm:$0xff]
      %v3238 = vld [vmem:[#allocation3 + $0xf9] sm:$0xff]
      %v3239 = vld [vmem:[#allocation3 + $0x109] sm:$0xff]
      %v3240 = vld [vmem:[#allocation3 + $0x111] sm:$0xff]
      %v3241 = vld [vmem:[#allocation3 + $0x121] sm:$0xff]
      %v3242 = vld [vmem:[#allocation3 + $0x129] sm:$0xff]
      %v3243 = vld [vmem:[#allocation3 + $0x139] sm:$0xff]
      %v3244 = vld [vmem:[#allocation3 + $0x141] sm:$0xff]
      %v3245 = vld [vmem:[#allocation3 + $0x151] sm:$0xff]
      %v3246 = vld [vmem:[#allocation3 + $0x159] sm:$0xff]
      %v3247 = vld [vmem:[#allocation3 + $0x169] sm:$0xff]
      %v3248 = vld [vmem:[#allocation3 + $0x171] sm:$0xff]
      %v3249 = vpack.c.bf16 %v3218, %v3217
      %v3250 = vpack.c.bf16 %v3220, %v3219
      %v3251 = vpack.c.bf16 %v3222, %v3221
      %v3252 = vpack.c.bf16 %v3224, %v3223
      %v3253 = vpack.c.bf16 %v3226, %v3225
      %v3254 = vpack.c.bf16 %v3228, %v3227
      %v3255 = vpack.c.bf16 %v3230, %v3229
      %v3256 = vpack.c.bf16 %v3232, %v3231
      %v3257 = vpack.c.bf16 %v3234, %v3233
      %v3258 = vpack.c.bf16 %v3236, %v3235
      %v3259 = vpack.c.bf16 %v3238, %v3237
      %v3260 = vpack.c.bf16 %v3240, %v3239
      %v3261 = vpack.c.bf16 %v3242, %v3241
      %v3262 = vpack.c.bf16 %v3244, %v3243
      %v3263 = vpack.c.bf16 %v3246, %v3245
      %v3264 = vpack.c.bf16 %v3248, %v3247
      %s3265 = scalar_lea.vmem %s3, 8
      %v3266 = vld [vmem:[%s3265] sm:$0xf]
      %v3267 = vld [vmem:[%s3265 + $0x4] sm:$0xf]
      %v3270 = vunpack.c.l.b16 %v3266
      %v3271 = vunpack.c.l.b16 %v3267
      %v3272 = vpack.c.b16 %v3271, %v3270
      %v3275 = vsel %vm334, %v3249, 0
      %v3278 = vsel %vm334, %v3250, 0
      %v3281 = vsel %vm334, %v3251, 0
      %v3284 = vsel %vm334, %v3252, 0
      %v3287 = vsel %vm334, %v3253, 0
      %v3290 = vsel %vm334, %v3254, 0
      %v3293 = vsel %vm334, %v3255, 0
      %v3296 = vsel %vm334, %v3256, 0
      %v3299 = vsel %vm334, %v3257, 0
      %v3302 = vsel %vm334, %v3258, 0
      %v3305 = vsel %vm334, %v3259, 0
      %v3308 = vsel %vm334, %v3260, 0
      %v3311 = vsel %vm334, %v3261, 0
      %v3314 = vsel %vm334, %v3262, 0
      %v3317 = vsel %vm334, %v3263, 0
      %v3320 = vsel %vm334, %v3264, 0
      %3322 = vmatprep.subr.bf16.mxu0 0
      %3323 = vmatpush1.bf16.msra.mxu0 %v3272
      %3324 = vmatprep.subr.bf16.mxu0 0
      %3325 = vmatpush1.bf16.msra.mxu0 0
      %3326 = vmatprep.subr.bf16.mxu0 0
      %3327 = vmatpush1.bf16.msra.mxu0 0
      %3328 = vmatprep.subr.bf16.mxu0 0
      %3329 = vmatpush1.bf16.msra.mxu0 0
      %3330 = vmatprep.subr.bf16.mxu0 0
      %3331 = vmatpush1.bf16.msra.mxu0 0
      %3332 = vmatprep.subr.bf16.mxu0 0
      %3333 = vmatpush1.bf16.msra.mxu0 0
      %3334 = vmatprep.subr.bf16.mxu0 0
      %3335 = vmatpush1.bf16.msra.mxu0 0
      %3336 = vmatprep.subr.bf16.mxu0 0
      %3337 = vmatpush1.bf16.msra.mxu0 0
      %3338 = vmatprep.subr.bf16.mxu0 0
      %3339 = vmatpush1.bf16.msra.mxu0 0
      %3340 = vmatprep.subr.bf16.mxu0 0
      %3341 = vmatpush1.bf16.msra.mxu0 0
      %3342 = vmatprep.subr.bf16.mxu0 0
      %3343 = vmatpush1.bf16.msra.mxu0 0
      %3344 = vmatprep.subr.bf16.mxu0 0
      %3345 = vmatpush1.bf16.msra.mxu0 0
      %3346 = vmatprep.subr.bf16.mxu0 0
      %3347 = vmatpush1.bf16.msra.mxu0 0
      %3348 = vmatprep.subr.bf16.mxu0 0
      %3349 = vmatpush1.bf16.msra.mxu0 0
      %3350 = vmatprep.subr.bf16.mxu0 0
      %3351 = vmatpush1.bf16.msra.mxu0 0
      %3352 = vmatprep.subr.bf16.mxu0 0
      %3353 = vmatpush1.bf16.msra.mxu0 0
      %3354 = vmatprep.mubr.bf16.mxu0 0
      %3355 = vmatmul.mubr.bf16.gmra.mrb[0].mxu0 %v3275
      %v3356 = vpop.f32.mrb[0].mxu0
      %v3357 = vadd.f32 0.0, %v3356
      %v3358 = vpop.f32.mrb[0].mxu0
      %v3359 = vpop.f32.mrb[0].mxu0
      %v3360 = vadd.f32 0.0, %v3359
      %v3361 = vpop.f32.mrb[0].mxu0
      %3362 = vmatprep.mubr.bf16.mxu0 0
      %3363 = vmatmul.mubr.bf16.gmra.mrb[0].mxu0 %v3278
      %v3364 = vpop.f32.mrb[0].mxu0
      %v3365 = vadd.f32 0.0, %v3364
      %v3366 = vpop.f32.mrb[0].mxu0
      %v3367 = vpop.f32.mrb[0].mxu0
      %v3368 = vadd.f32 0.0, %v3367
      %v3369 = vpop.f32.mrb[0].mxu0
      %3370 = vmatprep.mubr.bf16.mxu0 0
      %3371 = vmatmul.mubr.bf16.gmra.mrb[0].mxu0 %v3281
      %v3372 = vpop.f32.mrb[0].mxu0
      %v3373 = vadd.f32 0.0, %v3372
      %v3374 = vpop.f32.mrb[0].mxu0
      %v3375 = vpop.f32.mrb[0].mxu0
      %v3376 = vadd.f32 0.0, %v3375
      %v3377 = vpop.f32.mrb[0].mxu0
      %3378 = vmatprep.mubr.bf16.mxu0 0
      %3379 = vmatmul.mubr.bf16.gmra.mrb[0].mxu0 %v3284
      %v3380 = vpop.f32.mrb[0].mxu0
      %v3381 = vadd.f32 0.0, %v3380
      %v3382 = vpop.f32.mrb[0].mxu0
      %v3383 = vpop.f32.mrb[0].mxu0
      %v3384 = vadd.f32 0.0, %v3383
      %v3385 = vpop.f32.mrb[0].mxu0
      %3386 = vmatprep.mubr.bf16.mxu0 0
      %3387 = vmatmul.mubr.bf16.gmra.mrb[0].mxu0 %v3287
      %v3388 = vpop.f32.mrb[0].mxu0
      %v3389 = vadd.f32 0.0, %v3388
      %v3390 = vpop.f32.mrb[0].mxu0
      %v3391 = vpop.f32.mrb[0].mxu0
      %v3392 = vadd.f32 0.0, %v3391
      %v3393 = vpop.f32.mrb[0].mxu0
      %3394 = vmatprep.mubr.bf16.mxu0 0
      %3395 = vmatmul.mubr.bf16.gmra.mrb[0].mxu0 %v3290
      %v3396 = vpop.f32.mrb[0].mxu0
      %v3397 = vadd.f32 0.0, %v3396
      %v3398 = vpop.f32.mrb[0].mxu0
      %v3399 = vpop.f32.mrb[0].mxu0
      %v3400 = vadd.f32 0.0, %v3399
      %v3401 = vpop.f32.mrb[0].mxu0
      %3402 = vmatprep.mubr.bf16.mxu0 0
      %3403 = vmatmul.mubr.bf16.gmra.mrb[0].mxu0 %v3293
      %v3404 = vpop.f32.mrb[0].mxu0
      %v3405 = vadd.f32 0.0, %v3404
      %v3406 = vpop.f32.mrb[0].mxu0
      %v3407 = vpop.f32.mrb[0].mxu0
      %v3408 = vadd.f32 0.0, %v3407
      %v3409 = vpop.f32.mrb[0].mxu0
      %3410 = vmatprep.mubr.bf16.mxu0 0
      %3411 = vmatmul.mubr.bf16.gmra.mrb[0].mxu0 %v3296
      %v3412 = vpop.f32.mrb[0].mxu0
      %v3413 = vadd.f32 0.0, %v3412
      %v3414 = vpop.f32.mrb[0].mxu0
      %v3415 = vpop.f32.mrb[0].mxu0
      %v3416 = vadd.f32 0.0, %v3415
      %v3417 = vpop.f32.mrb[0].mxu0
      %3418 = vmatprep.mubr.bf16.mxu0 0
      %3419 = vmatmul.mubr.bf16.gmra.mrb[0].mxu0 %v3299
      %v3420 = vpop.f32.mrb[0].mxu0
      %v3421 = vadd.f32 0.0, %v3420
      %v3422 = vpop.f32.mrb[0].mxu0
      %v3423 = vpop.f32.mrb[0].mxu0
      %v3424 = vadd.f32 0.0, %v3423
      %v3425 = vpop.f32.mrb[0].mxu0
      %3426 = vmatprep.mubr.bf16.mxu0 0
      %3427 = vmatmul.mubr.bf16.gmra.mrb[0].mxu0 %v3302
      %v3428 = vpop.f32.mrb[0].mxu0
      %v3429 = vadd.f32 0.0, %v3428
      %v3430 = vpop.f32.mrb[0].mxu0
      %v3431 = vpop.f32.mrb[0].mxu0
      %v3432 = vadd.f32 0.0, %v3431
      %v3433 = vpop.f32.mrb[0].mxu0
      %3434 = vmatprep.mubr.bf16.mxu0 0
      %3435 = vmatmul.mubr.bf16.gmra.mrb[0].mxu0 %v3305
      %v3436 = vpop.f32.mrb[0].mxu0
      %v3437 = vadd.f32 0.0, %v3436
      %v3438 = vpop.f32.mrb[0].mxu0
      %v3439 = vpop.f32.mrb[0].mxu0
      %v3440 = vadd.f32 0.0, %v3439
      %v3441 = vpop.f32.mrb[0].mxu0
      %3442 = vmatprep.mubr.bf16.mxu0 0
      %3443 = vmatmul.mubr.bf16.gmra.mrb[0].mxu0 %v3308
      %v3444 = vpop.f32.mrb[0].mxu0
      %v3445 = vadd.f32 0.0, %v3444
      %v3446 = vpop.f32.mrb[0].mxu0
      %v3447 = vpop.f32.mrb[0].mxu0
      %v3448 = vadd.f32 0.0, %v3447
      %v3449 = vpop.f32.mrb[0].mxu0
      %3450 = vmatprep.mubr.bf16.mxu0 0
      %3451 = vmatmul.mubr.bf16.gmra.mrb[0].mxu0 %v3311
      %v3452 = vpop.f32.mrb[0].mxu0
      %v3453 = vadd.f32 0.0, %v3452
      %v3454 = vpop.f32.mrb[0].mxu0
      %v3455 = vpop.f32.mrb[0].mxu0
      %v3456 = vadd.f32 0.0, %v3455
      %v3457 = vpop.f32.mrb[0].mxu0
      %3458 = vmatprep.mubr.bf16.mxu0 0
      %3459 = vmatmul.mubr.bf16.gmra.mrb[0].mxu0 %v3314
      %v3460 = vpop.f32.mrb[0].mxu0
      %v3461 = vadd.f32 0.0, %v3460
      %v3462 = vpop.f32.mrb[0].mxu0
      %v3463 = vpop.f32.mrb[0].mxu0
      %v3464 = vadd.f32 0.0, %v3463
      %v3465 = vpop.f32.mrb[0].mxu0
      %3466 = vmatprep.mubr.bf16.mxu0 0
      %3467 = vmatmul.mubr.bf16.gmra.mrb[0].mxu0 %v3317
      %v3468 = vpop.f32.mrb[0].mxu0
      %v3469 = vadd.f32 0.0, %v3468
      %v3470 = vpop.f32.mrb[0].mxu0
      %v3471 = vpop.f32.mrb[0].mxu0
      %v3472 = vadd.f32 0.0, %v3471
      %v3473 = vpop.f32.mrb[0].mxu0
      %3474 = vmatprep.mubr.bf16.mxu0 0
      %3475 = vmatmul.mubr.bf16.gmra.mrb[0].mxu0 %v3320
      %v3476 = vpop.f32.mrb[0].mxu0
      %v3477 = vadd.f32 0.0, %v3476
      %v3478 = vpop.f32.mrb[0].mxu0
      %v3479 = vpop.f32.mrb[0].mxu0
      %v3480 = vadd.f32 0.0, %v3479
      %v3481 = vpop.f32.mrb[0].mxu0
      %3482 = vdwg.mxu0
      %v3485 = vunpack.c.l.b16 %v3215
      %v3486 = vunpack.c.l.b16 %v3216
      %v3487 = vpack.c.b16 %v3486, %v3485
      %v3490 = vsel %vm334, %v3199, 0
      %v3493 = vsel %vm334, %v3200, 0
      %v3496 = vsel %vm334, %v3201, 0
      %v3499 = vsel %vm334, %v3202, 0
      %v3502 = vsel %vm334, %v3203, 0
      %v3505 = vsel %vm334, %v3204, 0
      %v3508 = vsel %vm334, %v3205, 0
      %v3511 = vsel %vm334, %v3206, 0
      %v3514 = vsel %vm334, %v3207, 0
      %v3517 = vsel %vm334, %v3208, 0
      %v3520 = vsel %vm334, %v3209, 0
      %v3523 = vsel %vm334, %v3210, 0
      %v3526 = vsel %vm334, %v3211, 0
      %v3529 = vsel %vm334, %v3212, 0
      %v3532 = vsel %vm334, %v3213, 0
      %v3535 = vsel %vm334, %v3214, 0
      %3537 = vmatprep.subr.bf16.mxu0 0
      %3538 = vmatpush1.bf16.msra.mxu0 %v3487
      %3539 = vmatprep.subr.bf16.mxu0 0
      %3540 = vmatpush1.bf16.msra.mxu0 0
      %3541 = vmatprep.subr.bf16.mxu0 0
      %3542 = vmatpush1.bf16.msra.mxu0 0
      %3543 = vmatprep.subr.bf16.mxu0 0
      %3544 = vmatpush1.bf16.msra.mxu0 0
      %3545 = vmatprep.subr.bf16.mxu0 0
      %3546 = vmatpush1.bf16.msra.mxu0 0
      %3547 = vmatprep.subr.bf16.mxu0 0
      %3548 = vmatpush1.bf16.msra.mxu0 0
      %3549 = vmatprep.subr.bf16.mxu0 0
      %3550 = vmatpush1.bf16.msra.mxu0 0
      %3551 = vmatprep.subr.bf16.mxu0 0
      %3552 = vmatpush1.bf16.msra.mxu0 0
      %3553 = vmatprep.subr.bf16.mxu0 0
      %3554 = vmatpush1.bf16.msra.mxu0 0
      %3555 = vmatprep.subr.bf16.mxu0 0
      %3556 = vmatpush1.bf16.msra.mxu0 0
      %3557 = vmatprep.subr.bf16.mxu0 0
      %3558 = vmatpush1.bf16.msra.mxu0 0
      %3559 = vmatprep.subr.bf16.mxu0 0
      %3560 = vmatpush1.bf16.msra.mxu0 0
      %3561 = vmatprep.subr.bf16.mxu0 0
      %3562 = vmatpush1.bf16.msra.mxu0 0
      %3563 = vmatprep.subr.bf16.mxu0 0
      %3564 = vmatpush1.bf16.msra.mxu0 0
      %3565 = vmatprep.subr.bf16.mxu0 0
      %3566 = vmatpush1.bf16.msra.mxu0 0
      %3567 = vmatprep.subr.bf16.mxu0 0
      %3568 = vmatpush1.bf16.msra.mxu0 0
      %3569 = vmatprep.mubr.bf16.mxu0 0
      %3570 = vmatmul.mubr.bf16.gmra.mrb[0].mxu0 %v3490
      %v3571 = vpop.f32.mrb[0].mxu0
      %v3572 = vadd.f32 %v3357, %v3571
      %v3573 = vpop.f32.mrb[0].mxu0
      %v3574 = vpop.f32.mrb[0].mxu0
      %v3575 = vadd.f32 %v3360, %v3574
      %v3576 = vpop.f32.mrb[0].mxu0
      %3577 = vmatprep.mubr.bf16.mxu0 0
      %3578 = vmatmul.mubr.bf16.gmra.mrb[0].mxu0 %v3493
      %v3579 = vpop.f32.mrb[0].mxu0
      %v3580 = vadd.f32 %v3365, %v3579
      %v3581 = vpop.f32.mrb[0].mxu0
      %v3582 = vpop.f32.mrb[0].mxu0
      %v3583 = vadd.f32 %v3368, %v3582
      %v3584 = vpop.f32.mrb[0].mxu0
      %3585 = vmatprep.mubr.bf16.mxu0 0
      %3586 = vmatmul.mubr.bf16.gmra.mrb[0].mxu0 %v3496
      %v3587 = vpop.f32.mrb[0].mxu0
      %v3588 = vadd.f32 %v3373, %v3587
      %v3589 = vpop.f32.mrb[0].mxu0
      %v3590 = vpop.f32.mrb[0].mxu0
      %v3591 = vadd.f32 %v3376, %v3590
      %v3592 = vpop.f32.mrb[0].mxu0
      %3593 = vmatprep.mubr.bf16.mxu0 0
      %3594 = vmatmul.mubr.bf16.gmra.mrb[0].mxu0 %v3499
      %v3595 = vpop.f32.mrb[0].mxu0
      %v3596 = vadd.f32 %v3381, %v3595
      %v3597 = vpop.f32.mrb[0].mxu0
      %v3598 = vpop.f32.mrb[0].mxu0
      %v3599 = vadd.f32 %v3384, %v3598
      %v3600 = vpop.f32.mrb[0].mxu0
      %3601 = vmatprep.mubr.bf16.mxu0 0
      %3602 = vmatmul.mubr.bf16.gmra.mrb[0].mxu0 %v3502
      %v3603 = vpop.f32.mrb[0].mxu0
      %v3604 = vadd.f32 %v3389, %v3603
      %v3605 = vpop.f32.mrb[0].mxu0
      %v3606 = vpop.f32.mrb[0].mxu0
      %v3607 = vadd.f32 %v3392, %v3606
      %v3608 = vpop.f32.mrb[0].mxu0
      %3609 = vmatprep.mubr.bf16.mxu0 0
      %3610 = vmatmul.mubr.bf16.gmra.mrb[0].mxu0 %v3505
      %v3611 = vpop.f32.mrb[0].mxu0
      %v3612 = vadd.f32 %v3397, %v3611
      %v3613 = vpop.f32.mrb[0].mxu0
      %v3614 = vpop.f32.mrb[0].mxu0
      %v3615 = vadd.f32 %v3400, %v3614
      %v3616 = vpop.f32.mrb[0].mxu0
      %3617 = vmatprep.mubr.bf16.mxu0 0
      %3618 = vmatmul.mubr.bf16.gmra.mrb[0].mxu0 %v3508
      %v3619 = vpop.f32.mrb[0].mxu0
      %v3620 = vadd.f32 %v3405, %v3619
      %v3621 = vpop.f32.mrb[0].mxu0
      %v3622 = vpop.f32.mrb[0].mxu0
      %v3623 = vadd.f32 %v3408, %v3622
      %v3624 = vpop.f32.mrb[0].mxu0
      %3625 = vmatprep.mubr.bf16.mxu0 0
      %3626 = vmatmul.mubr.bf16.gmra.mrb[0].mxu0 %v3511
      %v3627 = vpop.f32.mrb[0].mxu0
      %v3628 = vadd.f32 %v3413, %v3627
      %v3629 = vpop.f32.mrb[0].mxu0
      %v3630 = vpop.f32.mrb[0].mxu0
      %v3631 = vadd.f32 %v3416, %v3630
      %v3632 = vpop.f32.mrb[0].mxu0
      %3633 = vmatprep.mubr.bf16.mxu0 0
      %3634 = vmatmul.mubr.bf16.gmra.mrb[0].mxu0 %v3514
      %v3635 = vpop.f32.mrb[0].mxu0
      %v3636 = vadd.f32 %v3421, %v3635
      %v3637 = vpop.f32.mrb[0].mxu0
      %v3638 = vpop.f32.mrb[0].mxu0
      %v3639 = vadd.f32 %v3424, %v3638
      %v3640 = vpop.f32.mrb[0].mxu0
      %3641 = vmatprep.mubr.bf16.mxu0 0
      %3642 = vmatmul.mubr.bf16.gmra.mrb[0].mxu0 %v3517
      %v3643 = vpop.f32.mrb[0].mxu0
      %v3644 = vadd.f32 %v3429, %v3643
      %v3645 = vpop.f32.mrb[0].mxu0
      %v3646 = vpop.f32.mrb[0].mxu0
      %v3647 = vadd.f32 %v3432, %v3646
      %v3648 = vpop.f32.mrb[0].mxu0
      %3649 = vmatprep.mubr.bf16.mxu0 0
      %3650 = vmatmul.mubr.bf16.gmra.mrb[0].mxu0 %v3520
      %v3651 = vpop.f32.mrb[0].mxu0
      %v3652 = vadd.f32 %v3437, %v3651
      %v3653 = vpop.f32.mrb[0].mxu0
      %v3654 = vpop.f32.mrb[0].mxu0
      %v3655 = vadd.f32 %v3440, %v3654
      %v3656 = vpop.f32.mrb[0].mxu0
      %3657 = vmatprep.mubr.bf16.mxu0 0
      %3658 = vmatmul.mubr.bf16.gmra.mrb[0].mxu0 %v3523
      %v3659 = vpop.f32.mrb[0].mxu0
      %v3660 = vadd.f32 %v3445, %v3659
      %v3661 = vpop.f32.mrb[0].mxu0
      %v3662 = vpop.f32.mrb[0].mxu0
      %v3663 = vadd.f32 %v3448, %v3662
      %v3664 = vpop.f32.mrb[0].mxu0
      %3665 = vmatprep.mubr.bf16.mxu0 0
      %3666 = vmatmul.mubr.bf16.gmra.mrb[0].mxu0 %v3526
      %v3667 = vpop.f32.mrb[0].mxu0
      %v3668 = vadd.f32 %v3453, %v3667
      %v3669 = vpop.f32.mrb[0].mxu0
      %v3670 = vpop.f32.mrb[0].mxu0
      %v3671 = vadd.f32 %v3456, %v3670
      %v3672 = vpop.f32.mrb[0].mxu0
      %3673 = vmatprep.mubr.bf16.mxu0 0
      %3674 = vmatmul.mubr.bf16.gmra.mrb[0].mxu0 %v3529
      %v3675 = vpop.f32.mrb[0].mxu0
      %v3676 = vadd.f32 %v3461, %v3675
      %v3677 = vpop.f32.mrb[0].mxu0
      %v3678 = vpop.f32.mrb[0].mxu0
      %v3679 = vadd.f32 %v3464, %v3678
      %v3680 = vpop.f32.mrb[0].mxu0
      %3681 = vmatprep.mubr.bf16.mxu0 0
      %3682 = vmatmul.mubr.bf16.gmra.mrb[0].mxu0 %v3532
      %v3683 = vpop.f32.mrb[0].mxu0
      %v3684 = vadd.f32 %v3469, %v3683
      %v3685 = vpop.f32.mrb[0].mxu0
      %v3686 = vpop.f32.mrb[0].mxu0
      %v3687 = vadd.f32 %v3472, %v3686
      %v3688 = vpop.f32.mrb[0].mxu0
      %3689 = vmatprep.mubr.bf16.mxu0 0
      %3690 = vmatmul.mubr.bf16.gmra.mrb[0].mxu0 %v3535
      %v3691 = vpop.f32.mrb[0].mxu0
      %v3692 = vadd.f32 %v3477, %v3691
      %v3693 = vpop.f32.mrb[0].mxu0
      %v3694 = vpop.f32.mrb[0].mxu0
      %v3695 = vadd.f32 %v3480, %v3694
      %v3696 = vpop.f32.mrb[0].mxu0
      %3697 = vdwg.mxu0
      %v3698 = vld [vmem:[#allocation3 + $0x2] sm:$0xff]
      %v3699 = vld [vmem:[#allocation3 + $0xa] sm:$0xff]
      %v3700 = vld [vmem:[#allocation3 + $0x1a] sm:$0xff]
      %v3701 = vld [vmem:[#allocation3 + $0x22] sm:$0xff]
      %v3702 = vld [vmem:[#allocation3 + $0x32] sm:$0xff]
      %v3703 = vld [vmem:[#allocation3 + $0x3a] sm:$0xff]
      %v3704 = vld [vmem:[#allocation3 + $0x4a] sm:$0xff]
      %v3705 = vld [vmem:[#allocation3 + $0x52] sm:$0xff]
      %v3706 = vld [vmem:[#allocation3 + $0x62] sm:$0xff]
      %v3707 = vld [vmem:[#allocation3 + $0x6a] sm:$0xff]
      %v3708 = vld [vmem:[#allocation3 + $0x7a] sm:$0xff]
      %v3709 = vld [vmem:[#allocation3 + $0x82] sm:$0xff]
      %v3710 = vld [vmem:[#allocation3 + $0x92] sm:$0xff]
      %v3711 = vld [vmem:[#allocation3 + $0x9a] sm:$0xff]
      %v3712 = vld [vmem:[#allocation3 + $0xaa] sm:$0xff]
      %v3713 = vld [vmem:[#allocation3 + $0xb2] sm:$0xff]
      %v3714 = vld [vmem:[#allocation3 + $0xc2] sm:$0xff]
      %v3715 = vld [vmem:[#allocation3 + $0xca] sm:$0xff]
      %v3716 = vld [vmem:[#allocation3 + $0xda] sm:$0xff]
      %v3717 = vld [vmem:[#allocation3 + $0xe2] sm:$0xff]
      %v3718 = vld [vmem:[#allocation3 + $0xf2] sm:$0xff]
      %v3719 = vld [vmem:[#allocation3 + $0xfa] sm:$0xff]
      %v3720 = vld [vmem:[#allocation3 + $0x10a] sm:$0xff]
      %v3721 = vld [vmem:[#allocation3 + $0x112] sm:$0xff]
      %v3722 = vld [vmem:[#allocation3 + $0x122] sm:$0xff]
      %v3723 = vld [vmem:[#allocation3 + $0x12a] sm:$0xff]
      %v3724 = vld [vmem:[#allocation3 + $0x13a] sm:$0xff]
      %v3725 = vld [vmem:[#allocation3 + $0x142] sm:$0xff]
      %v3726 = vld [vmem:[#allocation3 + $0x152] sm:$0xff]
      %v3727 = vld [vmem:[#allocation3 + $0x15a] sm:$0xff]
      %v3728 = vld [vmem:[#allocation3 + $0x16a] sm:$0xff]
      %v3729 = vld [vmem:[#allocation3 + $0x172] sm:$0xff]
      %v3730 = vpack.c.bf16 %v3699, %v3698
      %v3731 = vpack.c.bf16 %v3701, %v3700
      %v3732 = vpack.c.bf16 %v3703, %v3702
      %v3733 = vpack.c.bf16 %v3705, %v3704
      %v3734 = vpack.c.bf16 %v3707, %v3706
      %v3735 = vpack.c.bf16 %v3709, %v3708
      %v3736 = vpack.c.bf16 %v3711, %v3710
      %v3737 = vpack.c.bf16 %v3713, %v3712
      %v3738 = vpack.c.bf16 %v3715, %v3714
      %v3739 = vpack.c.bf16 %v3717, %v3716
      %v3740 = vpack.c.bf16 %v3719, %v3718
      %v3741 = vpack.c.bf16 %v3721, %v3720
      %v3742 = vpack.c.bf16 %v3723, %v3722
      %v3743 = vpack.c.bf16 %v3725, %v3724
      %v3744 = vpack.c.bf16 %v3727, %v3726
      %v3745 = vpack.c.bf16 %v3729, %v3728
      %s3746 = scalar_lea.vmem %s3, 16
      %v3747 = vld [vmem:[%s3746] sm:$0xf]
      %v3748 = vld [vmem:[%s3746 + $0x4] sm:$0xf]
      %v3751 = vunpack.c.l.b16 %v3747
      %v3752 = vunpack.c.l.b16 %v3748
      %v3753 = vpack.c.b16 %v3752, %v3751
      %v3756 = vsel %vm334, %v3730, 0
      %v3759 = vsel %vm334, %v3731, 0
      %v3762 = vsel %vm334, %v3732, 0
      %v3765 = vsel %vm334, %v3733, 0
      %v3768 = vsel %vm334, %v3734, 0
      %v3771 = vsel %vm334, %v3735, 0
      %v3774 = vsel %vm334, %v3736, 0
      %v3777 = vsel %vm334, %v3737, 0
      %v3780 = vsel %vm334, %v3738, 0
      %v3783 = vsel %vm334, %v3739, 0
      %v3786 = vsel %vm334, %v3740, 0
      %v3789 = vsel %vm334, %v3741, 0
      %v3792 = vsel %vm334, %v3742, 0
      %v3795 = vsel %vm334, %v3743, 0
      %v3798 = vsel %vm334, %v3744, 0
      %v3801 = vsel %vm334, %v3745, 0
      %3803 = vmatprep.subr.bf16.mxu0 0
      %3804 = vmatpush1.bf16.msra.mxu0 %v3753
      %3805 = vmatprep.subr.bf16.mxu0 0
      %3806 = vmatpush1.bf16.msra.mxu0 0
      %3807 = vmatprep.subr.bf16.mxu0 0
      %3808 = vmatpush1.bf16.msra.mxu0 0
      %3809 = vmatprep.subr.bf16.mxu0 0
      %3810 = vmatpush1.bf16.msra.mxu0 0
      %3811 = vmatprep.subr.bf16.mxu0 0
      %3812 = vmatpush1.bf16.msra.mxu0 0
      %3813 = vmatprep.subr.bf16.mxu0 0
      %3814 = vmatpush1.bf16.msra.mxu0 0
      %3815 = vmatprep.subr.bf16.mxu0 0
      %3816 = vmatpush1.bf16.msra.mxu0 0
      %3817 = vmatprep.subr.bf16.mxu0 0
      %3818 = vmatpush1.bf16.msra.mxu0 0
      %3819 = vmatprep.subr.bf16.mxu0 0
      %3820 = vmatpush1.bf16.msra.mxu0 0
      %3821 = vmatprep.subr.bf16.mxu0 0
      %3822 = vmatpush1.bf16.msra.mxu0 0
      %3823 = vmatprep.subr.bf16.mxu0 0
      %3824 = vmatpush1.bf16.msra.mxu0 0
      %3825 = vmatprep.subr.bf16.mxu0 0
      %3826 = vmatpush1.bf16.msra.mxu0 0
      %3827 = vmatprep.subr.bf16.mxu0 0
      %3828 = vmatpush1.bf16.msra.mxu0 0
      %3829 = vmatprep.subr.bf16.mxu0 0
      %3830 = vmatpush1.bf16.msra.mxu0 0
      %3831 = vmatprep.subr.bf16.mxu0 0
      %3832 = vmatpush1.bf16.msra.mxu0 0
      %3833 = vmatprep.subr.bf16.mxu0 0
      %3834 = vmatpush1.bf16.msra.mxu0 0
      %3835 = vmatprep.mubr.bf16.mxu0 0
      %3836 = vmatmul.mubr.bf16.gmra.mrb[0].mxu0 %v3756
      %v3837 = vpop.f32.mrb[0].mxu0
      %v3838 = vadd.f32 0.0, %v3837
      %v3839 = vpop.f32.mrb[0].mxu0
      %v3840 = vpop.f32.mrb[0].mxu0
      %v3841 = vadd.f32 0.0, %v3840
      %v3842 = vpop.f32.mrb[0].mxu0
      %3843 = vmatprep.mubr.bf16.mxu0 0
      %3844 = vmatmul.mubr.bf16.gmra.mrb[0].mxu0 %v3759
      %v3845 = vpop.f32.mrb[0].mxu0
      %v3846 = vadd.f32 0.0, %v3845
      %v3847 = vpop.f32.mrb[0].mxu0
      %v3848 = vpop.f32.mrb[0].mxu0
      %v3849 = vadd.f32 0.0, %v3848
      %v3850 = vpop.f32.mrb[0].mxu0
      %3851 = vmatprep.mubr.bf16.mxu0 0
      %3852 = vmatmul.mubr.bf16.gmra.mrb[0].mxu0 %v3762
      %v3853 = vpop.f32.mrb[0].mxu0
      %v3854 = vadd.f32 0.0, %v3853
      %v3855 = vpop.f32.mrb[0].mxu0
      %v3856 = vpop.f32.mrb[0].mxu0
      %v3857 = vadd.f32 0.0, %v3856
      %v3858 = vpop.f32.mrb[0].mxu0
      %3859 = vmatprep.mubr.bf16.mxu0 0
      %3860 = vmatmul.mubr.bf16.gmra.mrb[0].mxu0 %v3765
      %v3861 = vpop.f32.mrb[0].mxu0
      %v3862 = vadd.f32 0.0, %v3861
      %v3863 = vpop.f32.mrb[0].mxu0
      %v3864 = vpop.f32.mrb[0].mxu0
      %v3865 = vadd.f32 0.0, %v3864
      %v3866 = vpop.f32.mrb[0].mxu0
      %3867 = vmatprep.mubr.bf16.mxu0 0
      %3868 = vmatmul.mubr.bf16.gmra.mrb[0].mxu0 %v3768
      %v3869 = vpop.f32.mrb[0].mxu0
      %v3870 = vadd.f32 0.0, %v3869
      %v3871 = vpop.f32.mrb[0].mxu0
      %v3872 = vpop.f32.mrb[0].mxu0
      %v3873 = vadd.f32 0.0, %v3872
      %v3874 = vpop.f32.mrb[0].mxu0
      %3875 = vmatprep.mubr.bf16.mxu0 0
      %3876 = vmatmul.mubr.bf16.gmra.mrb[0].mxu0 %v3771
      %v3877 = vpop.f32.mrb[0].mxu0
      %v3878 = vadd.f32 0.0, %v3877
      %v3879 = vpop.f32.mrb[0].mxu0
      %v3880 = vpop.f32.mrb[0].mxu0
      %v3881 = vadd.f32 0.0, %v3880
      %v3882 = vpop.f32.mrb[0].mxu0
      %3883 = vmatprep.mubr.bf16.mxu0 0
      %3884 = vmatmul.mubr.bf16.gmra.mrb[0].mxu0 %v3774
      %v3885 = vpop.f32.mrb[0].mxu0
      %v3886 = vadd.f32 0.0, %v3885
      %v3887 = vpop.f32.mrb[0].mxu0
      %v3888 = vpop.f32.mrb[0].mxu0
      %v3889 = vadd.f32 0.0, %v3888
      %v3890 = vpop.f32.mrb[0].mxu0
      %3891 = vmatprep.mubr.bf16.mxu0 0
      %3892 = vmatmul.mubr.bf16.gmra.mrb[0].mxu0 %v3777
      %v3893 = vpop.f32.mrb[0].mxu0
      %v3894 = vadd.f32 0.0, %v3893
      %v3895 = vpop.f32.mrb[0].mxu0
      %v3896 = vpop.f32.mrb[0].mxu0
      %v3897 = vadd.f32 0.0, %v3896
      %v3898 = vpop.f32.mrb[0].mxu0
      %3899 = vmatprep.mubr.bf16.mxu0 0
      %3900 = vmatmul.mubr.bf16.gmra.mrb[0].mxu0 %v3780
      %v3901 = vpop.f32.mrb[0].mxu0
      %v3902 = vadd.f32 0.0, %v3901
      %v3903 = vpop.f32.mrb[0].mxu0
      %v3904 = vpop.f32.mrb[0].mxu0
      %v3905 = vadd.f32 0.0, %v3904
      %v3906 = vpop.f32.mrb[0].mxu0
      %3907 = vmatprep.mubr.bf16.mxu0 0
      %3908 = vmatmul.mubr.bf16.gmra.mrb[0].mxu0 %v3783
      %v3909 = vpop.f32.mrb[0].mxu0
      %v3910 = vadd.f32 0.0, %v3909
      %v3911 = vpop.f32.mrb[0].mxu0
      %v3912 = vpop.f32.mrb[0].mxu0
      %v3913 = vadd.f32 0.0, %v3912
      %v3914 = vpop.f32.mrb[0].mxu0
      %3915 = vmatprep.mubr.bf16.mxu0 0
      %3916 = vmatmul.mubr.bf16.gmra.mrb[0].mxu0 %v3786
      %v3917 = vpop.f32.mrb[0].mxu0
      %v3918 = vadd.f32 0.0, %v3917
      %v3919 = vpop.f32.mrb[0].mxu0
      %v3920 = vpop.f32.mrb[0].mxu0
      %v3921 = vadd.f32 0.0, %v3920
      %v3922 = vpop.f32.mrb[0].mxu0
      %3923 = vmatprep.mubr.bf16.mxu0 0
      %3924 = vmatmul.mubr.bf16.gmra.mrb[0].mxu0 %v3789
      %v3925 = vpop.f32.mrb[0].mxu0
      %v3926 = vadd.f32 0.0, %v3925
      %v3927 = vpop.f32.mrb[0].mxu0
      %v3928 = vpop.f32.mrb[0].mxu0
      %v3929 = vadd.f32 0.0, %v3928
      %v3930 = vpop.f32.mrb[0].mxu0
      %3931 = vmatprep.mubr.bf16.mxu0 0
      %3932 = vmatmul.mubr.bf16.gmra.mrb[0].mxu0 %v3792
      %v3933 = vpop.f32.mrb[0].mxu0
      %v3934 = vadd.f32 0.0, %v3933
      %v3935 = vpop.f32.mrb[0].mxu0
      %v3936 = vpop.f32.mrb[0].mxu0
      %v3937 = vadd.f32 0.0, %v3936
      %v3938 = vpop.f32.mrb[0].mxu0
      %3939 = vmatprep.mubr.bf16.mxu0 0
      %3940 = vmatmul.mubr.bf16.gmra.mrb[0].mxu0 %v3795
      %v3941 = vpop.f32.mrb[0].mxu0
      %v3942 = vadd.f32 0.0, %v3941
      %v3943 = vpop.f32.mrb[0].mxu0
      %v3944 = vpop.f32.mrb[0].mxu0
      %v3945 = vadd.f32 0.0, %v3944
      %v3946 = vpop.f32.mrb[0].mxu0
      %3947 = vmatprep.mubr.bf16.mxu0 0
      %3948 = vmatmul.mubr.bf16.gmra.mrb[0].mxu0 %v3798
      %v3949 = vpop.f32.mrb[0].mxu0
      %v3950 = vadd.f32 0.0, %v3949
      %v3951 = vpop.f32.mrb[0].mxu0
      %v3952 = vpop.f32.mrb[0].mxu0
      %v3953 = vadd.f32 0.0, %v3952
      %v3954 = vpop.f32.mrb[0].mxu0
      %3955 = vmatprep.mubr.bf16.mxu0 0
      %3956 = vmatmul.mubr.bf16.gmra.mrb[0].mxu0 %v3801
      %v3957 = vpop.f32.mrb[0].mxu0
      %v3958 = vadd.f32 0.0, %v3957
      %v3959 = vpop.f32.mrb[0].mxu0
      %v3960 = vpop.f32.mrb[0].mxu0
      %v3961 = vadd.f32 0.0, %v3960
      %v3962 = vpop.f32.mrb[0].mxu0
      %3963 = vdwg.mxu0
      %v3964 = vadd.f32 %v3572, %v3838
      %v3965 = vadd.f32 %v3575, %v3841
      %v3966 = vadd.f32 %v3580, %v3846
      %v3967 = vadd.f32 %v3583, %v3849
      %v3968 = vadd.f32 %v3588, %v3854
      %v3969 = vadd.f32 %v3591, %v3857
      %v3970 = vadd.f32 %v3596, %v3862
      %v3971 = vadd.f32 %v3599, %v3865
      %v3972 = vadd.f32 %v3604, %v3870
      %v3973 = vadd.f32 %v3607, %v3873
      %v3974 = vadd.f32 %v3612, %v3878
      %v3975 = vadd.f32 %v3615, %v3881
      %v3976 = vadd.f32 %v3620, %v3886
      %v3977 = vadd.f32 %v3623, %v3889
      %v3978 = vadd.f32 %v3628, %v3894
      %v3979 = vadd.f32 %v3631, %v3897
      %v3980 = vadd.f32 %v3636, %v3902
      %v3981 = vadd.f32 %v3639, %v3905
      %v3982 = vadd.f32 %v3644, %v3910
      %v3983 = vadd.f32 %v3647, %v3913
      %v3984 = vadd.f32 %v3652, %v3918
      %v3985 = vadd.f32 %v3655, %v3921
      %v3986 = vadd.f32 %v3660, %v3926
      %v3987 = vadd.f32 %v3663, %v3929
      %v3988 = vadd.f32 %v3668, %v3934
      %v3989 = vadd.f32 %v3671, %v3937
      %v3990 = vadd.f32 %v3676, %v3942
      %v3991 = vadd.f32 %v3679, %v3945
      %v3992 = vadd.f32 %v3684, %v3950
      %v3993 = vadd.f32 %v3687, %v3953
      %v3994 = vadd.f32 %v3692, %v3958
      %v3995 = vadd.f32 %v3695, %v3961
      %v3996 = vld [vmem:[%s3134] sm:$0xff]
      %v3997 = vld [vmem:[%s3134 + $0x8] sm:$0xff]
      %v3998 = vld [vmem:[%s3134 + $0x18] sm:$0xff]
      %v3999 = vld [vmem:[%s3134 + $0x20] sm:$0xff]
      %v4000 = vld [vmem:[%s3134 + $0x30] sm:$0xff]
      %v4001 = vld [vmem:[%s3134 + $0x38] sm:$0xff]
      %v4002 = vld [vmem:[%s3134 + $0x48] sm:$0xff]
      %v4003 = vld [vmem:[%s3134 + $0x50] sm:$0xff]
      %v4004 = vld [vmem:[%s3134 + $0x60] sm:$0xff]
      %v4005 = vld [vmem:[%s3134 + $0x68] sm:$0xff]
      %v4006 = vld [vmem:[%s3134 + $0x78] sm:$0xff]
      %v4007 = vld [vmem:[%s3134 + $0x80] sm:$0xff]
      %v4008 = vld [vmem:[%s3134 + $0x90] sm:$0xff]
      %v4009 = vld [vmem:[%s3134 + $0x98] sm:$0xff]
      %v4010 = vld [vmem:[%s3134 + $0xa8] sm:$0xff]
      %v4011 = vld [vmem:[%s3134 + $0xb0] sm:$0xff]
      %v4012 = vld [vmem:[%s3134 + $0xc0] sm:$0xff]
      %v4013 = vld [vmem:[%s3134 + $0xc8] sm:$0xff]
      %v4014 = vld [vmem:[%s3134 + $0xd8] sm:$0xff]
      %v4015 = vld [vmem:[%s3134 + $0xe0] sm:$0xff]
      %v4016 = vld [vmem:[%s3134 + $0xf0] sm:$0xff]
      %v4017 = vld [vmem:[%s3134 + $0xf8] sm:$0xff]
      %v4018 = vld [vmem:[%s3134 + $0x108] sm:$0xff]
      %v4019 = vld [vmem:[%s3134 + $0x110] sm:$0xff]
      %v4020 = vld [vmem:[%s3134 + $0x120] sm:$0xff]
      %v4021 = vld [vmem:[%s3134 + $0x128] sm:$0xff]
      %v4022 = vld [vmem:[%s3134 + $0x138] sm:$0xff]
      %v4023 = vld [vmem:[%s3134 + $0x140] sm:$0xff]
      %v4024 = vld [vmem:[%s3134 + $0x150] sm:$0xff]
      %v4025 = vld [vmem:[%s3134 + $0x158] sm:$0xff]
      %v4026 = vld [vmem:[%s3134 + $0x168] sm:$0xff]
      %v4027 = vld [vmem:[%s3134 + $0x170] sm:$0xff]
      %v4028 = vpack.c.bf16 %v3997, %v3996
      %v4029 = vpack.c.bf16 %v3999, %v3998
      %v4030 = vpack.c.bf16 %v4001, %v4000
      %v4031 = vpack.c.bf16 %v4003, %v4002
      %v4032 = vpack.c.bf16 %v4005, %v4004
      %v4033 = vpack.c.bf16 %v4007, %v4006
      %v4034 = vpack.c.bf16 %v4009, %v4008
      %v4035 = vpack.c.bf16 %v4011, %v4010
      %v4036 = vpack.c.bf16 %v4013, %v4012
      %v4037 = vpack.c.bf16 %v4015, %v4014
      %v4038 = vpack.c.bf16 %v4017, %v4016
      %v4039 = vpack.c.bf16 %v4019, %v4018
      %v4040 = vpack.c.bf16 %v4021, %v4020
      %v4041 = vpack.c.bf16 %v4023, %v4022
      %v4042 = vpack.c.bf16 %v4025, %v4024
      %v4043 = vpack.c.bf16 %v4027, %v4026
      %s4044 = scalar_lea.vmem %s3, 24
      %v4045 = vld [vmem:[%s4044] sm:$0xf]
      %v4046 = vld [vmem:[%s4044 + $0x4] sm:$0xf]
      %v4049 = vunpack.c.l.b16 %v4045
      %v4050 = vunpack.c.l.b16 %v4046
      %v4051 = vpack.c.b16 %v4050, %v4049
      %v4054 = vsel %vm334, %v4028, 0
      %v4057 = vsel %vm334, %v4029, 0
      %v4060 = vsel %vm334, %v4030, 0
      %v4063 = vsel %vm334, %v4031, 0
      %v4066 = vsel %vm334, %v4032, 0
      %v4069 = vsel %vm334, %v4033, 0
      %v4072 = vsel %vm334, %v4034, 0
      %v4075 = vsel %vm334, %v4035, 0
      %v4078 = vsel %vm334, %v4036, 0
      %v4081 = vsel %vm334, %v4037, 0
      %v4084 = vsel %vm334, %v4038, 0
      %v4087 = vsel %vm334, %v4039, 0
      %v4090 = vsel %vm334, %v4040, 0
      %v4093 = vsel %vm334, %v4041, 0
      %v4096 = vsel %vm334, %v4042, 0
      %v4099 = vsel %vm334, %v4043, 0
      %4101 = vmatprep.subr.bf16.mxu0 0
      %4102 = vmatpush1.bf16.msra.mxu0 %v4051
      %4103 = vmatprep.subr.bf16.mxu0 0
      %4104 = vmatpush1.bf16.msra.mxu0 0
      %4105 = vmatprep.subr.bf16.mxu0 0
      %4106 = vmatpush1.bf16.msra.mxu0 0
      %4107 = vmatprep.subr.bf16.mxu0 0
      %4108 = vmatpush1.bf16.msra.mxu0 0
      %4109 = vmatprep.subr.bf16.mxu0 0
      %4110 = vmatpush1.bf16.msra.mxu0 0
      %4111 = vmatprep.subr.bf16.mxu0 0
      %4112 = vmatpush1.bf16.msra.mxu0 0
      %4113 = vmatprep.subr.bf16.mxu0 0
      %4114 = vmatpush1.bf16.msra.mxu0 0
      %4115 = vmatprep.subr.bf16.mxu0 0
      %4116 = vmatpush1.bf16.msra.mxu0 0
      %4117 = vmatprep.subr.bf16.mxu0 0
      %4118 = vmatpush1.bf16.msra.mxu0 0
      %4119 = vmatprep.subr.bf16.mxu0 0
      %4120 = vmatpush1.bf16.msra.mxu0 0
      %4121 = vmatprep.subr.bf16.mxu0 0
      %4122 = vmatpush1.bf16.msra.mxu0 0
      %4123 = vmatprep.subr.bf16.mxu0 0
      %4124 = vmatpush1.bf16.msra.mxu0 0
      %4125 = vmatprep.subr.bf16.mxu0 0
      %4126 = vmatpush1.bf16.msra.mxu0 0
      %4127 = vmatprep.subr.bf16.mxu0 0
      %4128 = vmatpush1.bf16.msra.mxu0 0
      %4129 = vmatprep.subr.bf16.mxu0 0
      %4130 = vmatpush1.bf16.msra.mxu0 0
      %4131 = vmatprep.subr.bf16.mxu0 0
      %4132 = vmatpush1.bf16.msra.mxu0 0
      %4133 = vmatprep.mubr.bf16.mxu0 0
      %4134 = vmatmul.mubr.bf16.gmra.mrb[0].mxu0 %v4054
      %v4135 = vpop.f32.mrb[0].mxu0
      %v4136 = vadd.f32 0.0, %v4135
      %v4137 = vpop.f32.mrb[0].mxu0
      %v4138 = vpop.f32.mrb[0].mxu0
      %v4139 = vadd.f32 0.0, %v4138
      %v4140 = vpop.f32.mrb[0].mxu0
      %4141 = vmatprep.mubr.bf16.mxu0 0
      %4142 = vmatmul.mubr.bf16.gmra.mrb[0].mxu0 %v4057
      %v4143 = vpop.f32.mrb[0].mxu0
      %v4144 = vadd.f32 0.0, %v4143
      %v4145 = vpop.f32.mrb[0].mxu0
      %v4146 = vpop.f32.mrb[0].mxu0
      %v4147 = vadd.f32 0.0, %v4146
      %v4148 = vpop.f32.mrb[0].mxu0
      %4149 = vmatprep.mubr.bf16.mxu0 0
      %4150 = vmatmul.mubr.bf16.gmra.mrb[0].mxu0 %v4060
      %v4151 = vpop.f32.mrb[0].mxu0
      %v4152 = vadd.f32 0.0, %v4151
      %v4153 = vpop.f32.mrb[0].mxu0
      %v4154 = vpop.f32.mrb[0].mxu0
      %v4155 = vadd.f32 0.0, %v4154
      %v4156 = vpop.f32.mrb[0].mxu0
      %4157 = vmatprep.mubr.bf16.mxu0 0
      %4158 = vmatmul.mubr.bf16.gmra.mrb[0].mxu0 %v4063
      %v4159 = vpop.f32.mrb[0].mxu0
      %v4160 = vadd.f32 0.0, %v4159
      %v4161 = vpop.f32.mrb[0].mxu0
      %v4162 = vpop.f32.mrb[0].mxu0
      %v4163 = vadd.f32 0.0, %v4162
      %v4164 = vpop.f32.mrb[0].mxu0
      %4165 = vmatprep.mubr.bf16.mxu0 0
      %4166 = vmatmul.mubr.bf16.gmra.mrb[0].mxu0 %v4066
      %v4167 = vpop.f32.mrb[0].mxu0
      %v4168 = vadd.f32 0.0, %v4167
      %v4169 = vpop.f32.mrb[0].mxu0
      %v4170 = vpop.f32.mrb[0].mxu0
      %v4171 = vadd.f32 0.0, %v4170
      %v4172 = vpop.f32.mrb[0].mxu0
      %4173 = vmatprep.mubr.bf16.mxu0 0
      %4174 = vmatmul.mubr.bf16.gmra.mrb[0].mxu0 %v4069
      %v4175 = vpop.f32.mrb[0].mxu0
      %v4176 = vadd.f32 0.0, %v4175
      %v4177 = vpop.f32.mrb[0].mxu0
      %v4178 = vpop.f32.mrb[0].mxu0
      %v4179 = vadd.f32 0.0, %v4178
      %v4180 = vpop.f32.mrb[0].mxu0
      %4181 = vmatprep.mubr.bf16.mxu0 0
      %4182 = vmatmul.mubr.bf16.gmra.mrb[0].mxu0 %v4072
      %v4183 = vpop.f32.mrb[0].mxu0
      %v4184 = vadd.f32 0.0, %v4183
      %v4185 = vpop.f32.mrb[0].mxu0
      %v4186 = vpop.f32.mrb[0].mxu0
      %v4187 = vadd.f32 0.0, %v4186
      %v4188 = vpop.f32.mrb[0].mxu0
      %4189 = vmatprep.mubr.bf16.mxu0 0
      %4190 = vmatmul.mubr.bf16.gmra.mrb[0].mxu0 %v4075
      %v4191 = vpop.f32.mrb[0].mxu0
      %v4192 = vadd.f32 0.0, %v4191
      %v4193 = vpop.f32.mrb[0].mxu0
      %v4194 = vpop.f32.mrb[0].mxu0
      %v4195 = vadd.f32 0.0, %v4194
      %v4196 = vpop.f32.mrb[0].mxu0
      %4197 = vmatprep.mubr.bf16.mxu0 0
      %4198 = vmatmul.mubr.bf16.gmra.mrb[0].mxu0 %v4078
      %v4199 = vpop.f32.mrb[0].mxu0
      %v4200 = vadd.f32 0.0, %v4199
      %v4201 = vpop.f32.mrb[0].mxu0
      %v4202 = vpop.f32.mrb[0].mxu0
      %v4203 = vadd.f32 0.0, %v4202
      %v4204 = vpop.f32.mrb[0].mxu0
      %4205 = vmatprep.mubr.bf16.mxu0 0
      %4206 = vmatmul.mubr.bf16.gmra.mrb[0].mxu0 %v4081
      %v4207 = vpop.f32.mrb[0].mxu0
      %v4208 = vadd.f32 0.0, %v4207
      %v4209 = vpop.f32.mrb[0].mxu0
      %v4210 = vpop.f32.mrb[0].mxu0
      %v4211 = vadd.f32 0.0, %v4210
      %v4212 = vpop.f32.mrb[0].mxu0
      %4213 = vmatprep.mubr.bf16.mxu0 0
      %4214 = vmatmul.mubr.bf16.gmra.mrb[0].mxu0 %v4084
      %v4215 = vpop.f32.mrb[0].mxu0
      %v4216 = vadd.f32 0.0, %v4215
      %v4217 = vpop.f32.mrb[0].mxu0
      %v4218 = vpop.f32.mrb[0].mxu0
      %v4219 = vadd.f32 0.0, %v4218
      %v4220 = vpop.f32.mrb[0].mxu0
      %4221 = vmatprep.mubr.bf16.mxu0 0
      %4222 = vmatmul.mubr.bf16.gmra.mrb[0].mxu0 %v4087
      %v4223 = vpop.f32.mrb[0].mxu0
      %v4224 = vadd.f32 0.0, %v4223
      %v4225 = vpop.f32.mrb[0].mxu0
      %v4226 = vpop.f32.mrb[0].mxu0
      %v4227 = vadd.f32 0.0, %v4226
      %v4228 = vpop.f32.mrb[0].mxu0
      %4229 = vmatprep.mubr.bf16.mxu0 0
      %4230 = vmatmul.mubr.bf16.gmra.mrb[0].mxu0 %v4090
      %v4231 = vpop.f32.mrb[0].mxu0
      %v4232 = vadd.f32 0.0, %v4231
      %v4233 = vpop.f32.mrb[0].mxu0
      %v4234 = vpop.f32.mrb[0].mxu0
      %v4235 = vadd.f32 0.0, %v4234
      %v4236 = vpop.f32.mrb[0].mxu0
      %4237 = vmatprep.mubr.bf16.mxu0 0
      %4238 = vmatmul.mubr.bf16.gmra.mrb[0].mxu0 %v4093
      %v4239 = vpop.f32.mrb[0].mxu0
      %v4240 = vadd.f32 0.0, %v4239
      %v4241 = vpop.f32.mrb[0].mxu0
      %v4242 = vpop.f32.mrb[0].mxu0
      %v4243 = vadd.f32 0.0, %v4242
      %v4244 = vpop.f32.mrb[0].mxu0
      %4245 = vmatprep.mubr.bf16.mxu0 0
      %4246 = vmatmul.mubr.bf16.gmra.mrb[0].mxu0 %v4096
      %v4247 = vpop.f32.mrb[0].mxu0
      %v4248 = vadd.f32 0.0, %v4247
      %v4249 = vpop.f32.mrb[0].mxu0
      %v4250 = vpop.f32.mrb[0].mxu0
      %v4251 = vadd.f32 0.0, %v4250
      %v4252 = vpop.f32.mrb[0].mxu0
      %4253 = vmatprep.mubr.bf16.mxu0 0
      %4254 = vmatmul.mubr.bf16.gmra.mrb[0].mxu0 %v4099
      %v4255 = vpop.f32.mrb[0].mxu0
      %v4256 = vadd.f32 0.0, %v4255
      %v4257 = vpop.f32.mrb[0].mxu0
      %v4258 = vpop.f32.mrb[0].mxu0
      %v4259 = vadd.f32 0.0, %v4258
      %v4260 = vpop.f32.mrb[0].mxu0
      %4261 = vdwg.mxu0
      %v4262 = vadd.f32 %v3964, %v4136
      %v4263 = vadd.f32 %v3965, %v4139
      %v4264 = vadd.f32 %v3966, %v4144
      %v4265 = vadd.f32 %v3967, %v4147
      %v4266 = vadd.f32 %v3968, %v4152
      %v4267 = vadd.f32 %v3969, %v4155
      %v4268 = vadd.f32 %v3970, %v4160
      %v4269 = vadd.f32 %v3971, %v4163
      %v4270 = vadd.f32 %v3972, %v4168
      %v4271 = vadd.f32 %v3973, %v4171
      %v4272 = vadd.f32 %v3974, %v4176
      %v4273 = vadd.f32 %v3975, %v4179
      %v4274 = vadd.f32 %v3976, %v4184
      %v4275 = vadd.f32 %v3977, %v4187
      %v4276 = vadd.f32 %v3978, %v4192
      %v4277 = vadd.f32 %v3979, %v4195
      %v4278 = vadd.f32 %v3980, %v4200
      %v4279 = vadd.f32 %v3981, %v4203
      %v4280 = vadd.f32 %v3982, %v4208
      %v4281 = vadd.f32 %v3983, %v4211
      %v4282 = vadd.f32 %v3984, %v4216
      %v4283 = vadd.f32 %v3985, %v4219
      %v4284 = vadd.f32 %v3986, %v4224
      %v4285 = vadd.f32 %v3987, %v4227
      %v4286 = vadd.f32 %v3988, %v4232
      %v4287 = vadd.f32 %v3989, %v4235
      %v4288 = vadd.f32 %v3990, %v4240
      %v4289 = vadd.f32 %v3991, %v4243
      %v4290 = vadd.f32 %v3992, %v4248
      %v4291 = vadd.f32 %v3993, %v4251
      %v4292 = vadd.f32 %v3994, %v4256
      %v4293 = vadd.f32 %v3995, %v4259
      %v4294 = vld [vmem:[%s3134 + $0x1] sm:$0xff]
      %v4295 = vld [vmem:[%s3134 + $0x9] sm:$0xff]
      %v4296 = vld [vmem:[%s3134 + $0x19] sm:$0xff]
      %v4297 = vld [vmem:[%s3134 + $0x21] sm:$0xff]
      %v4298 = vld [vmem:[%s3134 + $0x31] sm:$0xff]
      %v4299 = vld [vmem:[%s3134 + $0x39] sm:$0xff]
      %v4300 = vld [vmem:[%s3134 + $0x49] sm:$0xff]
      %v4301 = vld [vmem:[%s3134 + $0x51] sm:$0xff]
      %v4302 = vld [vmem:[%s3134 + $0x61] sm:$0xff]
      %v4303 = vld [vmem:[%s3134 + $0x69] sm:$0xff]
      %v4304 = vld [vmem:[%s3134 + $0x79] sm:$0xff]
      %v4305 = vld [vmem:[%s3134 + $0x81] sm:$0xff]
      %v4306 = vld [vmem:[%s3134 + $0x91] sm:$0xff]
      %v4307 = vld [vmem:[%s3134 + $0x99] sm:$0xff]
      %v4308 = vld [vmem:[%s3134 + $0xa9] sm:$0xff]
      %v4309 = vld [vmem:[%s3134 + $0xb1] sm:$0xff]
      %v4310 = vld [vmem:[%s3134 + $0xc1] sm:$0xff]
      %v4311 = vld [vmem:[%s3134 + $0xc9] sm:$0xff]
      %v4312 = vld [vmem:[%s3134 + $0xd9] sm:$0xff]
      %v4313 = vld [vmem:[%s3134 + $0xe1] sm:$0xff]
      %v4314 = vld [vmem:[%s3134 + $0xf1] sm:$0xff]
      %v4315 = vld [vmem:[%s3134 + $0xf9] sm:$0xff]
      %v4316 = vld [vmem:[%s3134 + $0x109] sm:$0xff]
      %v4317 = vld [vmem:[%s3134 + $0x111] sm:$0xff]
      %v4318 = vld [vmem:[%s3134 + $0x121] sm:$0xff]
      %v4319 = vld [vmem:[%s3134 + $0x129] sm:$0xff]
      %v4320 = vld [vmem:[%s3134 + $0x139] sm:$0xff]
      %v4321 = vld [vmem:[%s3134 + $0x141] sm:$0xff]
      %v4322 = vld [vmem:[%s3134 + $0x151] sm:$0xff]
      %v4323 = vld [vmem:[%s3134 + $0x159] sm:$0xff]
      %v4324 = vld [vmem:[%s3134 + $0x169] sm:$0xff]
      %v4325 = vld [vmem:[%s3134 + $0x171] sm:$0xff]
      %v4326 = vpack.c.bf16 %v4295, %v4294
      %v4327 = vpack.c.bf16 %v4297, %v4296
      %v4328 = vpack.c.bf16 %v4299, %v4298
      %v4329 = vpack.c.bf16 %v4301, %v4300
      %v4330 = vpack.c.bf16 %v4303, %v4302
      %v4331 = vpack.c.bf16 %v4305, %v4304
      %v4332 = vpack.c.bf16 %v4307, %v4306
      %v4333 = vpack.c.bf16 %v4309, %v4308
      %v4334 = vpack.c.bf16 %v4311, %v4310
      %v4335 = vpack.c.bf16 %v4313, %v4312
      %v4336 = vpack.c.bf16 %v4315, %v4314
      %v4337 = vpack.c.bf16 %v4317, %v4316
      %v4338 = vpack.c.bf16 %v4319, %v4318
      %v4339 = vpack.c.bf16 %v4321, %v4320
      %v4340 = vpack.c.bf16 %v4323, %v4322
      %v4341 = vpack.c.bf16 %v4325, %v4324
      %s4342 = scalar_lea.vmem %s3, 32
      %v4343 = vld [vmem:[%s4342] sm:$0xf]
      %v4344 = vld [vmem:[%s4342 + $0x4] sm:$0xf]
      %v4347 = vunpack.c.l.b16 %v4343
      %v4348 = vunpack.c.l.b16 %v4344
      %v4349 = vpack.c.b16 %v4348, %v4347
      %v4352 = vsel %vm334, %v4326, 0
      %v4355 = vsel %vm334, %v4327, 0
      %v4358 = vsel %vm334, %v4328, 0
      %v4361 = vsel %vm334, %v4329, 0
      %v4364 = vsel %vm334, %v4330, 0
      %v4367 = vsel %vm334, %v4331, 0
      %v4370 = vsel %vm334, %v4332, 0
      %v4373 = vsel %vm334, %v4333, 0
      %v4376 = vsel %vm334, %v4334, 0
      %v4379 = vsel %vm334, %v4335, 0
      %v4382 = vsel %vm334, %v4336, 0
      %v4385 = vsel %vm334, %v4337, 0
      %v4388 = vsel %vm334, %v4338, 0
      %v4391 = vsel %vm334, %v4339, 0
      %v4394 = vsel %vm334, %v4340, 0
      %v4397 = vsel %vm334, %v4341, 0
      %4399 = vmatprep.subr.bf16.mxu0 0
      %4400 = vmatpush1.bf16.msra.mxu0 %v4349
      %4401 = vmatprep.subr.bf16.mxu0 0
      %4402 = vmatpush1.bf16.msra.mxu0 0
      %4403 = vmatprep.subr.bf16.mxu0 0
      %4404 = vmatpush1.bf16.msra.mxu0 0
      %4405 = vmatprep.subr.bf16.mxu0 0
      %4406 = vmatpush1.bf16.msra.mxu0 0
      %4407 = vmatprep.subr.bf16.mxu0 0
      %4408 = vmatpush1.bf16.msra.mxu0 0
      %4409 = vmatprep.subr.bf16.mxu0 0
      %4410 = vmatpush1.bf16.msra.mxu0 0
      %4411 = vmatprep.subr.bf16.mxu0 0
      %4412 = vmatpush1.bf16.msra.mxu0 0
      %4413 = vmatprep.subr.bf16.mxu0 0
      %4414 = vmatpush1.bf16.msra.mxu0 0
      %4415 = vmatprep.subr.bf16.mxu0 0
      %4416 = vmatpush1.bf16.msra.mxu0 0
      %4417 = vmatprep.subr.bf16.mxu0 0
      %4418 = vmatpush1.bf16.msra.mxu0 0
      %4419 = vmatprep.subr.bf16.mxu0 0
      %4420 = vmatpush1.bf16.msra.mxu0 0
      %4421 = vmatprep.subr.bf16.mxu0 0
      %4422 = vmatpush1.bf16.msra.mxu0 0
      %4423 = vmatprep.subr.bf16.mxu0 0
      %4424 = vmatpush1.bf16.msra.mxu0 0
      %4425 = vmatprep.subr.bf16.mxu0 0
      %4426 = vmatpush1.bf16.msra.mxu0 0
      %4427 = vmatprep.subr.bf16.mxu0 0
      %4428 = vmatpush1.bf16.msra.mxu0 0
      %4429 = vmatprep.subr.bf16.mxu0 0
      %4430 = vmatpush1.bf16.msra.mxu0 0
      %4431 = vmatprep.mubr.bf16.mxu0 0
      %4432 = vmatmul.mubr.bf16.gmra.mrb[0].mxu0 %v4352
      %v4433 = vpop.f32.mrb[0].mxu0
      %v4434 = vadd.f32 0.0, %v4433
      %v4435 = vpop.f32.mrb[0].mxu0
      %v4436 = vpop.f32.mrb[0].mxu0
      %v4437 = vadd.f32 0.0, %v4436
      %v4438 = vpop.f32.mrb[0].mxu0
      %4439 = vmatprep.mubr.bf16.mxu0 0
      %4440 = vmatmul.mubr.bf16.gmra.mrb[0].mxu0 %v4355
      %v4441 = vpop.f32.mrb[0].mxu0
      %v4442 = vadd.f32 0.0, %v4441
      %v4443 = vpop.f32.mrb[0].mxu0
      %v4444 = vpop.f32.mrb[0].mxu0
      %v4445 = vadd.f32 0.0, %v4444
      %v4446 = vpop.f32.mrb[0].mxu0
      %4447 = vmatprep.mubr.bf16.mxu0 0
      %4448 = vmatmul.mubr.bf16.gmra.mrb[0].mxu0 %v4358
      %v4449 = vpop.f32.mrb[0].mxu0
      %v4450 = vadd.f32 0.0, %v4449
      %v4451 = vpop.f32.mrb[0].mxu0
      %v4452 = vpop.f32.mrb[0].mxu0
      %v4453 = vadd.f32 0.0, %v4452
      %v4454 = vpop.f32.mrb[0].mxu0
      %4455 = vmatprep.mubr.bf16.mxu0 0
      %4456 = vmatmul.mubr.bf16.gmra.mrb[0].mxu0 %v4361
      %v4457 = vpop.f32.mrb[0].mxu0
      %v4458 = vadd.f32 0.0, %v4457
      %v4459 = vpop.f32.mrb[0].mxu0
      %v4460 = vpop.f32.mrb[0].mxu0
      %v4461 = vadd.f32 0.0, %v4460
      %v4462 = vpop.f32.mrb[0].mxu0
      %4463 = vmatprep.mubr.bf16.mxu0 0
      %4464 = vmatmul.mubr.bf16.gmra.mrb[0].mxu0 %v4364
      %v4465 = vpop.f32.mrb[0].mxu0
      %v4466 = vadd.f32 0.0, %v4465
      %v4467 = vpop.f32.mrb[0].mxu0
      %v4468 = vpop.f32.mrb[0].mxu0
      %v4469 = vadd.f32 0.0, %v4468
      %v4470 = vpop.f32.mrb[0].mxu0
      %4471 = vmatprep.mubr.bf16.mxu0 0
      %4472 = vmatmul.mubr.bf16.gmra.mrb[0].mxu0 %v4367
      %v4473 = vpop.f32.mrb[0].mxu0
      %v4474 = vadd.f32 0.0, %v4473
      %v4475 = vpop.f32.mrb[0].mxu0
      %v4476 = vpop.f32.mrb[0].mxu0
      %v4477 = vadd.f32 0.0, %v4476
      %v4478 = vpop.f32.mrb[0].mxu0
      %4479 = vmatprep.mubr.bf16.mxu0 0
      %4480 = vmatmul.mubr.bf16.gmra.mrb[0].mxu0 %v4370
      %v4481 = vpop.f32.mrb[0].mxu0
      %v4482 = vadd.f32 0.0, %v4481
      %v4483 = vpop.f32.mrb[0].mxu0
      %v4484 = vpop.f32.mrb[0].mxu0
      %v4485 = vadd.f32 0.0, %v4484
      %v4486 = vpop.f32.mrb[0].mxu0
      %4487 = vmatprep.mubr.bf16.mxu0 0
      %4488 = vmatmul.mubr.bf16.gmra.mrb[0].mxu0 %v4373
      %v4489 = vpop.f32.mrb[0].mxu0
      %v4490 = vadd.f32 0.0, %v4489
      %v4491 = vpop.f32.mrb[0].mxu0
      %v4492 = vpop.f32.mrb[0].mxu0
      %v4493 = vadd.f32 0.0, %v4492
      %v4494 = vpop.f32.mrb[0].mxu0
      %4495 = vmatprep.mubr.bf16.mxu0 0
      %4496 = vmatmul.mubr.bf16.gmra.mrb[0].mxu0 %v4376
      %v4497 = vpop.f32.mrb[0].mxu0
      %v4498 = vadd.f32 0.0, %v4497
      %v4499 = vpop.f32.mrb[0].mxu0
      %v4500 = vpop.f32.mrb[0].mxu0
      %v4501 = vadd.f32 0.0, %v4500
      %v4502 = vpop.f32.mrb[0].mxu0
      %4503 = vmatprep.mubr.bf16.mxu0 0
      %4504 = vmatmul.mubr.bf16.gmra.mrb[0].mxu0 %v4379
      %v4505 = vpop.f32.mrb[0].mxu0
      %v4506 = vadd.f32 0.0, %v4505
      %v4507 = vpop.f32.mrb[0].mxu0
      %v4508 = vpop.f32.mrb[0].mxu0
      %v4509 = vadd.f32 0.0, %v4508
      %v4510 = vpop.f32.mrb[0].mxu0
      %4511 = vmatprep.mubr.bf16.mxu0 0
      %4512 = vmatmul.mubr.bf16.gmra.mrb[0].mxu0 %v4382
      %v4513 = vpop.f32.mrb[0].mxu0
      %v4514 = vadd.f32 0.0, %v4513
      %v4515 = vpop.f32.mrb[0].mxu0
      %v4516 = vpop.f32.mrb[0].mxu0
      %v4517 = vadd.f32 0.0, %v4516
      %v4518 = vpop.f32.mrb[0].mxu0
      %4519 = vmatprep.mubr.bf16.mxu0 0
      %4520 = vmatmul.mubr.bf16.gmra.mrb[0].mxu0 %v4385
      %v4521 = vpop.f32.mrb[0].mxu0
      %v4522 = vadd.f32 0.0, %v4521
      %v4523 = vpop.f32.mrb[0].mxu0
      %v4524 = vpop.f32.mrb[0].mxu0
      %v4525 = vadd.f32 0.0, %v4524
      %v4526 = vpop.f32.mrb[0].mxu0
      %4527 = vmatprep.mubr.bf16.mxu0 0
      %4528 = vmatmul.mubr.bf16.gmra.mrb[0].mxu0 %v4388
      %v4529 = vpop.f32.mrb[0].mxu0
      %v4530 = vadd.f32 0.0, %v4529
      %v4531 = vpop.f32.mrb[0].mxu0
      %v4532 = vpop.f32.mrb[0].mxu0
      %v4533 = vadd.f32 0.0, %v4532
      %v4534 = vpop.f32.mrb[0].mxu0
      %4535 = vmatprep.mubr.bf16.mxu0 0
      %4536 = vmatmul.mubr.bf16.gmra.mrb[0].mxu0 %v4391
      %v4537 = vpop.f32.mrb[0].mxu0
      %v4538 = vadd.f32 0.0, %v4537
      %v4539 = vpop.f32.mrb[0].mxu0
      %v4540 = vpop.f32.mrb[0].mxu0
      %v4541 = vadd.f32 0.0, %v4540
      %v4542 = vpop.f32.mrb[0].mxu0
      %4543 = vmatprep.mubr.bf16.mxu0 0
      %4544 = vmatmul.mubr.bf16.gmra.mrb[0].mxu0 %v4394
      %v4545 = vpop.f32.mrb[0].mxu0
      %v4546 = vadd.f32 0.0, %v4545
      %v4547 = vpop.f32.mrb[0].mxu0
      %v4548 = vpop.f32.mrb[0].mxu0
      %v4549 = vadd.f32 0.0, %v4548
      %v4550 = vpop.f32.mrb[0].mxu0
      %4551 = vmatprep.mubr.bf16.mxu0 0
      %4552 = vmatmul.mubr.bf16.gmra.mrb[0].mxu0 %v4397
      %v4553 = vpop.f32.mrb[0].mxu0
      %v4554 = vadd.f32 0.0, %v4553
      %v4555 = vpop.f32.mrb[0].mxu0
      %v4556 = vpop.f32.mrb[0].mxu0
      %v4557 = vadd.f32 0.0, %v4556
      %v4558 = vpop.f32.mrb[0].mxu0
      %4559 = vdwg.mxu0
      %v4560 = vadd.f32 %v4262, %v4434
      %v4561 = vadd.f32 %v4263, %v4437
      %v4562 = vadd.f32 %v4264, %v4442
      %v4563 = vadd.f32 %v4265, %v4445
      %v4564 = vadd.f32 %v4266, %v4450
      %v4565 = vadd.f32 %v4267, %v4453
      %v4566 = vadd.f32 %v4268, %v4458
      %v4567 = vadd.f32 %v4269, %v4461
      %v4568 = vadd.f32 %v4270, %v4466
      %v4569 = vadd.f32 %v4271, %v4469
      %v4570 = vadd.f32 %v4272, %v4474
      %v4571 = vadd.f32 %v4273, %v4477
      %v4572 = vadd.f32 %v4274, %v4482
      %v4573 = vadd.f32 %v4275, %v4485
      %v4574 = vadd.f32 %v4276, %v4490
      %v4575 = vadd.f32 %v4277, %v4493
      %v4576 = vadd.f32 %v4278, %v4498
      %v4577 = vadd.f32 %v4279, %v4501
      %v4578 = vadd.f32 %v4280, %v4506
      %v4579 = vadd.f32 %v4281, %v4509
      %v4580 = vadd.f32 %v4282, %v4514
      %v4581 = vadd.f32 %v4283, %v4517
      %v4582 = vadd.f32 %v4284, %v4522
      %v4583 = vadd.f32 %v4285, %v4525
      %v4584 = vadd.f32 %v4286, %v4530
      %v4585 = vadd.f32 %v4287, %v4533
      %v4586 = vadd.f32 %v4288, %v4538
      %v4587 = vadd.f32 %v4289, %v4541
      %v4588 = vadd.f32 %v4290, %v4546
      %v4589 = vadd.f32 %v4291, %v4549
      %v4590 = vadd.f32 %v4292, %v4554
      %v4591 = vadd.f32 %v4293, %v4557
      %v4592 = vld [vmem:[%s3134 + $0x2] sm:$0xff]
      %v4593 = vld [vmem:[%s3134 + $0xa] sm:$0xff]
      %v4594 = vld [vmem:[%s3134 + $0x1a] sm:$0xff]
      %v4595 = vld [vmem:[%s3134 + $0x22] sm:$0xff]
      %v4596 = vld [vmem:[%s3134 + $0x32] sm:$0xff]
      %v4597 = vld [vmem:[%s3134 + $0x3a] sm:$0xff]
      %v4598 = vld [vmem:[%s3134 + $0x4a] sm:$0xff]
      %v4599 = vld [vmem:[%s3134 + $0x52] sm:$0xff]
      %v4600 = vld [vmem:[%s3134 + $0x62] sm:$0xff]
      %v4601 = vld [vmem:[%s3134 + $0x6a] sm:$0xff]
      %v4602 = vld [vmem:[%s3134 + $0x7a] sm:$0xff]
      %v4603 = vld [vmem:[%s3134 + $0x82] sm:$0xff]
      %v4604 = vld [vmem:[%s3134 + $0x92] sm:$0xff]
      %v4605 = vld [vmem:[%s3134 + $0x9a] sm:$0xff]
      %v4606 = vld [vmem:[%s3134 + $0xaa] sm:$0xff]
      %v4607 = vld [vmem:[%s3134 + $0xb2] sm:$0xff]
      %v4608 = vld [vmem:[%s3134 + $0xc2] sm:$0xff]
      %v4609 = vld [vmem:[%s3134 + $0xca] sm:$0xff]
      %v4610 = vld [vmem:[%s3134 + $0xda] sm:$0xff]
      %v4611 = vld [vmem:[%s3134 + $0xe2] sm:$0xff]
      %v4612 = vld [vmem:[%s3134 + $0xf2] sm:$0xff]
      %v4613 = vld [vmem:[%s3134 + $0xfa] sm:$0xff]
      %v4614 = vld [vmem:[%s3134 + $0x10a] sm:$0xff]
      %v4615 = vld [vmem:[%s3134 + $0x112] sm:$0xff]
      %v4616 = vld [vmem:[%s3134 + $0x122] sm:$0xff]
      %v4617 = vld [vmem:[%s3134 + $0x12a] sm:$0xff]
      %v4618 = vld [vmem:[%s3134 + $0x13a] sm:$0xff]
      %v4619 = vld [vmem:[%s3134 + $0x142] sm:$0xff]
      %v4620 = vld [vmem:[%s3134 + $0x152] sm:$0xff]
      %v4621 = vld [vmem:[%s3134 + $0x15a] sm:$0xff]
      %v4622 = vld [vmem:[%s3134 + $0x16a] sm:$0xff]
      %v4623 = vld [vmem:[%s3134 + $0x172] sm:$0xff]
      %v4624 = vpack.c.bf16 %v4593, %v4592
      %v4625 = vpack.c.bf16 %v4595, %v4594
      %v4626 = vpack.c.bf16 %v4597, %v4596
      %v4627 = vpack.c.bf16 %v4599, %v4598
      %v4628 = vpack.c.bf16 %v4601, %v4600
      %v4629 = vpack.c.bf16 %v4603, %v4602
      %v4630 = vpack.c.bf16 %v4605, %v4604
      %v4631 = vpack.c.bf16 %v4607, %v4606
      %v4632 = vpack.c.bf16 %v4609, %v4608
      %v4633 = vpack.c.bf16 %v4611, %v4610
      %v4634 = vpack.c.bf16 %v4613, %v4612
      %v4635 = vpack.c.bf16 %v4615, %v4614
      %v4636 = vpack.c.bf16 %v4617, %v4616
      %v4637 = vpack.c.bf16 %v4619, %v4618
      %v4638 = vpack.c.bf16 %v4621, %v4620
      %v4639 = vpack.c.bf16 %v4623, %v4622
      %s4640 = scalar_lea.vmem %s3, 40
      %v4641 = vld [vmem:[%s4640] sm:$0xf]
      %v4642 = vld [vmem:[%s4640 + $0x4] sm:$0xf]
      %v4645 = vunpack.c.l.b16 %v4641
      %v4646 = vunpack.c.l.b16 %v4642
      %v4647 = vpack.c.b16 %v4646, %v4645
      %v4650 = vsel %vm334, %v4624, 0
      %v4653 = vsel %vm334, %v4625, 0
      %v4656 = vsel %vm334, %v4626, 0
      %v4659 = vsel %vm334, %v4627, 0
      %v4662 = vsel %vm334, %v4628, 0
      %v4665 = vsel %vm334, %v4629, 0
      %v4668 = vsel %vm334, %v4630, 0
      %v4671 = vsel %vm334, %v4631, 0
      %v4674 = vsel %vm334, %v4632, 0
      %v4677 = vsel %vm334, %v4633, 0
      %v4680 = vsel %vm334, %v4634, 0
      %v4683 = vsel %vm334, %v4635, 0
      %v4686 = vsel %vm334, %v4636, 0
      %v4689 = vsel %vm334, %v4637, 0
      %v4692 = vsel %vm334, %v4638, 0
      %v4695 = vsel %vm334, %v4639, 0
      %4697 = vmatprep.subr.bf16.mxu0 0
      %4698 = vmatpush1.bf16.msra.mxu0 %v4647
      %4699 = vmatprep.subr.bf16.mxu0 0
      %4700 = vmatpush1.bf16.msra.mxu0 0
      %4701 = vmatprep.subr.bf16.mxu0 0
      %4702 = vmatpush1.bf16.msra.mxu0 0
      %4703 = vmatprep.subr.bf16.mxu0 0
      %4704 = vmatpush1.bf16.msra.mxu0 0
      %4705 = vmatprep.subr.bf16.mxu0 0
      %4706 = vmatpush1.bf16.msra.mxu0 0
      %4707 = vmatprep.subr.bf16.mxu0 0
      %4708 = vmatpush1.bf16.msra.mxu0 0
      %4709 = vmatprep.subr.bf16.mxu0 0
      %4710 = vmatpush1.bf16.msra.mxu0 0
      %4711 = vmatprep.subr.bf16.mxu0 0
      %4712 = vmatpush1.bf16.msra.mxu0 0
      %4713 = vmatprep.subr.bf16.mxu0 0
      %4714 = vmatpush1.bf16.msra.mxu0 0
      %4715 = vmatprep.subr.bf16.mxu0 0
      %4716 = vmatpush1.bf16.msra.mxu0 0
      %4717 = vmatprep.subr.bf16.mxu0 0
      %4718 = vmatpush1.bf16.msra.mxu0 0
      %4719 = vmatprep.subr.bf16.mxu0 0
      %4720 = vmatpush1.bf16.msra.mxu0 0
      %4721 = vmatprep.subr.bf16.mxu0 0
      %4722 = vmatpush1.bf16.msra.mxu0 0
      %4723 = vmatprep.subr.bf16.mxu0 0
      %4724 = vmatpush1.bf16.msra.mxu0 0
      %4725 = vmatprep.subr.bf16.mxu0 0
      %4726 = vmatpush1.bf16.msra.mxu0 0
      %4727 = vmatprep.subr.bf16.mxu0 0
      %4728 = vmatpush1.bf16.msra.mxu0 0
      %4729 = vmatprep.mubr.bf16.mxu0 0
      %4730 = vmatmul.mubr.bf16.gmra.mrb[0].mxu0 %v4650
      %v4731 = vpop.f32.mrb[0].mxu0
      %v4732 = vadd.f32 0.0, %v4731
      %v4733 = vpop.f32.mrb[0].mxu0
      %v4734 = vpop.f32.mrb[0].mxu0
      %v4735 = vadd.f32 0.0, %v4734
      %v4736 = vpop.f32.mrb[0].mxu0
      %4737 = vmatprep.mubr.bf16.mxu0 0
      %4738 = vmatmul.mubr.bf16.gmra.mrb[0].mxu0 %v4653
      %v4739 = vpop.f32.mrb[0].mxu0
      %v4740 = vadd.f32 0.0, %v4739
      %v4741 = vpop.f32.mrb[0].mxu0
      %v4742 = vpop.f32.mrb[0].mxu0
      %v4743 = vadd.f32 0.0, %v4742
      %v4744 = vpop.f32.mrb[0].mxu0
      %4745 = vmatprep.mubr.bf16.mxu0 0
      %4746 = vmatmul.mubr.bf16.gmra.mrb[0].mxu0 %v4656
      %v4747 = vpop.f32.mrb[0].mxu0
      %v4748 = vadd.f32 0.0, %v4747
      %v4749 = vpop.f32.mrb[0].mxu0
      %v4750 = vpop.f32.mrb[0].mxu0
      %v4751 = vadd.f32 0.0, %v4750
      %v4752 = vpop.f32.mrb[0].mxu0
      %4753 = vmatprep.mubr.bf16.mxu0 0
      %4754 = vmatmul.mubr.bf16.gmra.mrb[0].mxu0 %v4659
      %v4755 = vpop.f32.mrb[0].mxu0
      %v4756 = vadd.f32 0.0, %v4755
      %v4757 = vpop.f32.mrb[0].mxu0
      %v4758 = vpop.f32.mrb[0].mxu0
      %v4759 = vadd.f32 0.0, %v4758
      %v4760 = vpop.f32.mrb[0].mxu0
      %4761 = vmatprep.mubr.bf16.mxu0 0
      %4762 = vmatmul.mubr.bf16.gmra.mrb[0].mxu0 %v4662
      %v4763 = vpop.f32.mrb[0].mxu0
      %v4764 = vadd.f32 0.0, %v4763
      %v4765 = vpop.f32.mrb[0].mxu0
      %v4766 = vpop.f32.mrb[0].mxu0
      %v4767 = vadd.f32 0.0, %v4766
      %v4768 = vpop.f32.mrb[0].mxu0
      %4769 = vmatprep.mubr.bf16.mxu0 0
      %4770 = vmatmul.mubr.bf16.gmra.mrb[0].mxu0 %v4665
      %v4771 = vpop.f32.mrb[0].mxu0
      %v4772 = vadd.f32 0.0, %v4771
      %v4773 = vpop.f32.mrb[0].mxu0
      %v4774 = vpop.f32.mrb[0].mxu0
      %v4775 = vadd.f32 0.0, %v4774
      %v4776 = vpop.f32.mrb[0].mxu0
      %4777 = vmatprep.mubr.bf16.mxu0 0
      %4778 = vmatmul.mubr.bf16.gmra.mrb[0].mxu0 %v4668
      %v4779 = vpop.f32.mrb[0].mxu0
      %v4780 = vadd.f32 0.0, %v4779
      %v4781 = vpop.f32.mrb[0].mxu0
      %v4782 = vpop.f32.mrb[0].mxu0
      %v4783 = vadd.f32 0.0, %v4782
      %v4784 = vpop.f32.mrb[0].mxu0
      %4785 = vmatprep.mubr.bf16.mxu0 0
      %4786 = vmatmul.mubr.bf16.gmra.mrb[0].mxu0 %v4671
      %v4787 = vpop.f32.mrb[0].mxu0
      %v4788 = vadd.f32 0.0, %v4787
      %v4789 = vpop.f32.mrb[0].mxu0
      %v4790 = vpop.f32.mrb[0].mxu0
      %v4791 = vadd.f32 0.0, %v4790
      %v4792 = vpop.f32.mrb[0].mxu0
      %4793 = vmatprep.mubr.bf16.mxu0 0
      %4794 = vmatmul.mubr.bf16.gmra.mrb[0].mxu0 %v4674
      %v4795 = vpop.f32.mrb[0].mxu0
      %v4796 = vadd.f32 0.0, %v4795
      %v4797 = vpop.f32.mrb[0].mxu0
      %v4798 = vpop.f32.mrb[0].mxu0
      %v4799 = vadd.f32 0.0, %v4798
      %v4800 = vpop.f32.mrb[0].mxu0
      %4801 = vmatprep.mubr.bf16.mxu0 0
      %4802 = vmatmul.mubr.bf16.gmra.mrb[0].mxu0 %v4677
      %v4803 = vpop.f32.mrb[0].mxu0
      %v4804 = vadd.f32 0.0, %v4803
      %v4805 = vpop.f32.mrb[0].mxu0
      %v4806 = vpop.f32.mrb[0].mxu0
      %v4807 = vadd.f32 0.0, %v4806
      %v4808 = vpop.f32.mrb[0].mxu0
      %4809 = vmatprep.mubr.bf16.mxu0 0
      %4810 = vmatmul.mubr.bf16.gmra.mrb[0].mxu0 %v4680
      %v4811 = vpop.f32.mrb[0].mxu0
      %v4812 = vadd.f32 0.0, %v4811
      %v4813 = vpop.f32.mrb[0].mxu0
      %v4814 = vpop.f32.mrb[0].mxu0
      %v4815 = vadd.f32 0.0, %v4814
      %v4816 = vpop.f32.mrb[0].mxu0
      %4817 = vmatprep.mubr.bf16.mxu0 0
      %4818 = vmatmul.mubr.bf16.gmra.mrb[0].mxu0 %v4683
      %v4819 = vpop.f32.mrb[0].mxu0
      %v4820 = vadd.f32 0.0, %v4819
      %v4821 = vpop.f32.mrb[0].mxu0
      %v4822 = vpop.f32.mrb[0].mxu0
      %v4823 = vadd.f32 0.0, %v4822
      %v4824 = vpop.f32.mrb[0].mxu0
      %4825 = vmatprep.mubr.bf16.mxu0 0
      %4826 = vmatmul.mubr.bf16.gmra.mrb[0].mxu0 %v4686
      %v4827 = vpop.f32.mrb[0].mxu0
      %v4828 = vadd.f32 0.0, %v4827
      %v4829 = vpop.f32.mrb[0].mxu0
      %v4830 = vpop.f32.mrb[0].mxu0
      %v4831 = vadd.f32 0.0, %v4830
      %v4832 = vpop.f32.mrb[0].mxu0
      %4833 = vmatprep.mubr.bf16.mxu0 0
      %4834 = vmatmul.mubr.bf16.gmra.mrb[0].mxu0 %v4689
      %v4835 = vpop.f32.mrb[0].mxu0
      %v4836 = vadd.f32 0.0, %v4835
      %v4837 = vpop.f32.mrb[0].mxu0
      %v4838 = vpop.f32.mrb[0].mxu0
      %v4839 = vadd.f32 0.0, %v4838
      %v4840 = vpop.f32.mrb[0].mxu0
      %4841 = vmatprep.mubr.bf16.mxu0 0
      %4842 = vmatmul.mubr.bf16.gmra.mrb[0].mxu0 %v4692
      %v4843 = vpop.f32.mrb[0].mxu0
      %v4844 = vadd.f32 0.0, %v4843
      %v4845 = vpop.f32.mrb[0].mxu0
      %v4846 = vpop.f32.mrb[0].mxu0
      %v4847 = vadd.f32 0.0, %v4846
      %v4848 = vpop.f32.mrb[0].mxu0
      %4849 = vmatprep.mubr.bf16.mxu0 0
      %4850 = vmatmul.mubr.bf16.gmra.mrb[0].mxu0 %v4695
      %v4851 = vpop.f32.mrb[0].mxu0
      %v4852 = vadd.f32 0.0, %v4851
      %v4853 = vpop.f32.mrb[0].mxu0
      %v4854 = vpop.f32.mrb[0].mxu0
      %v4855 = vadd.f32 0.0, %v4854
      %v4856 = vpop.f32.mrb[0].mxu0
      %4857 = vdwg.mxu0
      %v4858 = vadd.f32 %v4560, %v4732
      %v4859 = vadd.f32 %v4561, %v4735
      %v4860 = vadd.f32 %v4562, %v4740
      %v4861 = vadd.f32 %v4563, %v4743
      %v4862 = vadd.f32 %v4564, %v4748
      %v4863 = vadd.f32 %v4565, %v4751
      %v4864 = vadd.f32 %v4566, %v4756
      %v4865 = vadd.f32 %v4567, %v4759
      %v4866 = vadd.f32 %v4568, %v4764
      %v4867 = vadd.f32 %v4569, %v4767
      %v4868 = vadd.f32 %v4570, %v4772
      %v4869 = vadd.f32 %v4571, %v4775
      %v4870 = vadd.f32 %v4572, %v4780
      %v4871 = vadd.f32 %v4573, %v4783
      %v4872 = vadd.f32 %v4574, %v4788
      %v4873 = vadd.f32 %v4575, %v4791
      %v4874 = vadd.f32 %v4576, %v4796
      %v4875 = vadd.f32 %v4577, %v4799
      %v4876 = vadd.f32 %v4578, %v4804
      %v4877 = vadd.f32 %v4579, %v4807
      %v4878 = vadd.f32 %v4580, %v4812
      %v4879 = vadd.f32 %v4581, %v4815
      %v4880 = vadd.f32 %v4582, %v4820
      %v4881 = vadd.f32 %v4583, %v4823
      %v4882 = vadd.f32 %v4584, %v4828
      %v4883 = vadd.f32 %v4585, %v4831
      %v4884 = vadd.f32 %v4586, %v4836
      %v4885 = vadd.f32 %v4587, %v4839
      %v4886 = vadd.f32 %v4588, %v4844
      %v4887 = vadd.f32 %v4589, %v4847
      %v4888 = vadd.f32 %v4590, %v4852
      %v4889 = vadd.f32 %v4591, %v4855
      %s4890 = scalar_lea.vmem [#allocation3], 48
      %v4891 = vld [vmem:[%s4890] sm:$0xff]
      %v4892 = vld [vmem:[%s4890 + $0x8] sm:$0xff]
      %v4893 = vld [vmem:[%s4890 + $0x18] sm:$0xff]
      %v4894 = vld [vmem:[%s4890 + $0x20] sm:$0xff]
      %v4895 = vld [vmem:[%s4890 + $0x30] sm:$0xff]
      %v4896 = vld [vmem:[%s4890 + $0x38] sm:$0xff]
      %v4897 = vld [vmem:[%s4890 + $0x48] sm:$0xff]
      %v4898 = vld [vmem:[%s4890 + $0x50] sm:$0xff]
      %v4899 = vld [vmem:[%s4890 + $0x60] sm:$0xff]
      %v4900 = vld [vmem:[%s4890 + $0x68] sm:$0xff]
      %v4901 = vld [vmem:[%s4890 + $0x78] sm:$0xff]
      %v4902 = vld [vmem:[%s4890 + $0x80] sm:$0xff]
      %v4903 = vld [vmem:[%s4890 + $0x90] sm:$0xff]
      %v4904 = vld [vmem:[%s4890 + $0x98] sm:$0xff]
      %v4905 = vld [vmem:[%s4890 + $0xa8] sm:$0xff]
      %v4906 = vld [vmem:[%s4890 + $0xb0] sm:$0xff]
      %v4907 = vld [vmem:[%s4890 + $0xc0] sm:$0xff]
      %v4908 = vld [vmem:[%s4890 + $0xc8] sm:$0xff]
      %v4909 = vld [vmem:[%s4890 + $0xd8] sm:$0xff]
      %v4910 = vld [vmem:[%s4890 + $0xe0] sm:$0xff]
      %v4911 = vld [vmem:[%s4890 + $0xf0] sm:$0xff]
      %v4912 = vld [vmem:[%s4890 + $0xf8] sm:$0xff]
      %v4913 = vld [vmem:[%s4890 + $0x108] sm:$0xff]
      %v4914 = vld [vmem:[%s4890 + $0x110] sm:$0xff]
      %v4915 = vld [vmem:[%s4890 + $0x120] sm:$0xff]
      %v4916 = vld [vmem:[%s4890 + $0x128] sm:$0xff]
      %v4917 = vld [vmem:[%s4890 + $0x138] sm:$0xff]
      %v4918 = vld [vmem:[%s4890 + $0x140] sm:$0xff]
      %v4919 = vld [vmem:[%s4890 + $0x150] sm:$0xff]
      %v4920 = vld [vmem:[%s4890 + $0x158] sm:$0xff]
      %v4921 = vld [vmem:[%s4890 + $0x168] sm:$0xff]
      %v4922 = vld [vmem:[%s4890 + $0x170] sm:$0xff]
      %v4923 = vpack.c.bf16 %v4892, %v4891
      %v4924 = vpack.c.bf16 %v4894, %v4893
      %v4925 = vpack.c.bf16 %v4896, %v4895
      %v4926 = vpack.c.bf16 %v4898, %v4897
      %v4927 = vpack.c.bf16 %v4900, %v4899
      %v4928 = vpack.c.bf16 %v4902, %v4901
      %v4929 = vpack.c.bf16 %v4904, %v4903
      %v4930 = vpack.c.bf16 %v4906, %v4905
      %v4931 = vpack.c.bf16 %v4908, %v4907
      %v4932 = vpack.c.bf16 %v4910, %v4909
      %v4933 = vpack.c.bf16 %v4912, %v4911
      %v4934 = vpack.c.bf16 %v4914, %v4913
      %v4935 = vpack.c.bf16 %v4916, %v4915
      %v4936 = vpack.c.bf16 %v4918, %v4917
      %v4937 = vpack.c.bf16 %v4920, %v4919
      %v4938 = vpack.c.bf16 %v4922, %v4921
      %s4939 = scalar_lea.vmem %s3, 48
      %v4940 = vld [vmem:[%s4939] sm:$0xf]
      %v4941 = vld [vmem:[%s4939 + $0x4] sm:$0xf]
      %v4944 = vunpack.c.l.b16 %v4940
      %v4945 = vunpack.c.l.b16 %v4941
      %v4946 = vpack.c.b16 %v4945, %v4944
      %v4949 = vsel %vm334, %v4923, 0
      %v4952 = vsel %vm334, %v4924, 0
      %v4955 = vsel %vm334, %v4925, 0
      %v4958 = vsel %vm334, %v4926, 0
      %v4961 = vsel %vm334, %v4927, 0
      %v4964 = vsel %vm334, %v4928, 0
      %v4967 = vsel %vm334, %v4929, 0
      %v4970 = vsel %vm334, %v4930, 0
      %v4973 = vsel %vm334, %v4931, 0
      %v4976 = vsel %vm334, %v4932, 0
      %v4979 = vsel %vm334, %v4933, 0
      %v4982 = vsel %vm334, %v4934, 0
      %v4985 = vsel %vm334, %v4935, 0
      %v4988 = vsel %vm334, %v4936, 0
      %v4991 = vsel %vm334, %v4937, 0
      %v4994 = vsel %vm334, %v4938, 0
      %4996 = vmatprep.subr.bf16.mxu0 0
      %4997 = vmatpush1.bf16.msra.mxu0 %v4946
      %4998 = vmatprep.subr.bf16.mxu0 0
      %4999 = vmatpush1.bf16.msra.mxu0 0
      %5000 = vmatprep.subr.bf16.mxu0 0
      %5001 = vmatpush1.bf16.msra.mxu0 0
      %5002 = vmatprep.subr.bf16.mxu0 0
      %5003 = vmatpush1.bf16.msra.mxu0 0
      %5004 = vmatprep.subr.bf16.mxu0 0
      %5005 = vmatpush1.bf16.msra.mxu0 0
      %5006 = vmatprep.subr.bf16.mxu0 0
      %5007 = vmatpush1.bf16.msra.mxu0 0
      %5008 = vmatprep.subr.bf16.mxu0 0
      %5009 = vmatpush1.bf16.msra.mxu0 0
      %5010 = vmatprep.subr.bf16.mxu0 0
      %5011 = vmatpush1.bf16.msra.mxu0 0
      %5012 = vmatprep.subr.bf16.mxu0 0
      %5013 = vmatpush1.bf16.msra.mxu0 0
      %5014 = vmatprep.subr.bf16.mxu0 0
      %5015 = vmatpush1.bf16.msra.mxu0 0
      %5016 = vmatprep.subr.bf16.mxu0 0
      %5017 = vmatpush1.bf16.msra.mxu0 0
      %5018 = vmatprep.subr.bf16.mxu0 0
      %5019 = vmatpush1.bf16.msra.mxu0 0
      %5020 = vmatprep.subr.bf16.mxu0 0
      %5021 = vmatpush1.bf16.msra.mxu0 0
      %5022 = vmatprep.subr.bf16.mxu0 0
      %5023 = vmatpush1.bf16.msra.mxu0 0
      %5024 = vmatprep.subr.bf16.mxu0 0
      %5025 = vmatpush1.bf16.msra.mxu0 0
      %5026 = vmatprep.subr.bf16.mxu0 0
      %5027 = vmatpush1.bf16.msra.mxu0 0
      %5028 = vmatprep.mubr.bf16.mxu0 0
      %5029 = vmatmul.mubr.bf16.gmra.mrb[0].mxu0 %v4949
      %v5030 = vpop.f32.mrb[0].mxu0
      %v5031 = vadd.f32 0.0, %v5030
      %v5032 = vpop.f32.mrb[0].mxu0
      %v5033 = vpop.f32.mrb[0].mxu0
      %v5034 = vadd.f32 0.0, %v5033
      %v5035 = vpop.f32.mrb[0].mxu0
      %5036 = vmatprep.mubr.bf16.mxu0 0
      %5037 = vmatmul.mubr.bf16.gmra.mrb[0].mxu0 %v4952
      %v5038 = vpop.f32.mrb[0].mxu0
      %v5039 = vadd.f32 0.0, %v5038
      %v5040 = vpop.f32.mrb[0].mxu0
      %v5041 = vpop.f32.mrb[0].mxu0
      %v5042 = vadd.f32 0.0, %v5041
      %v5043 = vpop.f32.mrb[0].mxu0
      %5044 = vmatprep.mubr.bf16.mxu0 0
      %5045 = vmatmul.mubr.bf16.gmra.mrb[0].mxu0 %v4955
      %v5046 = vpop.f32.mrb[0].mxu0
      %v5047 = vadd.f32 0.0, %v5046
      %v5048 = vpop.f32.mrb[0].mxu0
      %v5049 = vpop.f32.mrb[0].mxu0
      %v5050 = vadd.f32 0.0, %v5049
      %v5051 = vpop.f32.mrb[0].mxu0
      %5052 = vmatprep.mubr.bf16.mxu0 0
      %5053 = vmatmul.mubr.bf16.gmra.mrb[0].mxu0 %v4958
      %v5054 = vpop.f32.mrb[0].mxu0
      %v5055 = vadd.f32 0.0, %v5054
      %v5056 = vpop.f32.mrb[0].mxu0
      %v5057 = vpop.f32.mrb[0].mxu0
      %v5058 = vadd.f32 0.0, %v5057
      %v5059 = vpop.f32.mrb[0].mxu0
      %5060 = vmatprep.mubr.bf16.mxu0 0
      %5061 = vmatmul.mubr.bf16.gmra.mrb[0].mxu0 %v4961
      %v5062 = vpop.f32.mrb[0].mxu0
      %v5063 = vadd.f32 0.0, %v5062
      %v5064 = vpop.f32.mrb[0].mxu0
      %v5065 = vpop.f32.mrb[0].mxu0
      %v5066 = vadd.f32 0.0, %v5065
      %v5067 = vpop.f32.mrb[0].mxu0
      %5068 = vmatprep.mubr.bf16.mxu0 0
      %5069 = vmatmul.mubr.bf16.gmra.mrb[0].mxu0 %v4964
      %v5070 = vpop.f32.mrb[0].mxu0
      %v5071 = vadd.f32 0.0, %v5070
      %v5072 = vpop.f32.mrb[0].mxu0
      %v5073 = vpop.f32.mrb[0].mxu0
      %v5074 = vadd.f32 0.0, %v5073
      %v5075 = vpop.f32.mrb[0].mxu0
      %5076 = vmatprep.mubr.bf16.mxu0 0
      %5077 = vmatmul.mubr.bf16.gmra.mrb[0].mxu0 %v4967
      %v5078 = vpop.f32.mrb[0].mxu0
      %v5079 = vadd.f32 0.0, %v5078
      %v5080 = vpop.f32.mrb[0].mxu0
      %v5081 = vpop.f32.mrb[0].mxu0
      %v5082 = vadd.f32 0.0, %v5081
      %v5083 = vpop.f32.mrb[0].mxu0
      %5084 = vmatprep.mubr.bf16.mxu0 0
      %5085 = vmatmul.mubr.bf16.gmra.mrb[0].mxu0 %v4970
      %v5086 = vpop.f32.mrb[0].mxu0
      %v5087 = vadd.f32 0.0, %v5086
      %v5088 = vpop.f32.mrb[0].mxu0
      %v5089 = vpop.f32.mrb[0].mxu0
      %v5090 = vadd.f32 0.0, %v5089
      %v5091 = vpop.f32.mrb[0].mxu0
      %5092 = vmatprep.mubr.bf16.mxu0 0
      %5093 = vmatmul.mubr.bf16.gmra.mrb[0].mxu0 %v4973
      %v5094 = vpop.f32.mrb[0].mxu0
      %v5095 = vadd.f32 0.0, %v5094
      %v5096 = vpop.f32.mrb[0].mxu0
      %v5097 = vpop.f32.mrb[0].mxu0
      %v5098 = vadd.f32 0.0, %v5097
      %v5099 = vpop.f32.mrb[0].mxu0
      %5100 = vmatprep.mubr.bf16.mxu0 0
      %5101 = vmatmul.mubr.bf16.gmra.mrb[0].mxu0 %v4976
      %v5102 = vpop.f32.mrb[0].mxu0
      %v5103 = vadd.f32 0.0, %v5102
      %v5104 = vpop.f32.mrb[0].mxu0
      %v5105 = vpop.f32.mrb[0].mxu0
      %v5106 = vadd.f32 0.0, %v5105
      %v5107 = vpop.f32.mrb[0].mxu0
      %5108 = vmatprep.mubr.bf16.mxu0 0
      %5109 = vmatmul.mubr.bf16.gmra.mrb[0].mxu0 %v4979
      %v5110 = vpop.f32.mrb[0].mxu0
      %v5111 = vadd.f32 0.0, %v5110
      %v5112 = vpop.f32.mrb[0].mxu0
      %v5113 = vpop.f32.mrb[0].mxu0
      %v5114 = vadd.f32 0.0, %v5113
      %v5115 = vpop.f32.mrb[0].mxu0
      %5116 = vmatprep.mubr.bf16.mxu0 0
      %5117 = vmatmul.mubr.bf16.gmra.mrb[0].mxu0 %v4982
      %v5118 = vpop.f32.mrb[0].mxu0
      %v5119 = vadd.f32 0.0, %v5118
      %v5120 = vpop.f32.mrb[0].mxu0
      %v5121 = vpop.f32.mrb[0].mxu0
      %v5122 = vadd.f32 0.0, %v5121
      %v5123 = vpop.f32.mrb[0].mxu0
      %5124 = vmatprep.mubr.bf16.mxu0 0
      %5125 = vmatmul.mubr.bf16.gmra.mrb[0].mxu0 %v4985
      %v5126 = vpop.f32.mrb[0].mxu0
      %v5127 = vadd.f32 0.0, %v5126
      %v5128 = vpop.f32.mrb[0].mxu0
      %v5129 = vpop.f32.mrb[0].mxu0
      %v5130 = vadd.f32 0.0, %v5129
      %v5131 = vpop.f32.mrb[0].mxu0
      %5132 = vmatprep.mubr.bf16.mxu0 0
      %5133 = vmatmul.mubr.bf16.gmra.mrb[0].mxu0 %v4988
      %v5134 = vpop.f32.mrb[0].mxu0
      %v5135 = vadd.f32 0.0, %v5134
      %v5136 = vpop.f32.mrb[0].mxu0
      %v5137 = vpop.f32.mrb[0].mxu0
      %v5138 = vadd.f32 0.0, %v5137
      %v5139 = vpop.f32.mrb[0].mxu0
      %5140 = vmatprep.mubr.bf16.mxu0 0
      %5141 = vmatmul.mubr.bf16.gmra.mrb[0].mxu0 %v4991
      %v5142 = vpop.f32.mrb[0].mxu0
      %v5143 = vadd.f32 0.0, %v5142
      %v5144 = vpop.f32.mrb[0].mxu0
      %v5145 = vpop.f32.mrb[0].mxu0
      %v5146 = vadd.f32 0.0, %v5145
      %v5147 = vpop.f32.mrb[0].mxu0
      %5148 = vmatprep.mubr.bf16.mxu0 0
      %5149 = vmatmul.mubr.bf16.gmra.mrb[0].mxu0 %v4994
      %v5150 = vpop.f32.mrb[0].mxu0
      %v5151 = vadd.f32 0.0, %v5150
      %v5152 = vpop.f32.mrb[0].mxu0
      %v5153 = vpop.f32.mrb[0].mxu0
      %v5154 = vadd.f32 0.0, %v5153
      %v5155 = vpop.f32.mrb[0].mxu0
      %5156 = vdwg.mxu0
      %v5157 = vadd.f32 %v4858, %v5031
      %v5158 = vadd.f32 %v4859, %v5034
      %v5159 = vadd.f32 %v4860, %v5039
      %v5160 = vadd.f32 %v4861, %v5042
      %v5161 = vadd.f32 %v4862, %v5047
      %v5162 = vadd.f32 %v4863, %v5050
      %v5163 = vadd.f32 %v4864, %v5055
      %v5164 = vadd.f32 %v4865, %v5058
      %v5165 = vadd.f32 %v4866, %v5063
      %v5166 = vadd.f32 %v4867, %v5066
      %v5167 = vadd.f32 %v4868, %v5071
      %v5168 = vadd.f32 %v4869, %v5074
      %v5169 = vadd.f32 %v4870, %v5079
      %v5170 = vadd.f32 %v4871, %v5082
      %v5171 = vadd.f32 %v4872, %v5087
      %v5172 = vadd.f32 %v4873, %v5090
      %v5173 = vadd.f32 %v4874, %v5095
      %v5174 = vadd.f32 %v4875, %v5098
      %v5175 = vadd.f32 %v4876, %v5103
      %v5176 = vadd.f32 %v4877, %v5106
      %v5177 = vadd.f32 %v4878, %v5111
      %v5178 = vadd.f32 %v4879, %v5114
      %v5179 = vadd.f32 %v4880, %v5119
      %v5180 = vadd.f32 %v4881, %v5122
      %v5181 = vadd.f32 %v4882, %v5127
      %v5182 = vadd.f32 %v4883, %v5130
      %v5183 = vadd.f32 %v4884, %v5135
      %v5184 = vadd.f32 %v4885, %v5138
      %v5185 = vadd.f32 %v4886, %v5143
      %v5186 = vadd.f32 %v4887, %v5146
      %v5187 = vadd.f32 %v4888, %v5151
      %v5188 = vadd.f32 %v4889, %v5154
      %v5189 = vld [vmem:[%s4890 + $0x1] sm:$0xff]
      %v5190 = vld [vmem:[%s4890 + $0x9] sm:$0xff]
      %v5191 = vld [vmem:[%s4890 + $0x19] sm:$0xff]
      %v5192 = vld [vmem:[%s4890 + $0x21] sm:$0xff]
      %v5193 = vld [vmem:[%s4890 + $0x31] sm:$0xff]
      %v5194 = vld [vmem:[%s4890 + $0x39] sm:$0xff]
      %v5195 = vld [vmem:[%s4890 + $0x49] sm:$0xff]
      %v5196 = vld [vmem:[%s4890 + $0x51] sm:$0xff]
      %v5197 = vld [vmem:[%s4890 + $0x61] sm:$0xff]
      %v5198 = vld [vmem:[%s4890 + $0x69] sm:$0xff]
      %v5199 = vld [vmem:[%s4890 + $0x79] sm:$0xff]
      %v5200 = vld [vmem:[%s4890 + $0x81] sm:$0xff]
      %v5201 = vld [vmem:[%s4890 + $0x91] sm:$0xff]
      %v5202 = vld [vmem:[%s4890 + $0x99] sm:$0xff]
      %v5203 = vld [vmem:[%s4890 + $0xa9] sm:$0xff]
      %v5204 = vld [vmem:[%s4890 + $0xb1] sm:$0xff]
      %v5205 = vld [vmem:[%s4890 + $0xc1] sm:$0xff]
      %v5206 = vld [vmem:[%s4890 + $0xc9] sm:$0xff]
      %v5207 = vld [vmem:[%s4890 + $0xd9] sm:$0xff]
      %v5208 = vld [vmem:[%s4890 + $0xe1] sm:$0xff]
      %v5209 = vld [vmem:[%s4890 + $0xf1] sm:$0xff]
      %v5210 = vld [vmem:[%s4890 + $0xf9] sm:$0xff]
      %v5211 = vld [vmem:[%s4890 + $0x109] sm:$0xff]
      %v5212 = vld [vmem:[%s4890 + $0x111] sm:$0xff]
      %v5213 = vld [vmem:[%s4890 + $0x121] sm:$0xff]
      %v5214 = vld [vmem:[%s4890 + $0x129] sm:$0xff]
      %v5215 = vld [vmem:[%s4890 + $0x139] sm:$0xff]
      %v5216 = vld [vmem:[%s4890 + $0x141] sm:$0xff]
      %v5217 = vld [vmem:[%s4890 + $0x151] sm:$0xff]
      %v5218 = vld [vmem:[%s4890 + $0x159] sm:$0xff]
      %v5219 = vld [vmem:[%s4890 + $0x169] sm:$0xff]
      %v5220 = vld [vmem:[%s4890 + $0x171] sm:$0xff]
      %v5221 = vpack.c.bf16 %v5190, %v5189
      %v5222 = vpack.c.bf16 %v5192, %v5191
      %v5223 = vpack.c.bf16 %v5194, %v5193
      %v5224 = vpack.c.bf16 %v5196, %v5195
      %v5225 = vpack.c.bf16 %v5198, %v5197
      %v5226 = vpack.c.bf16 %v5200, %v5199
      %v5227 = vpack.c.bf16 %v5202, %v5201
      %v5228 = vpack.c.bf16 %v5204, %v5203
      %v5229 = vpack.c.bf16 %v5206, %v5205
      %v5230 = vpack.c.bf16 %v5208, %v5207
      %v5231 = vpack.c.bf16 %v5210, %v5209
      %v5232 = vpack.c.bf16 %v5212, %v5211
      %v5233 = vpack.c.bf16 %v5214, %v5213
      %v5234 = vpack.c.bf16 %v5216, %v5215
      %v5235 = vpack.c.bf16 %v5218, %v5217
      %v5236 = vpack.c.bf16 %v5220, %v5219
      %s5237 = scalar_lea.vmem %s3, 56
      %v5238 = vld [vmem:[%s5237] sm:$0xf]
      %v5239 = vld [vmem:[%s5237 + $0x4] sm:$0xf]
      %v5242 = vunpack.c.l.b16 %v5238
      %v5243 = vunpack.c.l.b16 %v5239
      %v5244 = vpack.c.b16 %v5243, %v5242
      %v5247 = vsel %vm334, %v5221, 0
      %v5250 = vsel %vm334, %v5222, 0
      %v5253 = vsel %vm334, %v5223, 0
      %v5256 = vsel %vm334, %v5224, 0
      %v5259 = vsel %vm334, %v5225, 0
      %v5262 = vsel %vm334, %v5226, 0
      %v5265 = vsel %vm334, %v5227, 0
      %v5268 = vsel %vm334, %v5228, 0
      %v5271 = vsel %vm334, %v5229, 0
      %v5274 = vsel %vm334, %v5230, 0
      %v5277 = vsel %vm334, %v5231, 0
      %v5280 = vsel %vm334, %v5232, 0
      %v5283 = vsel %vm334, %v5233, 0
      %v5286 = vsel %vm334, %v5234, 0
      %v5289 = vsel %vm334, %v5235, 0
      %v5292 = vsel %vm334, %v5236, 0
      %5294 = vmatprep.subr.bf16.mxu0 0
      %5295 = vmatpush1.bf16.msra.mxu0 %v5244
      %5296 = vmatprep.subr.bf16.mxu0 0
      %5297 = vmatpush1.bf16.msra.mxu0 0
      %5298 = vmatprep.subr.bf16.mxu0 0
      %5299 = vmatpush1.bf16.msra.mxu0 0
      %5300 = vmatprep.subr.bf16.mxu0 0
      %5301 = vmatpush1.bf16.msra.mxu0 0
      %5302 = vmatprep.subr.bf16.mxu0 0
      %5303 = vmatpush1.bf16.msra.mxu0 0
      %5304 = vmatprep.subr.bf16.mxu0 0
      %5305 = vmatpush1.bf16.msra.mxu0 0
      %5306 = vmatprep.subr.bf16.mxu0 0
      %5307 = vmatpush1.bf16.msra.mxu0 0
      %5308 = vmatprep.subr.bf16.mxu0 0
      %5309 = vmatpush1.bf16.msra.mxu0 0
      %5310 = vmatprep.subr.bf16.mxu0 0
      %5311 = vmatpush1.bf16.msra.mxu0 0
      %5312 = vmatprep.subr.bf16.mxu0 0
      %5313 = vmatpush1.bf16.msra.mxu0 0
      %5314 = vmatprep.subr.bf16.mxu0 0
      %5315 = vmatpush1.bf16.msra.mxu0 0
      %5316 = vmatprep.subr.bf16.mxu0 0
      %5317 = vmatpush1.bf16.msra.mxu0 0
      %5318 = vmatprep.subr.bf16.mxu0 0
      %5319 = vmatpush1.bf16.msra.mxu0 0
      %5320 = vmatprep.subr.bf16.mxu0 0
      %5321 = vmatpush1.bf16.msra.mxu0 0
      %5322 = vmatprep.subr.bf16.mxu0 0
      %5323 = vmatpush1.bf16.msra.mxu0 0
      %5324 = vmatprep.subr.bf16.mxu0 0
      %5325 = vmatpush1.bf16.msra.mxu0 0
      %5326 = vmatprep.mubr.bf16.mxu0 0
      %5327 = vmatmul.mubr.bf16.gmra.mrb[0].mxu0 %v5247
      %v5328 = vpop.f32.mrb[0].mxu0
      %v5329 = vadd.f32 0.0, %v5328
      %v5330 = vpop.f32.mrb[0].mxu0
      %v5331 = vpop.f32.mrb[0].mxu0
      %v5332 = vadd.f32 0.0, %v5331
      %v5333 = vpop.f32.mrb[0].mxu0
      %5334 = vmatprep.mubr.bf16.mxu0 0
      %5335 = vmatmul.mubr.bf16.gmra.mrb[0].mxu0 %v5250
      %v5336 = vpop.f32.mrb[0].mxu0
      %v5337 = vadd.f32 0.0, %v5336
      %v5338 = vpop.f32.mrb[0].mxu0
      %v5339 = vpop.f32.mrb[0].mxu0
      %v5340 = vadd.f32 0.0, %v5339
      %v5341 = vpop.f32.mrb[0].mxu0
      %5342 = vmatprep.mubr.bf16.mxu0 0
      %5343 = vmatmul.mubr.bf16.gmra.mrb[0].mxu0 %v5253
      %v5344 = vpop.f32.mrb[0].mxu0
      %v5345 = vadd.f32 0.0, %v5344
      %v5346 = vpop.f32.mrb[0].mxu0
      %v5347 = vpop.f32.mrb[0].mxu0
      %v5348 = vadd.f32 0.0, %v5347
      %v5349 = vpop.f32.mrb[0].mxu0
      %5350 = vmatprep.mubr.bf16.mxu0 0
      %5351 = vmatmul.mubr.bf16.gmra.mrb[0].mxu0 %v5256
      %v5352 = vpop.f32.mrb[0].mxu0
      %v5353 = vadd.f32 0.0, %v5352
      %v5354 = vpop.f32.mrb[0].mxu0
      %v5355 = vpop.f32.mrb[0].mxu0
      %v5356 = vadd.f32 0.0, %v5355
      %v5357 = vpop.f32.mrb[0].mxu0
      %5358 = vmatprep.mubr.bf16.mxu0 0
      %5359 = vmatmul.mubr.bf16.gmra.mrb[0].mxu0 %v5259
      %v5360 = vpop.f32.mrb[0].mxu0
      %v5361 = vadd.f32 0.0, %v5360
      %v5362 = vpop.f32.mrb[0].mxu0
      %v5363 = vpop.f32.mrb[0].mxu0
      %v5364 = vadd.f32 0.0, %v5363
      %v5365 = vpop.f32.mrb[0].mxu0
      %5366 = vmatprep.mubr.bf16.mxu0 0
      %5367 = vmatmul.mubr.bf16.gmra.mrb[0].mxu0 %v5262
      %v5368 = vpop.f32.mrb[0].mxu0
      %v5369 = vadd.f32 0.0, %v5368
      %v5370 = vpop.f32.mrb[0].mxu0
      %v5371 = vpop.f32.mrb[0].mxu0
      %v5372 = vadd.f32 0.0, %v5371
      %v5373 = vpop.f32.mrb[0].mxu0
      %5374 = vmatprep.mubr.bf16.mxu0 0
      %5375 = vmatmul.mubr.bf16.gmra.mrb[0].mxu0 %v5265
      %v5376 = vpop.f32.mrb[0].mxu0
      %v5377 = vadd.f32 0.0, %v5376
      %v5378 = vpop.f32.mrb[0].mxu0
      %v5379 = vpop.f32.mrb[0].mxu0
      %v5380 = vadd.f32 0.0, %v5379
      %v5381 = vpop.f32.mrb[0].mxu0
      %5382 = vmatprep.mubr.bf16.mxu0 0
      %5383 = vmatmul.mubr.bf16.gmra.mrb[0].mxu0 %v5268
      %v5384 = vpop.f32.mrb[0].mxu0
      %v5385 = vadd.f32 0.0, %v5384
      %v5386 = vpop.f32.mrb[0].mxu0
      %v5387 = vpop.f32.mrb[0].mxu0
      %v5388 = vadd.f32 0.0, %v5387
      %v5389 = vpop.f32.mrb[0].mxu0
      %5390 = vmatprep.mubr.bf16.mxu0 0
      %5391 = vmatmul.mubr.bf16.gmra.mrb[0].mxu0 %v5271
      %v5392 = vpop.f32.mrb[0].mxu0
      %v5393 = vadd.f32 0.0, %v5392
      %v5394 = vpop.f32.mrb[0].mxu0
      %v5395 = vpop.f32.mrb[0].mxu0
      %v5396 = vadd.f32 0.0, %v5395
      %v5397 = vpop.f32.mrb[0].mxu0
      %5398 = vmatprep.mubr.bf16.mxu0 0
      %5399 = vmatmul.mubr.bf16.gmra.mrb[0].mxu0 %v5274
      %v5400 = vpop.f32.mrb[0].mxu0
      %v5401 = vadd.f32 0.0, %v5400
      %v5402 = vpop.f32.mrb[0].mxu0
      %v5403 = vpop.f32.mrb[0].mxu0
      %v5404 = vadd.f32 0.0, %v5403
      %v5405 = vpop.f32.mrb[0].mxu0
      %5406 = vmatprep.mubr.bf16.mxu0 0
      %5407 = vmatmul.mubr.bf16.gmra.mrb[0].mxu0 %v5277
      %v5408 = vpop.f32.mrb[0].mxu0
      %v5409 = vadd.f32 0.0, %v5408
      %v5410 = vpop.f32.mrb[0].mxu0
      %v5411 = vpop.f32.mrb[0].mxu0
      %v5412 = vadd.f32 0.0, %v5411
      %v5413 = vpop.f32.mrb[0].mxu0
      %5414 = vmatprep.mubr.bf16.mxu0 0
      %5415 = vmatmul.mubr.bf16.gmra.mrb[0].mxu0 %v5280
      %v5416 = vpop.f32.mrb[0].mxu0
      %v5417 = vadd.f32 0.0, %v5416
      %v5418 = vpop.f32.mrb[0].mxu0
      %v5419 = vpop.f32.mrb[0].mxu0
      %v5420 = vadd.f32 0.0, %v5419
      %v5421 = vpop.f32.mrb[0].mxu0
      %5422 = vmatprep.mubr.bf16.mxu0 0
      %5423 = vmatmul.mubr.bf16.gmra.mrb[0].mxu0 %v5283
      %v5424 = vpop.f32.mrb[0].mxu0
      %v5425 = vadd.f32 0.0, %v5424
      %v5426 = vpop.f32.mrb[0].mxu0
      %v5427 = vpop.f32.mrb[0].mxu0
      %v5428 = vadd.f32 0.0, %v5427
      %v5429 = vpop.f32.mrb[0].mxu0
      %5430 = vmatprep.mubr.bf16.mxu0 0
      %5431 = vmatmul.mubr.bf16.gmra.mrb[0].mxu0 %v5286
      %v5432 = vpop.f32.mrb[0].mxu0
      %v5433 = vadd.f32 0.0, %v5432
      %v5434 = vpop.f32.mrb[0].mxu0
      %v5435 = vpop.f32.mrb[0].mxu0
      %v5436 = vadd.f32 0.0, %v5435
      %v5437 = vpop.f32.mrb[0].mxu0
      %5438 = vmatprep.mubr.bf16.mxu0 0
      %5439 = vmatmul.mubr.bf16.gmra.mrb[0].mxu0 %v5289
      %v5440 = vpop.f32.mrb[0].mxu0
      %v5441 = vadd.f32 0.0, %v5440
      %v5442 = vpop.f32.mrb[0].mxu0
      %v5443 = vpop.f32.mrb[0].mxu0
      %v5444 = vadd.f32 0.0, %v5443
      %v5445 = vpop.f32.mrb[0].mxu0
      %5446 = vmatprep.mubr.bf16.mxu0 0
      %5447 = vmatmul.mubr.bf16.gmra.mrb[0].mxu0 %v5292
      %v5448 = vpop.f32.mrb[0].mxu0
      %v5449 = vadd.f32 0.0, %v5448
      %v5450 = vpop.f32.mrb[0].mxu0
      %v5451 = vpop.f32.mrb[0].mxu0
      %v5452 = vadd.f32 0.0, %v5451
      %v5453 = vpop.f32.mrb[0].mxu0
      %5454 = vdwg.mxu0
      %v5455 = vadd.f32 %v5157, %v5329
      %v5456 = vadd.f32 %v5158, %v5332
      %v5457 = vadd.f32 %v5159, %v5337
      %v5458 = vadd.f32 %v5160, %v5340
      %v5459 = vadd.f32 %v5161, %v5345
      %v5460 = vadd.f32 %v5162, %v5348
      %v5461 = vadd.f32 %v5163, %v5353
      %v5462 = vadd.f32 %v5164, %v5356
      %v5463 = vadd.f32 %v5165, %v5361
      %v5464 = vadd.f32 %v5166, %v5364
      %v5465 = vadd.f32 %v5167, %v5369
      %v5466 = vadd.f32 %v5168, %v5372
      %v5467 = vadd.f32 %v5169, %v5377
      %v5468 = vadd.f32 %v5170, %v5380
      %v5469 = vadd.f32 %v5171, %v5385
      %v5470 = vadd.f32 %v5172, %v5388
      %v5471 = vadd.f32 %v5173, %v5393
      %v5472 = vadd.f32 %v5174, %v5396
      %v5473 = vadd.f32 %v5175, %v5401
      %v5474 = vadd.f32 %v5176, %v5404
      %v5475 = vadd.f32 %v5177, %v5409
      %v5476 = vadd.f32 %v5178, %v5412
      %v5477 = vadd.f32 %v5179, %v5417
      %v5478 = vadd.f32 %v5180, %v5420
      %v5479 = vadd.f32 %v5181, %v5425
      %v5480 = vadd.f32 %v5182, %v5428
      %v5481 = vadd.f32 %v5183, %v5433
      %v5482 = vadd.f32 %v5184, %v5436
      %v5483 = vadd.f32 %v5185, %v5441
      %v5484 = vadd.f32 %v5186, %v5444
      %v5485 = vadd.f32 %v5187, %v5449
      %v5486 = vadd.f32 %v5188, %v5452
      %v5487 = vld [vmem:[%s4890 + $0x2] sm:$0xff]
      %v5488 = vld [vmem:[%s4890 + $0xa] sm:$0xff]
      %v5489 = vld [vmem:[%s4890 + $0x1a] sm:$0xff]
      %v5490 = vld [vmem:[%s4890 + $0x22] sm:$0xff]
      %v5491 = vld [vmem:[%s4890 + $0x32] sm:$0xff]
      %v5492 = vld [vmem:[%s4890 + $0x3a] sm:$0xff]
      %v5493 = vld [vmem:[%s4890 + $0x4a] sm:$0xff]
      %v5494 = vld [vmem:[%s4890 + $0x52] sm:$0xff]
      %v5495 = vld [vmem:[%s4890 + $0x62] sm:$0xff]
      %v5496 = vld [vmem:[%s4890 + $0x6a] sm:$0xff]
      %v5497 = vld [vmem:[%s4890 + $0x7a] sm:$0xff]
      %v5498 = vld [vmem:[%s4890 + $0x82] sm:$0xff]
      %v5499 = vld [vmem:[%s4890 + $0x92] sm:$0xff]
      %v5500 = vld [vmem:[%s4890 + $0x9a] sm:$0xff]
      %v5501 = vld [vmem:[%s4890 + $0xaa] sm:$0xff]
      %v5502 = vld [vmem:[%s4890 + $0xb2] sm:$0xff]
      %v5503 = vld [vmem:[%s4890 + $0xc2] sm:$0xff]
      %v5504 = vld [vmem:[%s4890 + $0xca] sm:$0xff]
      %v5505 = vld [vmem:[%s4890 + $0xda] sm:$0xff]
      %v5506 = vld [vmem:[%s4890 + $0xe2] sm:$0xff]
      %v5507 = vld [vmem:[%s4890 + $0xf2] sm:$0xff]
      %v5508 = vld [vmem:[%s4890 + $0xfa] sm:$0xff]
      %v5509 = vld [vmem:[%s4890 + $0x10a] sm:$0xff]
      %v5510 = vld [vmem:[%s4890 + $0x112] sm:$0xff]
      %v5511 = vld [vmem:[%s4890 + $0x122] sm:$0xff]
      %v5512 = vld [vmem:[%s4890 + $0x12a] sm:$0xff]
      %v5513 = vld [vmem:[%s4890 + $0x13a] sm:$0xff]
      %v5514 = vld [vmem:[%s4890 + $0x142] sm:$0xff]
      %v5515 = vld [vmem:[%s4890 + $0x152] sm:$0xff]
      %v5516 = vld [vmem:[%s4890 + $0x15a] sm:$0xff]
      %v5517 = vld [vmem:[%s4890 + $0x16a] sm:$0xff]
      %v5518 = vld [vmem:[%s4890 + $0x172] sm:$0xff]
      %v5519 = vpack.c.bf16 %v5488, %v5487
      %v5520 = vpack.c.bf16 %v5490, %v5489
      %v5521 = vpack.c.bf16 %v5492, %v5491
      %v5522 = vpack.c.bf16 %v5494, %v5493
      %v5523 = vpack.c.bf16 %v5496, %v5495
      %v5524 = vpack.c.bf16 %v5498, %v5497
      %v5525 = vpack.c.bf16 %v5500, %v5499
      %v5526 = vpack.c.bf16 %v5502, %v5501
      %v5527 = vpack.c.bf16 %v5504, %v5503
      %v5528 = vpack.c.bf16 %v5506, %v5505
      %v5529 = vpack.c.bf16 %v5508, %v5507
      %v5530 = vpack.c.bf16 %v5510, %v5509
      %v5531 = vpack.c.bf16 %v5512, %v5511
      %v5532 = vpack.c.bf16 %v5514, %v5513
      %v5533 = vpack.c.bf16 %v5516, %v5515
      %v5534 = vpack.c.bf16 %v5518, %v5517
      %s5535 = scalar_lea.vmem %s3, 64
      %v5536 = vld [vmem:[%s5535] sm:$0xf]
      %v5537 = vld [vmem:[%s5535 + $0x4] sm:$0xf]
      %v5540 = vunpack.c.l.b16 %v5536
      %v5541 = vunpack.c.l.b16 %v5537
      %v5542 = vpack.c.b16 %v5541, %v5540
      %v5545 = vsel %vm334, %v5519, 0
      %v5548 = vsel %vm334, %v5520, 0
      %v5551 = vsel %vm334, %v5521, 0
      %v5554 = vsel %vm334, %v5522, 0
      %v5557 = vsel %vm334, %v5523, 0
      %v5560 = vsel %vm334, %v5524, 0
      %v5563 = vsel %vm334, %v5525, 0
      %v5566 = vsel %vm334, %v5526, 0
      %v5569 = vsel %vm334, %v5527, 0
      %v5572 = vsel %vm334, %v5528, 0
      %v5575 = vsel %vm334, %v5529, 0
      %v5578 = vsel %vm334, %v5530, 0
      %v5581 = vsel %vm334, %v5531, 0
      %v5584 = vsel %vm334, %v5532, 0
      %v5587 = vsel %vm334, %v5533, 0
      %v5590 = vsel %vm334, %v5534, 0
      %5592 = vmatprep.subr.bf16.mxu0 0
      %5593 = vmatpush1.bf16.msra.mxu0 %v5542
      %5594 = vmatprep.subr.bf16.mxu0 0
      %5595 = vmatpush1.bf16.msra.mxu0 0
      %5596 = vmatprep.subr.bf16.mxu0 0
      %5597 = vmatpush1.bf16.msra.mxu0 0
      %5598 = vmatprep.subr.bf16.mxu0 0
      %5599 = vmatpush1.bf16.msra.mxu0 0
      %5600 = vmatprep.subr.bf16.mxu0 0
      %5601 = vmatpush1.bf16.msra.mxu0 0
      %5602 = vmatprep.subr.bf16.mxu0 0
      %5603 = vmatpush1.bf16.msra.mxu0 0
      %5604 = vmatprep.subr.bf16.mxu0 0
      %5605 = vmatpush1.bf16.msra.mxu0 0
      %5606 = vmatprep.subr.bf16.mxu0 0
      %5607 = vmatpush1.bf16.msra.mxu0 0
      %5608 = vmatprep.subr.bf16.mxu0 0
      %5609 = vmatpush1.bf16.msra.mxu0 0
      %5610 = vmatprep.subr.bf16.mxu0 0
      %5611 = vmatpush1.bf16.msra.mxu0 0
      %5612 = vmatprep.subr.bf16.mxu0 0
      %5613 = vmatpush1.bf16.msra.mxu0 0
      %5614 = vmatprep.subr.bf16.mxu0 0
      %5615 = vmatpush1.bf16.msra.mxu0 0
      %5616 = vmatprep.subr.bf16.mxu0 0
      %5617 = vmatpush1.bf16.msra.mxu0 0
      %5618 = vmatprep.subr.bf16.mxu0 0
      %5619 = vmatpush1.bf16.msra.mxu0 0
      %5620 = vmatprep.subr.bf16.mxu0 0
      %5621 = vmatpush1.bf16.msra.mxu0 0
      %5622 = vmatprep.subr.bf16.mxu0 0
      %5623 = vmatpush1.bf16.msra.mxu0 0
      %5624 = vmatprep.mubr.bf16.mxu0 0
      %5625 = vmatmul.mubr.bf16.gmra.mrb[0].mxu0 %v5545
      %v5626 = vpop.f32.mrb[0].mxu0
      %v5627 = vadd.f32 0.0, %v5626
      %v5628 = vpop.f32.mrb[0].mxu0
      %v5629 = vpop.f32.mrb[0].mxu0
      %v5630 = vadd.f32 0.0, %v5629
      %v5631 = vpop.f32.mrb[0].mxu0
      %5632 = vmatprep.mubr.bf16.mxu0 0
      %5633 = vmatmul.mubr.bf16.gmra.mrb[0].mxu0 %v5548
      %v5634 = vpop.f32.mrb[0].mxu0
      %v5635 = vadd.f32 0.0, %v5634
      %v5636 = vpop.f32.mrb[0].mxu0
      %v5637 = vpop.f32.mrb[0].mxu0
      %v5638 = vadd.f32 0.0, %v5637
      %v5639 = vpop.f32.mrb[0].mxu0
      %5640 = vmatprep.mubr.bf16.mxu0 0
      %5641 = vmatmul.mubr.bf16.gmra.mrb[0].mxu0 %v5551
      %v5642 = vpop.f32.mrb[0].mxu0
      %v5643 = vadd.f32 0.0, %v5642
      %v5644 = vpop.f32.mrb[0].mxu0
      %v5645 = vpop.f32.mrb[0].mxu0
      %v5646 = vadd.f32 0.0, %v5645
      %v5647 = vpop.f32.mrb[0].mxu0
      %5648 = vmatprep.mubr.bf16.mxu0 0
      %5649 = vmatmul.mubr.bf16.gmra.mrb[0].mxu0 %v5554
      %v5650 = vpop.f32.mrb[0].mxu0
      %v5651 = vadd.f32 0.0, %v5650
      %v5652 = vpop.f32.mrb[0].mxu0
      %v5653 = vpop.f32.mrb[0].mxu0
      %v5654 = vadd.f32 0.0, %v5653
      %v5655 = vpop.f32.mrb[0].mxu0
      %5656 = vmatprep.mubr.bf16.mxu0 0
      %5657 = vmatmul.mubr.bf16.gmra.mrb[0].mxu0 %v5557
      %v5658 = vpop.f32.mrb[0].mxu0
      %v5659 = vadd.f32 0.0, %v5658
      %v5660 = vpop.f32.mrb[0].mxu0
      %v5661 = vpop.f32.mrb[0].mxu0
      %v5662 = vadd.f32 0.0, %v5661
      %v5663 = vpop.f32.mrb[0].mxu0
      %5664 = vmatprep.mubr.bf16.mxu0 0
      %5665 = vmatmul.mubr.bf16.gmra.mrb[0].mxu0 %v5560
      %v5666 = vpop.f32.mrb[0].mxu0
      %v5667 = vadd.f32 0.0, %v5666
      %v5668 = vpop.f32.mrb[0].mxu0
      %v5669 = vpop.f32.mrb[0].mxu0
      %v5670 = vadd.f32 0.0, %v5669
      %v5671 = vpop.f32.mrb[0].mxu0
      %5672 = vmatprep.mubr.bf16.mxu0 0
      %5673 = vmatmul.mubr.bf16.gmra.mrb[0].mxu0 %v5563
      %v5674 = vpop.f32.mrb[0].mxu0
      %v5675 = vadd.f32 0.0, %v5674
      %v5676 = vpop.f32.mrb[0].mxu0
      %v5677 = vpop.f32.mrb[0].mxu0
      %v5678 = vadd.f32 0.0, %v5677
      %v5679 = vpop.f32.mrb[0].mxu0
      %5680 = vmatprep.mubr.bf16.mxu0 0
      %5681 = vmatmul.mubr.bf16.gmra.mrb[0].mxu0 %v5566
      %v5682 = vpop.f32.mrb[0].mxu0
      %v5683 = vadd.f32 0.0, %v5682
      %v5684 = vpop.f32.mrb[0].mxu0
      %v5685 = vpop.f32.mrb[0].mxu0
      %v5686 = vadd.f32 0.0, %v5685
      %v5687 = vpop.f32.mrb[0].mxu0
      %5688 = vmatprep.mubr.bf16.mxu0 0
      %5689 = vmatmul.mubr.bf16.gmra.mrb[0].mxu0 %v5569
      %v5690 = vpop.f32.mrb[0].mxu0
      %v5691 = vadd.f32 0.0, %v5690
      %v5692 = vpop.f32.mrb[0].mxu0
      %v5693 = vpop.f32.mrb[0].mxu0
      %v5694 = vadd.f32 0.0, %v5693
      %v5695 = vpop.f32.mrb[0].mxu0
      %5696 = vmatprep.mubr.bf16.mxu0 0
      %5697 = vmatmul.mubr.bf16.gmra.mrb[0].mxu0 %v5572
      %v5698 = vpop.f32.mrb[0].mxu0
      %v5699 = vadd.f32 0.0, %v5698
      %v5700 = vpop.f32.mrb[0].mxu0
      %v5701 = vpop.f32.mrb[0].mxu0
      %v5702 = vadd.f32 0.0, %v5701
      %v5703 = vpop.f32.mrb[0].mxu0
      %5704 = vmatprep.mubr.bf16.mxu0 0
      %5705 = vmatmul.mubr.bf16.gmra.mrb[0].mxu0 %v5575
      %v5706 = vpop.f32.mrb[0].mxu0
      %v5707 = vadd.f32 0.0, %v5706
      %v5708 = vpop.f32.mrb[0].mxu0
      %v5709 = vpop.f32.mrb[0].mxu0
      %v5710 = vadd.f32 0.0, %v5709
      %v5711 = vpop.f32.mrb[0].mxu0
      %5712 = vmatprep.mubr.bf16.mxu0 0
      %5713 = vmatmul.mubr.bf16.gmra.mrb[0].mxu0 %v5578
      %v5714 = vpop.f32.mrb[0].mxu0
      %v5715 = vadd.f32 0.0, %v5714
      %v5716 = vpop.f32.mrb[0].mxu0
      %v5717 = vpop.f32.mrb[0].mxu0
      %v5718 = vadd.f32 0.0, %v5717
      %v5719 = vpop.f32.mrb[0].mxu0
      %5720 = vmatprep.mubr.bf16.mxu0 0
      %5721 = vmatmul.mubr.bf16.gmra.mrb[0].mxu0 %v5581
      %v5722 = vpop.f32.mrb[0].mxu0
      %v5723 = vadd.f32 0.0, %v5722
      %v5724 = vpop.f32.mrb[0].mxu0
      %v5725 = vpop.f32.mrb[0].mxu0
      %v5726 = vadd.f32 0.0, %v5725
      %v5727 = vpop.f32.mrb[0].mxu0
      %5728 = vmatprep.mubr.bf16.mxu0 0
      %5729 = vmatmul.mubr.bf16.gmra.mrb[0].mxu0 %v5584
      %v5730 = vpop.f32.mrb[0].mxu0
      %v5731 = vadd.f32 0.0, %v5730
      %v5732 = vpop.f32.mrb[0].mxu0
      %v5733 = vpop.f32.mrb[0].mxu0
      %v5734 = vadd.f32 0.0, %v5733
      %v5735 = vpop.f32.mrb[0].mxu0
      %5736 = vmatprep.mubr.bf16.mxu0 0
      %5737 = vmatmul.mubr.bf16.gmra.mrb[0].mxu0 %v5587
      %v5738 = vpop.f32.mrb[0].mxu0
      %v5739 = vadd.f32 0.0, %v5738
      %v5740 = vpop.f32.mrb[0].mxu0
      %v5741 = vpop.f32.mrb[0].mxu0
      %v5742 = vadd.f32 0.0, %v5741
      %v5743 = vpop.f32.mrb[0].mxu0
      %5744 = vmatprep.mubr.bf16.mxu0 0
      %5745 = vmatmul.mubr.bf16.gmra.mrb[0].mxu0 %v5590
      %v5746 = vpop.f32.mrb[0].mxu0
      %v5747 = vadd.f32 0.0, %v5746
      %v5748 = vpop.f32.mrb[0].mxu0
      %v5749 = vpop.f32.mrb[0].mxu0
      %v5750 = vadd.f32 0.0, %v5749
      %v5751 = vpop.f32.mrb[0].mxu0
      %5752 = vdwg.mxu0
      %v5753 = vadd.f32 %v5455, %v5627
      %v5754 = vadd.f32 %v5456, %v5630
      %v5755 = vadd.f32 %v5457, %v5635
      %v5756 = vadd.f32 %v5458, %v5638
      %v5757 = vadd.f32 %v5459, %v5643
      %v5758 = vadd.f32 %v5460, %v5646
      %v5759 = vadd.f32 %v5461, %v5651
      %v5760 = vadd.f32 %v5462, %v5654
      %v5761 = vadd.f32 %v5463, %v5659
      %v5762 = vadd.f32 %v5464, %v5662
      %v5763 = vadd.f32 %v5465, %v5667
      %v5764 = vadd.f32 %v5466, %v5670
      %v5765 = vadd.f32 %v5467, %v5675
      %v5766 = vadd.f32 %v5468, %v5678
      %v5767 = vadd.f32 %v5469, %v5683
      %v5768 = vadd.f32 %v5470, %v5686
      %v5769 = vadd.f32 %v5471, %v5691
      %v5770 = vadd.f32 %v5472, %v5694
      %v5771 = vadd.f32 %v5473, %v5699
      %v5772 = vadd.f32 %v5474, %v5702
      %v5773 = vadd.f32 %v5475, %v5707
      %v5774 = vadd.f32 %v5476, %v5710
      %v5775 = vadd.f32 %v5477, %v5715
      %v5776 = vadd.f32 %v5478, %v5718
      %v5777 = vadd.f32 %v5479, %v5723
      %v5778 = vadd.f32 %v5480, %v5726
      %v5779 = vadd.f32 %v5481, %v5731
      %v5780 = vadd.f32 %v5482, %v5734
      %v5781 = vadd.f32 %v5483, %v5739
      %v5782 = vadd.f32 %v5484, %v5742
      %v5783 = vadd.f32 %v5485, %v5747
      %v5784 = vadd.f32 %v5486, %v5750
      %v5785 = vld [vmem:[%s1219 + $0x1] sm:$0xff]
      %v5786 = vld [vmem:[%s1219 + $0x9] sm:$0xff]
      %v5787 = vld [vmem:[%s1219 + $0x19] sm:$0xff]
      %v5788 = vld [vmem:[%s1219 + $0x21] sm:$0xff]
      %v5789 = vld [vmem:[%s1219 + $0x31] sm:$0xff]
      %v5790 = vld [vmem:[%s1219 + $0x39] sm:$0xff]
      %v5791 = vld [vmem:[%s1219 + $0x49] sm:$0xff]
      %v5792 = vld [vmem:[%s1219 + $0x51] sm:$0xff]
      %v5793 = vld [vmem:[%s1219 + $0x61] sm:$0xff]
      %v5794 = vld [vmem:[%s1219 + $0x69] sm:$0xff]
      %v5795 = vld [vmem:[%s1219 + $0x79] sm:$0xff]
      %v5796 = vld [vmem:[%s1219 + $0x81] sm:$0xff]
      %v5797 = vld [vmem:[%s1219 + $0x91] sm:$0xff]
      %v5798 = vld [vmem:[%s1219 + $0x99] sm:$0xff]
      %v5799 = vld [vmem:[%s1219 + $0xa9] sm:$0xff]
      %v5800 = vld [vmem:[%s1219 + $0xb1] sm:$0xff]
      %v5801 = vld [vmem:[%s1219 + $0xc1] sm:$0xff]
      %v5802 = vld [vmem:[%s1219 + $0xc9] sm:$0xff]
      %v5803 = vld [vmem:[%s1219 + $0xd9] sm:$0xff]
      %v5804 = vld [vmem:[%s1219 + $0xe1] sm:$0xff]
      %v5805 = vld [vmem:[%s1219 + $0xf1] sm:$0xff]
      %v5806 = vld [vmem:[%s1219 + $0xf9] sm:$0xff]
      %v5807 = vld [vmem:[%s1219 + $0x109] sm:$0xff]
      %v5808 = vld [vmem:[%s1219 + $0x111] sm:$0xff]
      %v5809 = vld [vmem:[%s1219 + $0x121] sm:$0xff]
      %v5810 = vld [vmem:[%s1219 + $0x129] sm:$0xff]
      %v5811 = vld [vmem:[%s1219 + $0x139] sm:$0xff]
      %v5812 = vld [vmem:[%s1219 + $0x141] sm:$0xff]
      %v5813 = vld [vmem:[%s1219 + $0x151] sm:$0xff]
      %v5814 = vld [vmem:[%s1219 + $0x159] sm:$0xff]
      %v5815 = vld [vmem:[%s1219 + $0x169] sm:$0xff]
      %v5816 = vld [vmem:[%s1219 + $0x171] sm:$0xff]
      %v5817 = vld [vmem:[%s4] sm:$0x1]
      %v5819 = vlaneseq
      %v5820 = vshrl.u32 %v5819, 7
      %v5821 = vsub.s32 0, %v5820
      %v5822 = vrot.slane %v5817, %v5821
      %v5824 = vadd.f32 %v5753, %v5822
      %v5825 = vadd.f32 %v5754, %v5822
      %v5826 = vadd.f32 %v5755, %v5822
      %v5827 = vadd.f32 %v5756, %v5822
      %v5828 = vadd.f32 %v5757, %v5822
      %v5829 = vadd.f32 %v5758, %v5822
      %v5830 = vadd.f32 %v5759, %v5822
      %v5831 = vadd.f32 %v5760, %v5822
      %v5832 = vadd.f32 %v5761, %v5822
      %v5833 = vadd.f32 %v5762, %v5822
      %v5834 = vadd.f32 %v5763, %v5822
      %v5835 = vadd.f32 %v5764, %v5822
      %v5836 = vadd.f32 %v5765, %v5822
      %v5837 = vadd.f32 %v5766, %v5822
      %v5838 = vadd.f32 %v5767, %v5822
      %v5839 = vadd.f32 %v5768, %v5822
      %v5840 = vadd.f32 %v5769, %v5822
      %v5841 = vadd.f32 %v5770, %v5822
      %v5842 = vadd.f32 %v5771, %v5822
      %v5843 = vadd.f32 %v5772, %v5822
      %v5844 = vadd.f32 %v5773, %v5822
      %v5845 = vadd.f32 %v5774, %v5822
      %v5846 = vadd.f32 %v5775, %v5822
      %v5847 = vadd.f32 %v5776, %v5822
      %v5848 = vadd.f32 %v5777, %v5822
      %v5849 = vadd.f32 %v5778, %v5822
      %v5850 = vadd.f32 %v5779, %v5822
      %v5851 = vadd.f32 %v5780, %v5822
      %v5852 = vadd.f32 %v5781, %v5822
      %v5853 = vadd.f32 %v5782, %v5822
      %v5854 = vadd.f32 %v5783, %v5822
      %v5855 = vadd.f32 %v5784, %v5822
      %v5856 = vadd.f32 %v5824, %v5785
      %v5857 = vadd.f32 %v5825, %v5786
      %v5858 = vadd.f32 %v5826, %v5787
      %v5859 = vadd.f32 %v5827, %v5788
      %v5860 = vadd.f32 %v5828, %v5789
      %v5861 = vadd.f32 %v5829, %v5790
      %v5862 = vadd.f32 %v5830, %v5791
      %v5863 = vadd.f32 %v5831, %v5792
      %v5864 = vadd.f32 %v5832, %v5793
      %v5865 = vadd.f32 %v5833, %v5794
      %v5866 = vadd.f32 %v5834, %v5795
      %v5867 = vadd.f32 %v5835, %v5796
      %v5868 = vadd.f32 %v5836, %v5797
      %v5869 = vadd.f32 %v5837, %v5798
      %v5870 = vadd.f32 %v5838, %v5799
      %v5871 = vadd.f32 %v5839, %v5800
      %v5872 = vadd.f32 %v5840, %v5801
      %v5873 = vadd.f32 %v5841, %v5802
      %v5874 = vadd.f32 %v5842, %v5803
      %v5875 = vadd.f32 %v5843, %v5804
      %v5876 = vadd.f32 %v5844, %v5805
      %v5877 = vadd.f32 %v5845, %v5806
      %v5878 = vadd.f32 %v5846, %v5807
      %v5879 = vadd.f32 %v5847, %v5808
      %v5880 = vadd.f32 %v5848, %v5809
      %v5881 = vadd.f32 %v5849, %v5810
      %v5882 = vadd.f32 %v5850, %v5811
      %v5883 = vadd.f32 %v5851, %v5812
      %v5884 = vadd.f32 %v5852, %v5813
      %v5885 = vadd.f32 %v5853, %v5814
      %v5886 = vadd.f32 %v5854, %v5815
      %v5887 = vadd.f32 %v5855, %v5816
      %v5888 = vmax.f32 %v5856, 0.0
      %v5889 = vmax.f32 %v5857, 0.0
      %v5890 = vmax.f32 %v5858, 0.0
      %v5891 = vmax.f32 %v5859, 0.0
      %v5892 = vmax.f32 %v5860, 0.0
      %v5893 = vmax.f32 %v5861, 0.0
      %v5894 = vmax.f32 %v5862, 0.0
      %v5895 = vmax.f32 %v5863, 0.0
      %v5896 = vmax.f32 %v5864, 0.0
      %v5897 = vmax.f32 %v5865, 0.0
      %v5898 = vmax.f32 %v5866, 0.0
      %v5899 = vmax.f32 %v5867, 0.0
      %v5900 = vmax.f32 %v5868, 0.0
      %v5901 = vmax.f32 %v5869, 0.0
      %v5902 = vmax.f32 %v5870, 0.0
      %v5903 = vmax.f32 %v5871, 0.0
      %v5904 = vmax.f32 %v5872, 0.0
      %v5905 = vmax.f32 %v5873, 0.0
      %v5906 = vmax.f32 %v5874, 0.0
      %v5907 = vmax.f32 %v5875, 0.0
      %v5908 = vmax.f32 %v5876, 0.0
      %v5909 = vmax.f32 %v5877, 0.0
      %v5910 = vmax.f32 %v5878, 0.0
      %v5911 = vmax.f32 %v5879, 0.0
      %v5912 = vmax.f32 %v5880, 0.0
      %v5913 = vmax.f32 %v5881, 0.0
      %v5914 = vmax.f32 %v5882, 0.0
      %v5915 = vmax.f32 %v5883, 0.0
      %v5916 = vmax.f32 %v5884, 0.0
      %v5917 = vmax.f32 %v5885, 0.0
      %v5918 = vmax.f32 %v5886, 0.0
      %v5919 = vmax.f32 %v5887, 0.0
      %5920 = vst.msk [vmem:[%s224] sm:$0xff] %vm334, %v5888
      %5921 = vst.msk [vmem:[%s224 + $0x8] sm:$0xff] %vm334, %v5889
      %5922 = vst.msk [vmem:[%s224 + $0x10] sm:$0xff] %vm334, %v5890
      %5923 = vst.msk [vmem:[%s224 + $0x18] sm:$0xff] %vm334, %v5891
      %5924 = vst.msk [vmem:[%s224 + $0x20] sm:$0xff] %vm334, %v5892
      %5925 = vst.msk [vmem:[%s224 + $0x28] sm:$0xff] %vm334, %v5893
      %5926 = vst.msk [vmem:[%s224 + $0x30] sm:$0xff] %vm334, %v5894
      %5927 = vst.msk [vmem:[%s224 + $0x38] sm:$0xff] %vm334, %v5895
      %5928 = vst.msk [vmem:[%s224 + $0x40] sm:$0xff] %vm334, %v5896
      %5929 = vst.msk [vmem:[%s224 + $0x48] sm:$0xff] %vm334, %v5897
      %5930 = vst.msk [vmem:[%s224 + $0x50] sm:$0xff] %vm334, %v5898
      %5931 = vst.msk [vmem:[%s224 + $0x58] sm:$0xff] %vm334, %v5899
      %5932 = vst.msk [vmem:[%s224 + $0x60] sm:$0xff] %vm334, %v5900
      %5933 = vst.msk [vmem:[%s224 + $0x68] sm:$0xff] %vm334, %v5901
      %5934 = vst.msk [vmem:[%s224 + $0x70] sm:$0xff] %vm334, %v5902
      %5935 = vst.msk [vmem:[%s224 + $0x78] sm:$0xff] %vm334, %v5903
      %5936 = vst.msk [vmem:[%s224 + $0x80] sm:$0xff] %vm334, %v5904
      %5937 = vst.msk [vmem:[%s224 + $0x88] sm:$0xff] %vm334, %v5905
      %5938 = vst.msk [vmem:[%s224 + $0x90] sm:$0xff] %vm334, %v5906
      %5939 = vst.msk [vmem:[%s224 + $0x98] sm:$0xff] %vm334, %v5907
      %5940 = vst.msk [vmem:[%s224 + $0xa0] sm:$0xff] %vm334, %v5908
      %5941 = vst.msk [vmem:[%s224 + $0xa8] sm:$0xff] %vm334, %v5909
      %5942 = vst.msk [vmem:[%s224 + $0xb0] sm:$0xff] %vm334, %v5910
      %5943 = vst.msk [vmem:[%s224 + $0xb8] sm:$0xff] %vm334, %v5911
      %5944 = vst.msk [vmem:[%s224 + $0xc0] sm:$0xff] %vm334, %v5912
      %5945 = vst.msk [vmem:[%s224 + $0xc8] sm:$0xff] %vm334, %v5913
      %5946 = vst.msk [vmem:[%s224 + $0xd0] sm:$0xff] %vm334, %v5914
      %5947 = vst.msk [vmem:[%s224 + $0xd8] sm:$0xff] %vm334, %v5915
      %5948 = vst.msk [vmem:[%s224 + $0xe0] sm:$0xff] %vm334, %v5916
      %5949 = vst.msk [vmem:[%s224 + $0xe8] sm:$0xff] %vm334, %v5917
      %5950 = vst.msk [vmem:[%s224 + $0xf0] sm:$0xff] %vm334, %v5918
      %5951 = vst.msk [vmem:[%s224 + $0xf8] sm:$0xff] %vm334, %v5919
      %p5952 = scmp.lt.s32.totalorder %s16, 1
      %s5953 = scalar_select %p5952, %s16, 1
      %s5954 = smul.addr %s5953, 32
      %s5955 = smul.addr %s5954, 8
      %s5956 = scalar_lea.vmem %s5, %s5955
      // Predicated region
      $region41: #{basic_block_shared_only_forward.1} parent=39 // pred_check
        %p5957 = pneg %p144
      $region42: #{basic_block_shared_only_forward.1} parent=39 // pred_check_branch
        %5959 = sbr.rel (%p5957) target = $region44
      $region43: #{basic_block_shared_only_forward.1} parent=39 // pred_region
        _
      $region44: #{basic_block_shared_only_forward.1} parent=39 // pred_fallthru
        _
    $region40: #{basic_block_shared_only_forward.1} parent=5 // pred_fallthru
      _
    %p5960 = scmp.le.s32.totalorder 2, %s11
    // Predicated region
    $region45: #{basic_block_shared_only_forward.1} parent=5 // pred_check
      %p5961 = pneg %p5960
    $region46: #{basic_block_shared_only_forward.1} parent=5 // pred_check_branch
      %5963 = sbr.rel (%p5961) target = $region48
    $region47: #{basic_block_shared_only_forward.1} parent=5 // pred_region
      %s5964 = ssub.s32 %s11, 2
      // Predicated region
      $region49: #{basic_block_shared_only_forward.1} parent=47 // pred_check
        %p5965 = pneg %p150
      $region50: #{basic_block_shared_only_forward.1} parent=47 // pred_check_branch
        %5967 = sbr.rel (%p5965) target = $region52
      $region51: #{basic_block_shared_only_forward.1} parent=47 // pred_region
        %p5968 = scmp.lt.s32.totalorder %s17, 1
        %s5969 = scalar_select %p5968, %s17, 1
        %s5970 = smul.addr %s5969, 32
        %s5971 = smul.addr %s5970, 8
        %s5972 = scalar_lea.vmem %s5, %s5971
      $region52: #{basic_block_shared_only_forward.1} parent=47 // pred_fallthru
        _
    $region48: #{basic_block_shared_only_forward.1} parent=5 // pred_fallthru
      _
  $region6: #{basic_block_shared_only_forward.1} parent=0 // loop_footer
    %s15 = sadd.s32 1, %s11
  $region7: #{basic_block_shared_only_forward.1} parent=0 // loop_footer_branch
    %10 = sbr.rel target = $region3
  $region8: #{basic_block_shared_only_forward.1} parent=0 // loop_exit
    _

</llo_original>
